<compile_context>
chip_gen: v7x
topology: tpu7x:2x2x1
jax: 0.10.0
libtpu: 0.0.40
codegen_flags: <defaults>
</compile_context>

<pallas_src>
import functools
import math

import jax
import jax.numpy as jnp
from jax.experimental import pallas as pl
from jax.experimental.pallas import tpu as pltpu

NEG_BIG = -1e30


# ----------------------------------------------------------------------------
# In-kernel helper: one HAN layer
#   per-metapath multi-head GAT (all heads, all metapaths, static unroll)
#   + semantic-level attention over metapaths.
# ----------------------------------------------------------------------------
def _han_stage(x, adjb_ref, w_ref, a_ref, b_ref, ws_ref, sem_ref, *,
               num_heads, head_dim, num_metapath, negative_slope, apply_elu):
    """x: (N, Fin) f32 value; adjb_ref: (P, N, N) additive mask bias ref;
    w_ref: (Fin, H*Dh); a_ref: (H*Dh, 2H) block-diag [a_l | a_r];
    b_ref: (1, H*Dh); ws_ref: (H*Dh, S); sem_ref: (2, S) = [bias; query].
    Returns (N, H*Dh) f32 semantic-attention-combined layer output."""
    H, Dh, P = num_heads, head_dim, num_metapath
    n_nodes = x.shape[0]

    # (1) shared all-head projection — hoisted: once per stage, not per metapath.
    h_all = jnp.dot(x, w_ref[...], preferred_element_type=jnp.float32)       # (N, H*Dh)

    # (2) all attention logits in two MXU ops (replaces 2H tiny dot_generals):
    #     el_all[n, h] = h[n, head h] . a_l[h];  er_all[h, n] = h[n, head h] . a_r[h]
    a_mat = a_ref[...]                                                        # (H*Dh, 2H)
    el_all = jnp.dot(h_all, a_mat[:, :H], preferred_element_type=jnp.float32)  # (N, H)
    er_all = jax.lax.dot_general(a_mat[:, H:], h_all,
                                 (((0,), (1,)), ((), ())),
                                 preferred_element_type=jnp.float32)           # (H, N)

    # (3) per-head feature slices hoisted out of the metapath loop (H, not H*P).
    hh = [h_all[:, h * Dh:(h + 1) * Dh] for h in range(H)]

    bias_row = b_ref[...]                                                     # (1, H*Dh)
    sem_b = sem_ref[0:1, :]                                                   # (1, S)
    sem_q = sem_ref[1:2, :]                                                   # (1, S)
    ws = ws_ref[...]                                                          # (H*Dh, S)

    z_list, s_list = [], []
    for p in range(P):                        # static unroll (P small)
        mask_bias = adjb_ref[p]               # (N, N): 0 on edges, -1e30 elsewhere
        outs = []
        for h in range(H):                    # static unroll (H small)
            e = el_all[:, h:h + 1] + er_all[h:h + 1, :]                       # (N, N)
            e = jnp.where(e > 0, e, negative_slope * e)                       # LeakyReLU
            e = e + mask_bias                                                 # mask = add
            m = jnp.max(e, axis=-1, keepdims=True)
            pe = jnp.exp(e - m)
            denom = jnp.sum(pe, axis=-1, keepdims=True)
            # approx reciprocal on the EUP; ~1e-3 rel. deviation from exact softmax.
            alpha = pe * pl.reciprocal(denom, approx=True)
            outs.append(jnp.dot(alpha, hh[h], preferred_element_type=jnp.float32))
        z = outs[0] if H == 1 else jnp.concatenate(outs, axis=-1)             # (N, H*Dh)
        z = z + bias_row
        if apply_elu:                                                         # 'elu'
            z = jnp.where(z > 0, z, jnp.exp(jnp.minimum(z, 0.0)) - 1.0)

        # semantic-level score for this metapath: mean_n( tanh(z Ws + b) . q )
        t = jnp.tanh(jnp.dot(z, ws, preferred_element_type=jnp.float32) + sem_b)  # (N, S)
        s = jnp.sum(jnp.sum(t * sem_q, axis=-1, keepdims=True),
                    axis=0, keepdims=True) * (1.0 / n_nodes)                  # (1, 1)
        z_list.append(z)
        s_list.append(s)

    # semantic softmax over the P metapath scalars + weighted combine.
    m = s_list[0]
    for s in s_list[1:]:
        m = jnp.maximum(m, s)
    es = [jnp.exp(s - m) for s in s_list]
    denom = es[0]
    for e in es[1:]:
        denom = denom + e
    inv = pl.reciprocal(denom, approx=True)
    out = z_list[0] * (es[0] * inv)
    for p in range(1, P):
        out = out + z_list[p] * (es[p] * inv)
    return out


# ----------------------------------------------------------------------------
# Fully fused PreModel kernel: encoder HAN -> (folded e2d Linear) -> decoder HAN
# Single grid step; encoder output stays on-chip.
# ----------------------------------------------------------------------------
def _premodel_kernel(x_ref, adjb_ref,
                     we_ref, ae_ref, be_ref, wse_ref, seme_ref,
                     wd_ref, ad_ref, bd_ref, wsd_ref, semd_ref,
                     o_ref, *,
                     enc_heads, enc_head_dim, dec_heads, dec_head_dim,
                     num_metapath, negative_slope):
    x = x_ref[...].astype(jnp.float32)

    # Stage 1: HAN encoder (per-head ELU), semantic attention over metapaths.
    enc_rep = _han_stage(x, adjb_ref, we_ref, ae_ref, be_ref, wse_ref, seme_ref,
                         num_heads=enc_heads, head_dim=enc_head_dim,
                         num_metapath=num_metapath,
                         negative_slope=negative_slope, apply_elu=True)

    # Stage 2: HAN decoder.  encoder_to_decoder_edge_recon (Linear, no bias) is
    # folded into wd (W_dec_fused = W_e2d @ W_dec), so enc_rep feeds the decoder
    # projection directly — no HBM round trip, no extra matmul in-kernel.
    out = _han_stage(enc_rep, adjb_ref, wd_ref, ad_ref, bd_ref, wsd_ref, semd_ref,
                     num_heads=dec_heads, head_dim=dec_head_dim,
                     num_metapath=num_metapath,
                     negative_slope=negative_slope, apply_elu=False)

    o_ref[...] = out.astype(o_ref.dtype)


def premodel_fused(x, adj_bias, enc_params, dec_params, *, negative_slope):
    """x: (N, Fin); adj_bias: (P, N, N) additive mask; enc/dec params packed."""
    W_e, A_e, b_e, Ws_e, sem_e = enc_params
    W_d, A_d, b_d, Ws_d, sem_d = dec_params
    N, Fin = x.shape
    P = adj_bias.shape[0]
    D_e, D_d = W_e.shape[1], W_d.shape[1]
    H_e, H_d = A_e.shape[1] // 2, A_d.shape[1] // 2
    S = Ws_e.shape[1]

    kernel = functools.partial(
        _premodel_kernel,
        enc_heads=H_e, enc_head_dim=D_e // H_e,
        dec_heads=H_d, dec_head_dim=D_d // H_d,
        num_metapath=P, negative_slope=negative_slope)

    def full(*shape):
        nd = len(shape)
        return pl.BlockSpec(shape, lambda i, _nd=nd: (0,) * _nd)

    return pl.pallas_call(
        kernel,
        out_shape=jax.ShapeDtypeStruct((N, D_d), jnp.float32),
        grid=(1,),
        in_specs=[
            full(N, Fin),            # x
            full(P, N, N),           # additive adjacency mask bias
            full(Fin, D_e),          # encoder projection (all heads)
            full(D_e, 2 * H_e),      # encoder [a_l | a_r] block-diagonal
            full(1, D_e),            # encoder per-head bias row
            full(D_e, S),            # encoder semantic projection
            full(2, S),              # encoder semantic [bias; query]
            full(D_e, D_d),          # decoder projection (W_e2d folded in)
            full(D_d, 2 * H_d),      # decoder [a_l | a_r] block-diagonal
            full(1, D_d),            # decoder per-head bias row
            full(D_d, S),            # decoder semantic projection
            full(2, S),              # decoder semantic [bias; query]
        ],
        out_specs=pl.BlockSpec((N, D_d), lambda i: (0, 0)),
        compiler_params=pltpu.CompilerParams(
            dimension_semantics=("arbitrary",)),
    )(x, adj_bias, W_e, A_e, b_e, Ws_e, sem_e, W_d, A_d, b_d, Ws_d, sem_d)


# ----------------------------------------------------------------------------
# Parameter init (deterministic, synthetic) + packing helpers (wrapper glue)
# ----------------------------------------------------------------------------
def _glorot(key, shape):
    fan_in, fan_out = shape[-2], shape[-1]
    lim = math.sqrt(6.0 / (fan_in + fan_out))
    return jax.random.uniform(key, shape, jnp.float32, -lim, lim)


def init_params(key, *, feat_dim, hidden_dim, num_heads, num_out_heads,
                dec_out_dim=128, sem_hidden=128):
    ks = jax.random.split(key, 16)
    Dh_e = hidden_dim // num_heads
    D_enc = hidden_dim                       # encoder HAN output dim (heads concat)
    D_dec = dec_out_dim * num_out_heads      # decoder HAN output dim (heads concat)
    return {
        # encoder HAN layer (single layer, num_layers=1)
        "W_enc": _glorot(ks[0], (num_heads, feat_dim, Dh_e)),
        "al_enc": 0.1 * jax.random.normal(ks[1], (num_heads, Dh_e), jnp.float32),
        "ar_enc": 0.1 * jax.random.normal(ks[2], (num_heads, Dh_e), jnp.float32),
        "b_enc": jnp.zeros((num_heads, Dh_e), jnp.float32),
        "Ws_enc": _glorot(ks[3], (D_enc, sem_hidden)),
        "bs_enc": jnp.zeros((sem_hidden,), jnp.float32),
        "q_enc": _glorot(ks[4], (sem_hidden, 1)).reshape(sem_hidden),
        # encoder -> decoder linear (dec_in_dim -> dec_in_dim, no bias); (in, out)
        "W_e2d": _glorot(ks[5], (hidden_dim, hidden_dim)),
        # decoder HAN layer (in=hidden_dim, per-head out=128, heads=num_out_heads)
        "W_dec": _glorot(ks[6], (num_out_heads, hidden_dim, dec_out_dim)),
        "al_dec": 0.1 * jax.random.normal(ks[7], (num_out_heads, dec_out_dim), jnp.float32),
        "ar_dec": 0.1 * jax.random.normal(ks[8], (num_out_heads, dec_out_dim), jnp.float32),
        "b_dec": jnp.zeros((num_out_heads, dec_out_dim), jnp.float32),
        "Ws_dec": _glorot(ks[9], (D_dec, sem_hidden)),
        "bs_dec": jnp.zeros((sem_hidden,), jnp.float32),
        "q_dec": _glorot(ks[10], (sem_hidden, 1)).reshape(sem_hidden),
    }


def _heads_to_wide(W):
    """(H, Fin, Dh) -> (Fin, H*Dh) with per-head column blocks contiguous."""
    H, Fin, Dh = W.shape
    return jnp.transpose(W, (1, 0, 2)).reshape(Fin, H * Dh)


def _attn_blockdiag(al, ar):
    """al/ar: (H, Dh) -> (H*Dh, 2H) block-diagonal [A_l | A_r]."""
    H, Dh = al.shape
    eye = jnp.eye(H, dtype=jnp.float32)
    A_l = (al[:, :, None] * eye[:, None, :]).reshape(H * Dh, H)
    A_r = (ar[:, :, None] * eye[:, None, :]).reshape(H * Dh, H)
    return jnp.concatenate([A_l, A_r], axis=1)


# ----------------------------------------------------------------------------
# PreModel.forward  (use_mp2vec_feat_pred=False, use_mp_edge_recon=True)
# ----------------------------------------------------------------------------
def premodel_forward(params, feats, mps, epoch, cfg):
    origin_feat = feats[0]                                    # (N, F)

    # mask_mp_edge_reconstruction: DropEdge(p) + add_self_loop (graph glue),
    # then converted ONCE to an additive attention-mask bias (0 / -1e30).
    key = jax.random.fold_in(jax.random.PRNGKey(123), epoch)
    keep = jax.random.bernoulli(
        key, 1.0 - cfg["mp_edge_mask_rate"], mps.shape).astype(mps.dtype)
    masked_adj = mps * keep
    eye = jnp.eye(mps.shape[1], dtype=mps.dtype)[None]
    masked_adj = jnp.maximum(masked_adj, eye)                 # self loops
    adj_bias = jnp.where(masked_adj > 0, 0.0, NEG_BIG).astype(jnp.float32)

    # packed encoder params
    W_e = _heads_to_wide(params["W_enc"])
    A_e = _attn_blockdiag(params["al_enc"], params["ar_enc"])
    b_e = params["b_enc"].reshape(1, -1)
    sem_e = jnp.stack([params["bs_enc"], params["q_enc"]], axis=0)   # (2, S)

    # packed decoder params; encoder_to_decoder_edge_recon folded in:
    #   (enc_rep @ W_e2d) @ W_dec  ==  enc_rep @ (W_e2d @ W_dec)
    W_d = jnp.dot(params["W_e2d"], _heads_to_wide(params["W_dec"]))
    A_d = _attn_blockdiag(params["al_dec"], params["ar_dec"])
    b_d = params["b_dec"].reshape(1, -1)
    sem_d = jnp.stack([params["bs_dec"], params["q_dec"]], axis=0)   # (2, S)

    return premodel_fused(
        origin_feat, adj_bias,
        (W_e, A_e, b_e, params["Ws_enc"], sem_e),
        (W_d, A_d, b_d, params["Ws_dec"], sem_d),
        negative_slope=cfg["negative_slope"])


# ----------------------------------------------------------------------------
if __name__ == "__main__":
    # args-equivalent config
    num_metapath = 2
    focused_feature_dim = 64      # also num_nodes (module uses in_dim as num_nodes)
    hidden_dim = 32
    num_heads = 4                 # -> encoder per-head dim 8
    num_out_heads = 2             # -> decoder: 2 heads x 128 = 256 out dims
    cfg = dict(negative_slope=0.2, mp_edge_mask_rate=0.5)

    N = focused_feature_dim
    key = jax.random.PRNGKey(0)
    k_feat, k_adj, k_par = jax.random.split(key, 3)

    feats0 = jax.random.normal(k_feat, (N, focused_feature_dim), jnp.float32)
    mps = (jax.random.uniform(k_adj, (num_metapath, N, N)) < 0.15).astype(jnp.float32)

    params = init_params(k_par,
                         feat_dim=focused_feature_dim,
                         hidden_dim=hidden_dim,
                         num_heads=num_heads,
                         num_out_heads=num_out_heads)

    out = premodel_forward(params, [feats0], mps, epoch=0, cfg=cfg)
    out = jax.block_until_ready(out)
    assert out.shape == (N, 128 * num_out_heads)
    assert bool(jnp.all(jnp.isfinite(out)))
    print("KERNEL_OK")
</pallas_src>

<mosaic_0001>
module attributes {stable_mosaic.version = 11 : i64} {
  func.func @_premodel_kernel(%arg0: i32, %arg1: memref<64x64xf32, #tpu.memory_space<vmem>>, %arg2: memref<2x64x64xf32, #tpu.memory_space<vmem>>, %arg3: memref<64x32xf32, #tpu.memory_space<vmem>>, %arg4: memref<32x8xf32, #tpu.memory_space<vmem>>, %arg5: memref<1x32xf32, #tpu.memory_space<vmem>>, %arg6: memref<32x128xf32, #tpu.memory_space<vmem>>, %arg7: memref<2x128xf32, #tpu.memory_space<vmem>>, %arg8: memref<32x256xf32, #tpu.memory_space<vmem>>, %arg9: memref<256x4xf32, #tpu.memory_space<vmem>>, %arg10: memref<1x256xf32, #tpu.memory_space<vmem>>, %arg11: memref<256x128xf32, #tpu.memory_space<vmem>>, %arg12: memref<2x128xf32, #tpu.memory_space<vmem>>, %arg13: memref<64x256xf32, #tpu.memory_space<vmem>>) attributes {dimension_semantics = [#tpu.dimension_semantics<arbitrary>], iteration_bounds = array<i64: 1>, scalar_prefetch = 0 : i64, scratch_operands = 0 : i64, tpu.core_type = #tpu.core_type<tc>, window_params = [{pipeline_mode = #tpu.pipeline_mode<synchronous>, transform_indices = @transform_0, window_bounds = array<i64: 64, 64>}, {pipeline_mode = #tpu.pipeline_mode<synchronous>, transform_indices = @transform_1, window_bounds = array<i64: 2, 64, 64>}, {pipeline_mode = #tpu.pipeline_mode<synchronous>, transform_indices = @transform_2, window_bounds = array<i64: 64, 32>}, {pipeline_mode = #tpu.pipeline_mode<synchronous>, transform_indices = @transform_3, window_bounds = array<i64: 32, 8>}, {pipeline_mode = #tpu.pipeline_mode<synchronous>, transform_indices = @transform_4, window_bounds = array<i64: 1, 32>}, {pipeline_mode = #tpu.pipeline_mode<synchronous>, transform_indices = @transform_5, window_bounds = array<i64: 32, 128>}, {pipeline_mode = #tpu.pipeline_mode<synchronous>, transform_indices = @transform_6, window_bounds = array<i64: 2, 128>}, {pipeline_mode = #tpu.pipeline_mode<synchronous>, transform_indices = @transform_7, window_bounds = array<i64: 32, 256>}, {pipeline_mode = #tpu.pipeline_mode<synchronous>, transform_indices = @transform_8, window_bounds = array<i64: 256, 4>}, {pipeline_mode = #tpu.pipeline_mode<synchronous>, transform_indices = @transform_9, window_bounds = array<i64: 1, 256>}, {pipeline_mode = #tpu.pipeline_mode<synchronous>, transform_indices = @transform_10, window_bounds = array<i64: 256, 128>}, {pipeline_mode = #tpu.pipeline_mode<synchronous>, transform_indices = @transform_11, window_bounds = array<i64: 2, 128>}, {pipeline_mode = #tpu.pipeline_mode<synchronous>, transform_indices = @transform_12, window_bounds = array<i64: 64, 256>}]} {
    %c0 = arith.constant 0 : index
    %c0_0 = arith.constant 0 : index
    %0 = vector.load %arg1[%c0, %c0_0] : memref<64x64xf32, #tpu.memory_space<vmem>>, vector<64x64xf32>
    %c0_1 = arith.constant 0 : index
    %c0_2 = arith.constant 0 : index
    %1 = vector.load %arg3[%c0_1, %c0_2] : memref<64x32xf32, #tpu.memory_space<vmem>>, vector<64x32xf32>
    %cst = arith.constant dense<0.000000e+00> : vector<64x32xf32>
    %2 = tpu.matmul %0, %1, %cst {dimension_numbers = #tpu.dot_dimension_numbers<[1], [0], [0], [1], [0, 0, 1, 1], [], []>} : vector<64x64xf32>, vector<64x32xf32>, vector<64x32xf32> -> vector<64x32xf32>
    %c0_3 = arith.constant 0 : index
    %c0_4 = arith.constant 0 : index
    %3 = vector.load %arg4[%c0_3, %c0_4] : memref<32x8xf32, #tpu.memory_space<vmem>>, vector<32x8xf32>
    %4 = vector.extract_strided_slice %3 {offsets = [0, 0], sizes = [32, 4], strides = [1, 1]} : vector<32x8xf32> to vector<32x4xf32>
    %cst_5 = arith.constant dense<0.000000e+00> : vector<64x4xf32>
    %5 = tpu.matmul %2, %4, %cst_5 {dimension_numbers = #tpu.dot_dimension_numbers<[1], [0], [0], [1], [0, 0, 1, 1], [], []>} : vector<64x32xf32>, vector<32x4xf32>, vector<64x4xf32> -> vector<64x4xf32>
    %6 = vector.extract_strided_slice %3 {offsets = [0, 4], sizes = [32, 4], strides = [1, 1]} : vector<32x8xf32> to vector<32x4xf32>
    %cst_6 = arith.constant dense<0.000000e+00> : vector<4x64xf32>
    %7 = tpu.matmul %6, %2, %cst_6 {dimension_numbers = #tpu.dot_dimension_numbers<[0], [1], [1], [0], [0, 1, 1, 0], [], []>} : vector<32x4xf32>, vector<64x32xf32>, vector<4x64xf32> -> vector<4x64xf32>
    %8 = vector.extract_strided_slice %2 {offsets = [0, 0], sizes = [64, 8], strides = [1, 1]} : vector<64x32xf32> to vector<64x8xf32>
    %9 = vector.extract_strided_slice %2 {offsets = [0, 8], sizes = [64, 8], strides = [1, 1]} : vector<64x32xf32> to vector<64x8xf32>
    %10 = vector.extract_strided_slice %2 {offsets = [0, 16], sizes = [64, 8], strides = [1, 1]} : vector<64x32xf32> to vector<64x8xf32>
    %11 = vector.extract_strided_slice %2 {offsets = [0, 24], sizes = [64, 8], strides = [1, 1]} : vector<64x32xf32> to vector<64x8xf32>
    %c0_7 = arith.constant 0 : index
    %c0_8 = arith.constant 0 : index
    %12 = vector.load %arg5[%c0_7, %c0_8] : memref<1x32xf32, #tpu.memory_space<vmem>>, vector<1x32xf32>
    %c0_9 = arith.constant 0 : index
    %c0_10 = arith.constant 0 : index
    %13 = vector.load %arg7[%c0_9, %c0_10] : memref<2x128xf32, #tpu.memory_space<vmem>>, vector<1x128xf32>
    %c1 = arith.constant 1 : index
    %c0_11 = arith.constant 0 : index
    %14 = vector.load %arg7[%c1, %c0_11] : memref<2x128xf32, #tpu.memory_space<vmem>>, vector<1x128xf32>
    %c0_12 = arith.constant 0 : index
    %c0_13 = arith.constant 0 : index
    %15 = vector.load %arg6[%c0_12, %c0_13] : memref<32x128xf32, #tpu.memory_space<vmem>>, vector<32x128xf32>
    %c0_14 = arith.constant 0 : index
    %c0_15 = arith.constant 0 : index
    %c0_16 = arith.constant 0 : index
    %16 = vector.load %arg2[%c0_14, %c0_15, %c0_16] : memref<2x64x64xf32, #tpu.memory_space<vmem>>, vector<1x64x64xf32>
    %17 = vector.shape_cast %16 : vector<1x64x64xf32> to vector<64x64xf32>
    %18 = vector.extract_strided_slice %5 {offsets = [0, 0], sizes = [64, 1], strides = [1, 1]} : vector<64x4xf32> to vector<64x1xf32>
    %19 = vector.extract_strided_slice %7 {offsets = [0, 0], sizes = [1, 64], strides = [1, 1]} : vector<4x64xf32> to vector<1x64xf32>
    %20 = vector.broadcast %18 : vector<64x1xf32> to vector<64x64xf32>
    %21 = vector.broadcast %19 : vector<1x64xf32> to vector<64x64xf32>
    %22 = arith.addf %20, %21 : vector<64x64xf32>
    %cst_17 = arith.constant 0.000000e+00 : f32
    %23 = vector.broadcast %cst_17 : f32 to vector<64x64xf32>
    %24 = arith.cmpf ogt, %22, %23 : vector<64x64xf32>
    %cst_18 = arith.constant 2.000000e-01 : f32
    %25 = vector.broadcast %cst_18 : f32 to vector<64x64xf32>
    %26 = arith.mulf %25, %22 : vector<64x64xf32>
    %27 = arith.select %24, %22, %26 : vector<64x64xi1>, vector<64x64xf32>
    %28 = arith.addf %27, %17 : vector<64x64xf32>
    %cst_19 = arith.constant dense<0xFF800000> : vector<64xf32>
    %29 = vector.multi_reduction <maximumf>, %28, %cst_19 [1] : vector<64x64xf32> to vector<64xf32>
    %30 = vector.shape_cast %29 : vector<64xf32> to vector<64x1xf32>
    %31 = vector.broadcast %30 : vector<64x1xf32> to vector<64x64xf32>
    %32 = arith.subf %28, %31 : vector<64x64xf32>
    %33 = math.exp %32 : vector<64x64xf32>
    %cst_20 = arith.constant dense<0.000000e+00> : vector<64xf32>
    %34 = vector.multi_reduction <add>, %33, %cst_20 [1] : vector<64x64xf32> to vector<64xf32>
    %35 = vector.shape_cast %34 : vector<64xf32> to vector<64x1xf32>
    %36 = tpu.reciprocal %35 {approx = true} : vector<64x1xf32> -> vector<64x1xf32>
    %37 = vector.broadcast %36 : vector<64x1xf32> to vector<64x64xf32>
    %38 = arith.mulf %33, %37 : vector<64x64xf32>
    %cst_21 = arith.constant dense<0.000000e+00> : vector<64x8xf32>
    %39 = tpu.matmul %38, %8, %cst_21 {dimension_numbers = #tpu.dot_dimension_numbers<[1], [0], [0], [1], [0, 0, 1, 1], [], []>} : vector<64x64xf32>, vector<64x8xf32>, vector<64x8xf32> -> vector<64x8xf32>
    %40 = vector.extract_strided_slice %5 {offsets = [0, 1], sizes = [64, 1], strides = [1, 1]} : vector<64x4xf32> to vector<64x1xf32>
    %41 = vector.extract_strided_slice %7 {offsets = [1, 0], sizes = [1, 64], strides = [1, 1]} : vector<4x64xf32> to vector<1x64xf32>
    %42 = vector.broadcast %40 : vector<64x1xf32> to vector<64x64xf32>
    %43 = vector.broadcast %41 : vector<1x64xf32> to vector<64x64xf32>
    %44 = arith.addf %42, %43 : vector<64x64xf32>
    %cst_22 = arith.constant 0.000000e+00 : f32
    %45 = vector.broadcast %cst_22 : f32 to vector<64x64xf32>
    %46 = arith.cmpf ogt, %44, %45 : vector<64x64xf32>
    %cst_23 = arith.constant 2.000000e-01 : f32
    %47 = vector.broadcast %cst_23 : f32 to vector<64x64xf32>
    %48 = arith.mulf %47, %44 : vector<64x64xf32>
    %49 = arith.select %46, %44, %48 : vector<64x64xi1>, vector<64x64xf32>
    %50 = arith.addf %49, %17 : vector<64x64xf32>
    %cst_24 = arith.constant dense<0xFF800000> : vector<64xf32>
    %51 = vector.multi_reduction <maximumf>, %50, %cst_24 [1] : vector<64x64xf32> to vector<64xf32>
    %52 = vector.shape_cast %51 : vector<64xf32> to vector<64x1xf32>
    %53 = vector.broadcast %52 : vector<64x1xf32> to vector<64x64xf32>
    %54 = arith.subf %50, %53 : vector<64x64xf32>
    %55 = math.exp %54 : vector<64x64xf32>
    %cst_25 = arith.constant dense<0.000000e+00> : vector<64xf32>
    %56 = vector.multi_reduction <add>, %55, %cst_25 [1] : vector<64x64xf32> to vector<64xf32>
    %57 = vector.shape_cast %56 : vector<64xf32> to vector<64x1xf32>
    %58 = tpu.reciprocal %57 {approx = true} : vector<64x1xf32> -> vector<64x1xf32>
    %59 = vector.broadcast %58 : vector<64x1xf32> to vector<64x64xf32>
    %60 = arith.mulf %55, %59 : vector<64x64xf32>
    %cst_26 = arith.constant dense<0.000000e+00> : vector<64x8xf32>
    %61 = tpu.matmul %60, %9, %cst_26 {dimension_numbers = #tpu.dot_dimension_numbers<[1], [0], [0], [1], [0, 0, 1, 1], [], []>} : vector<64x64xf32>, vector<64x8xf32>, vector<64x8xf32> -> vector<64x8xf32>
    %62 = vector.extract_strided_slice %5 {offsets = [0, 2], sizes = [64, 1], strides = [1, 1]} : vector<64x4xf32> to vector<64x1xf32>
    %63 = vector.extract_strided_slice %7 {offsets = [2, 0], sizes = [1, 64], strides = [1, 1]} : vector<4x64xf32> to vector<1x64xf32>
    %64 = vector.broadcast %62 : vector<64x1xf32> to vector<64x64xf32>
    %65 = vector.broadcast %63 : vector<1x64xf32> to vector<64x64xf32>
    %66 = arith.addf %64, %65 : vector<64x64xf32>
    %cst_27 = arith.constant 0.000000e+00 : f32
    %67 = vector.broadcast %cst_27 : f32 to vector<64x64xf32>
    %68 = arith.cmpf ogt, %66, %67 : vector<64x64xf32>
    %cst_28 = arith.constant 2.000000e-01 : f32
    %69 = vector.broadcast %cst_28 : f32 to vector<64x64xf32>
    %70 = arith.mulf %69, %66 : vector<64x64xf32>
    %71 = arith.select %68, %66, %70 : vector<64x64xi1>, vector<64x64xf32>
    %72 = arith.addf %71, %17 : vector<64x64xf32>
    %cst_29 = arith.constant dense<0xFF800000> : vector<64xf32>
    %73 = vector.multi_reduction <maximumf>, %72, %cst_29 [1] : vector<64x64xf32> to vector<64xf32>
    %74 = vector.shape_cast %73 : vector<64xf32> to vector<64x1xf32>
    %75 = vector.broadcast %74 : vector<64x1xf32> to vector<64x64xf32>
    %76 = arith.subf %72, %75 : vector<64x64xf32>
    %77 = math.exp %76 : vector<64x64xf32>
    %cst_30 = arith.constant dense<0.000000e+00> : vector<64xf32>
    %78 = vector.multi_reduction <add>, %77, %cst_30 [1] : vector<64x64xf32> to vector<64xf32>
    %79 = vector.shape_cast %78 : vector<64xf32> to vector<64x1xf32>
    %80 = tpu.reciprocal %79 {approx = true} : vector<64x1xf32> -> vector<64x1xf32>
    %81 = vector.broadcast %80 : vector<64x1xf32> to vector<64x64xf32>
    %82 = arith.mulf %77, %81 : vector<64x64xf32>
    %cst_31 = arith.constant dense<0.000000e+00> : vector<64x8xf32>
    %83 = tpu.matmul %82, %10, %cst_31 {dimension_numbers = #tpu.dot_dimension_numbers<[1], [0], [0], [1], [0, 0, 1, 1], [], []>} : vector<64x64xf32>, vector<64x8xf32>, vector<64x8xf32> -> vector<64x8xf32>
    %84 = vector.extract_strided_slice %5 {offsets = [0, 3], sizes = [64, 1], strides = [1, 1]} : vector<64x4xf32> to vector<64x1xf32>
    %85 = vector.extract_strided_slice %7 {offsets = [3, 0], sizes = [1, 64], strides = [1, 1]} : vector<4x64xf32> to vector<1x64xf32>
    %86 = vector.broadcast %84 : vector<64x1xf32> to vector<64x64xf32>
    %87 = vector.broadcast %85 : vector<1x64xf32> to vector<64x64xf32>
    %88 = arith.addf %86, %87 : vector<64x64xf32>
    %cst_32 = arith.constant 0.000000e+00 : f32
    %89 = vector.broadcast %cst_32 : f32 to vector<64x64xf32>
    %90 = arith.cmpf ogt, %88, %89 : vector<64x64xf32>
    %cst_33 = arith.constant 2.000000e-01 : f32
    %91 = vector.broadcast %cst_33 : f32 to vector<64x64xf32>
    %92 = arith.mulf %91, %88 : vector<64x64xf32>
    %93 = arith.select %90, %88, %92 : vector<64x64xi1>, vector<64x64xf32>
    %94 = arith.addf %93, %17 : vector<64x64xf32>
    %cst_34 = arith.constant dense<0xFF800000> : vector<64xf32>
    %95 = vector.multi_reduction <maximumf>, %94, %cst_34 [1] : vector<64x64xf32> to vector<64xf32>
    %96 = vector.shape_cast %95 : vector<64xf32> to vector<64x1xf32>
    %97 = vector.broadcast %96 : vector<64x1xf32> to vector<64x64xf32>
    %98 = arith.subf %94, %97 : vector<64x64xf32>
    %99 = math.exp %98 : vector<64x64xf32>
    %cst_35 = arith.constant dense<0.000000e+00> : vector<64xf32>
    %100 = vector.multi_reduction <add>, %99, %cst_35 [1] : vector<64x64xf32> to vector<64xf32>
    %101 = vector.shape_cast %100 : vector<64xf32> to vector<64x1xf32>
    %102 = tpu.reciprocal %101 {approx = true} : vector<64x1xf32> -> vector<64x1xf32>
    %103 = vector.broadcast %102 : vector<64x1xf32> to vector<64x64xf32>
    %104 = arith.mulf %99, %103 : vector<64x64xf32>
    %cst_36 = arith.constant dense<0.000000e+00> : vector<64x8xf32>
    %105 = tpu.matmul %104, %11, %cst_36 {dimension_numbers = #tpu.dot_dimension_numbers<[1], [0], [0], [1], [0, 0, 1, 1], [], []>} : vector<64x64xf32>, vector<64x8xf32>, vector<64x8xf32> -> vector<64x8xf32>
    %106 = tpu.concatenate %39, %61, %83, %105 in 1 : vector<64x8xf32>, vector<64x8xf32>, vector<64x8xf32>, vector<64x8xf32> -> vector<64x32xf32>
    %107 = vector.broadcast %12 : vector<1x32xf32> to vector<64x32xf32>
    %108 = arith.addf %106, %107 : vector<64x32xf32>
    %cst_37 = arith.constant 0.000000e+00 : f32
    %109 = vector.broadcast %cst_37 : f32 to vector<64x32xf32>
    %110 = arith.cmpf ogt, %108, %109 : vector<64x32xf32>
    %cst_38 = arith.constant 0.000000e+00 : f32
    %111 = vector.broadcast %cst_38 : f32 to vector<64x32xf32>
    %112 = arith.minimumf %108, %111 : vector<64x32xf32>
    %113 = math.exp %112 : vector<64x32xf32>
    %cst_39 = arith.constant 1.000000e+00 : f32
    %114 = vector.broadcast %cst_39 : f32 to vector<64x32xf32>
    %115 = arith.subf %113, %114 : vector<64x32xf32>
    %116 = arith.select %110, %108, %115 : vector<64x32xi1>, vector<64x32xf32>
    %cst_40 = arith.constant dense<0.000000e+00> : vector<64x128xf32>
    %117 = tpu.matmul %116, %15, %cst_40 {dimension_numbers = #tpu.dot_dimension_numbers<[1], [0], [0], [1], [0, 0, 1, 1], [], []>} : vector<64x32xf32>, vector<32x128xf32>, vector<64x128xf32> -> vector<64x128xf32>
    %118 = vector.broadcast %13 : vector<1x128xf32> to vector<64x128xf32>
    %119 = arith.addf %117, %118 : vector<64x128xf32>
    %120 = math.tanh %119 : vector<64x128xf32>
    %121 = vector.broadcast %14 : vector<1x128xf32> to vector<64x128xf32>
    %122 = arith.mulf %120, %121 : vector<64x128xf32>
    %cst_41 = arith.constant dense<0.000000e+00> : vector<64xf32>
    %123 = vector.multi_reduction <add>, %122, %cst_41 [1] : vector<64x128xf32> to vector<64xf32>
    %124 = vector.shape_cast %123 : vector<64xf32> to vector<64x1xf32>
    %cst_42 = arith.constant dense<0.000000e+00> : vector<1xf32>
    %125 = vector.multi_reduction <add>, %124, %cst_42 [0] : vector<64x1xf32> to vector<1xf32>
    %126 = vector.shape_cast %125 : vector<1xf32> to vector<1x1xf32>
    %cst_43 = arith.constant 1.562500e-02 : f32
    %127 = vector.broadcast %cst_43 : f32 to vector<1x1xf32>
    %128 = arith.mulf %126, %127 : vector<1x1xf32>
    %c1_44 = arith.constant 1 : index
    %c0_45 = arith.constant 0 : index
    %c0_46 = arith.constant 0 : index
    %129 = vector.load %arg2[%c1_44, %c0_45, %c0_46] : memref<2x64x64xf32, #tpu.memory_space<vmem>>, vector<1x64x64xf32>
    %130 = vector.shape_cast %129 : vector<1x64x64xf32> to vector<64x64xf32>
    %131 = vector.extract_strided_slice %5 {offsets = [0, 0], sizes = [64, 1], strides = [1, 1]} : vector<64x4xf32> to vector<64x1xf32>
    %132 = vector.extract_strided_slice %7 {offsets = [0, 0], sizes = [1, 64], strides = [1, 1]} : vector<4x64xf32> to vector<1x64xf32>
    %133 = vector.broadcast %131 : vector<64x1xf32> to vector<64x64xf32>
    %134 = vector.broadcast %132 : vector<1x64xf32> to vector<64x64xf32>
    %135 = arith.addf %133, %134 : vector<64x64xf32>
    %cst_47 = arith.constant 0.000000e+00 : f32
    %136 = vector.broadcast %cst_47 : f32 to vector<64x64xf32>
    %137 = arith.cmpf ogt, %135, %136 : vector<64x64xf32>
    %cst_48 = arith.constant 2.000000e-01 : f32
    %138 = vector.broadcast %cst_48 : f32 to vector<64x64xf32>
    %139 = arith.mulf %138, %135 : vector<64x64xf32>
    %140 = arith.select %137, %135, %139 : vector<64x64xi1>, vector<64x64xf32>
    %141 = arith.addf %140, %130 : vector<64x64xf32>
    %cst_49 = arith.constant dense<0xFF800000> : vector<64xf32>
    %142 = vector.multi_reduction <maximumf>, %141, %cst_49 [1] : vector<64x64xf32> to vector<64xf32>
    %143 = vector.shape_cast %142 : vector<64xf32> to vector<64x1xf32>
    %144 = vector.broadcast %143 : vector<64x1xf32> to vector<64x64xf32>
    %145 = arith.subf %141, %144 : vector<64x64xf32>
    %146 = math.exp %145 : vector<64x64xf32>
    %cst_50 = arith.constant dense<0.000000e+00> : vector<64xf32>
    %147 = vector.multi_reduction <add>, %146, %cst_50 [1] : vector<64x64xf32> to vector<64xf32>
    %148 = vector.shape_cast %147 : vector<64xf32> to vector<64x1xf32>
    %149 = tpu.reciprocal %148 {approx = true} : vector<64x1xf32> -> vector<64x1xf32>
    %150 = vector.broadcast %149 : vector<64x1xf32> to vector<64x64xf32>
    %151 = arith.mulf %146, %150 : vector<64x64xf32>
    %cst_51 = arith.constant dense<0.000000e+00> : vector<64x8xf32>
    %152 = tpu.matmul %151, %8, %cst_51 {dimension_numbers = #tpu.dot_dimension_numbers<[1], [0], [0], [1], [0, 0, 1, 1], [], []>} : vector<64x64xf32>, vector<64x8xf32>, vector<64x8xf32> -> vector<64x8xf32>
    %153 = vector.extract_strided_slice %5 {offsets = [0, 1], sizes = [64, 1], strides = [1, 1]} : vector<64x4xf32> to vector<64x1xf32>
    %154 = vector.extract_strided_slice %7 {offsets = [1, 0], sizes = [1, 64], strides = [1, 1]} : vector<4x64xf32> to vector<1x64xf32>
    %155 = vector.broadcast %153 : vector<64x1xf32> to vector<64x64xf32>
    %156 = vector.broadcast %154 : vector<1x64xf32> to vector<64x64xf32>
    %157 = arith.addf %155, %156 : vector<64x64xf32>
    %cst_52 = arith.constant 0.000000e+00 : f32
    %158 = vector.broadcast %cst_52 : f32 to vector<64x64xf32>
    %159 = arith.cmpf ogt, %157, %158 : vector<64x64xf32>
    %cst_53 = arith.constant 2.000000e-01 : f32
    %160 = vector.broadcast %cst_53 : f32 to vector<64x64xf32>
    %161 = arith.mulf %160, %157 : vector<64x64xf32>
    %162 = arith.select %159, %157, %161 : vector<64x64xi1>, vector<64x64xf32>
    %163 = arith.addf %162, %130 : vector<64x64xf32>
    %cst_54 = arith.constant dense<0xFF800000> : vector<64xf32>
    %164 = vector.multi_reduction <maximumf>, %163, %cst_54 [1] : vector<64x64xf32> to vector<64xf32>
    %165 = vector.shape_cast %164 : vector<64xf32> to vector<64x1xf32>
    %166 = vector.broadcast %165 : vector<64x1xf32> to vector<64x64xf32>
    %167 = arith.subf %163, %166 : vector<64x64xf32>
    %168 = math.exp %167 : vector<64x64xf32>
    %cst_55 = arith.constant dense<0.000000e+00> : vector<64xf32>
    %169 = vector.multi_reduction <add>, %168, %cst_55 [1] : vector<64x64xf32> to vector<64xf32>
    %170 = vector.shape_cast %169 : vector<64xf32> to vector<64x1xf32>
    %171 = tpu.reciprocal %170 {approx = true} : vector<64x1xf32> -> vector<64x1xf32>
    %172 = vector.broadcast %171 : vector<64x1xf32> to vector<64x64xf32>
    %173 = arith.mulf %168, %172 : vector<64x64xf32>
    %cst_56 = arith.constant dense<0.000000e+00> : vector<64x8xf32>
    %174 = tpu.matmul %173, %9, %cst_56 {dimension_numbers = #tpu.dot_dimension_numbers<[1], [0], [0], [1], [0, 0, 1, 1], [], []>} : vector<64x64xf32>, vector<64x8xf32>, vector<64x8xf32> -> vector<64x8xf32>
    %175 = vector.extract_strided_slice %5 {offsets = [0, 2], sizes = [64, 1], strides = [1, 1]} : vector<64x4xf32> to vector<64x1xf32>
    %176 = vector.extract_strided_slice %7 {offsets = [2, 0], sizes = [1, 64], strides = [1, 1]} : vector<4x64xf32> to vector<1x64xf32>
    %177 = vector.broadcast %175 : vector<64x1xf32> to vector<64x64xf32>
    %178 = vector.broadcast %176 : vector<1x64xf32> to vector<64x64xf32>
    %179 = arith.addf %177, %178 : vector<64x64xf32>
    %cst_57 = arith.constant 0.000000e+00 : f32
    %180 = vector.broadcast %cst_57 : f32 to vector<64x64xf32>
    %181 = arith.cmpf ogt, %179, %180 : vector<64x64xf32>
    %cst_58 = arith.constant 2.000000e-01 : f32
    %182 = vector.broadcast %cst_58 : f32 to vector<64x64xf32>
    %183 = arith.mulf %182, %179 : vector<64x64xf32>
    %184 = arith.select %181, %179, %183 : vector<64x64xi1>, vector<64x64xf32>
    %185 = arith.addf %184, %130 : vector<64x64xf32>
    %cst_59 = arith.constant dense<0xFF800000> : vector<64xf32>
    %186 = vector.multi_reduction <maximumf>, %185, %cst_59 [1] : vector<64x64xf32> to vector<64xf32>
    %187 = vector.shape_cast %186 : vector<64xf32> to vector<64x1xf32>
    %188 = vector.broadcast %187 : vector<64x1xf32> to vector<64x64xf32>
    %189 = arith.subf %185, %188 : vector<64x64xf32>
    %190 = math.exp %189 : vector<64x64xf32>
    %cst_60 = arith.constant dense<0.000000e+00> : vector<64xf32>
    %191 = vector.multi_reduction <add>, %190, %cst_60 [1] : vector<64x64xf32> to vector<64xf32>
    %192 = vector.shape_cast %191 : vector<64xf32> to vector<64x1xf32>
    %193 = tpu.reciprocal %192 {approx = true} : vector<64x1xf32> -> vector<64x1xf32>
    %194 = vector.broadcast %193 : vector<64x1xf32> to vector<64x64xf32>
    %195 = arith.mulf %190, %194 : vector<64x64xf32>
    %cst_61 = arith.constant dense<0.000000e+00> : vector<64x8xf32>
    %196 = tpu.matmul %195, %10, %cst_61 {dimension_numbers = #tpu.dot_dimension_numbers<[1], [0], [0], [1], [0, 0, 1, 1], [], []>} : vector<64x64xf32>, vector<64x8xf32>, vector<64x8xf32> -> vector<64x8xf32>
    %197 = vector.extract_strided_slice %5 {offsets = [0, 3], sizes = [64, 1], strides = [1, 1]} : vector<64x4xf32> to vector<64x1xf32>
    %198 = vector.extract_strided_slice %7 {offsets = [3, 0], sizes = [1, 64], strides = [1, 1]} : vector<4x64xf32> to vector<1x64xf32>
    %199 = vector.broadcast %197 : vector<64x1xf32> to vector<64x64xf32>
    %200 = vector.broadcast %198 : vector<1x64xf32> to vector<64x64xf32>
    %201 = arith.addf %199, %200 : vector<64x64xf32>
    %cst_62 = arith.constant 0.000000e+00 : f32
    %202 = vector.broadcast %cst_62 : f32 to vector<64x64xf32>
    %203 = arith.cmpf ogt, %201, %202 : vector<64x64xf32>
    %cst_63 = arith.constant 2.000000e-01 : f32
    %204 = vector.broadcast %cst_63 : f32 to vector<64x64xf32>
    %205 = arith.mulf %204, %201 : vector<64x64xf32>
    %206 = arith.select %203, %201, %205 : vector<64x64xi1>, vector<64x64xf32>
    %207 = arith.addf %206, %130 : vector<64x64xf32>
    %cst_64 = arith.constant dense<0xFF800000> : vector<64xf32>
    %208 = vector.multi_reduction <maximumf>, %207, %cst_64 [1] : vector<64x64xf32> to vector<64xf32>
    %209 = vector.shape_cast %208 : vector<64xf32> to vector<64x1xf32>
    %210 = vector.broadcast %209 : vector<64x1xf32> to vector<64x64xf32>
    %211 = arith.subf %207, %210 : vector<64x64xf32>
    %212 = math.exp %211 : vector<64x64xf32>
    %cst_65 = arith.constant dense<0.000000e+00> : vector<64xf32>
    %213 = vector.multi_reduction <add>, %212, %cst_65 [1] : vector<64x64xf32> to vector<64xf32>
    %214 = vector.shape_cast %213 : vector<64xf32> to vector<64x1xf32>
    %215 = tpu.reciprocal %214 {approx = true} : vector<64x1xf32> -> vector<64x1xf32>
    %216 = vector.broadcast %215 : vector<64x1xf32> to vector<64x64xf32>
    %217 = arith.mulf %212, %216 : vector<64x64xf32>
    %cst_66 = arith.constant dense<0.000000e+00> : vector<64x8xf32>
    %218 = tpu.matmul %217, %11, %cst_66 {dimension_numbers = #tpu.dot_dimension_numbers<[1], [0], [0], [1], [0, 0, 1, 1], [], []>} : vector<64x64xf32>, vector<64x8xf32>, vector<64x8xf32> -> vector<64x8xf32>
    %219 = tpu.concatenate %152, %174, %196, %218 in 1 : vector<64x8xf32>, vector<64x8xf32>, vector<64x8xf32>, vector<64x8xf32> -> vector<64x32xf32>
    %220 = vector.broadcast %12 : vector<1x32xf32> to vector<64x32xf32>
    %221 = arith.addf %219, %220 : vector<64x32xf32>
    %cst_67 = arith.constant 0.000000e+00 : f32
    %222 = vector.broadcast %cst_67 : f32 to vector<64x32xf32>
    %223 = arith.cmpf ogt, %221, %222 : vector<64x32xf32>
    %cst_68 = arith.constant 0.000000e+00 : f32
    %224 = vector.broadcast %cst_68 : f32 to vector<64x32xf32>
    %225 = arith.minimumf %221, %224 : vector<64x32xf32>
    %226 = math.exp %225 : vector<64x32xf32>
    %cst_69 = arith.constant 1.000000e+00 : f32
    %227 = vector.broadcast %cst_69 : f32 to vector<64x32xf32>
    %228 = arith.subf %226, %227 : vector<64x32xf32>
    %229 = arith.select %223, %221, %228 : vector<64x32xi1>, vector<64x32xf32>
    %cst_70 = arith.constant dense<0.000000e+00> : vector<64x128xf32>
    %230 = tpu.matmul %229, %15, %cst_70 {dimension_numbers = #tpu.dot_dimension_numbers<[1], [0], [0], [1], [0, 0, 1, 1], [], []>} : vector<64x32xf32>, vector<32x128xf32>, vector<64x128xf32> -> vector<64x128xf32>
    %231 = vector.broadcast %13 : vector<1x128xf32> to vector<64x128xf32>
    %232 = arith.addf %230, %231 : vector<64x128xf32>
    %233 = math.tanh %232 : vector<64x128xf32>
    %234 = vector.broadcast %14 : vector<1x128xf32> to vector<64x128xf32>
    %235 = arith.mulf %233, %234 : vector<64x128xf32>
    %cst_71 = arith.constant dense<0.000000e+00> : vector<64xf32>
    %236 = vector.multi_reduction <add>, %235, %cst_71 [1] : vector<64x128xf32> to vector<64xf32>
    %237 = vector.shape_cast %236 : vector<64xf32> to vector<64x1xf32>
    %cst_72 = arith.constant dense<0.000000e+00> : vector<1xf32>
    %238 = vector.multi_reduction <add>, %237, %cst_72 [0] : vector<64x1xf32> to vector<1xf32>
    %239 = vector.shape_cast %238 : vector<1xf32> to vector<1x1xf32>
    %cst_73 = arith.constant 1.562500e-02 : f32
    %240 = vector.broadcast %cst_73 : f32 to vector<1x1xf32>
    %241 = arith.mulf %239, %240 : vector<1x1xf32>
    %242 = arith.maximumf %128, %241 : vector<1x1xf32>
    %243 = arith.subf %128, %242 : vector<1x1xf32>
    %244 = math.exp %243 : vector<1x1xf32>
    %245 = arith.subf %241, %242 : vector<1x1xf32>
    %246 = math.exp %245 : vector<1x1xf32>
    %247 = arith.addf %244, %246 : vector<1x1xf32>
    %248 = tpu.reciprocal %247 {approx = true} : vector<1x1xf32> -> vector<1x1xf32>
    %249 = arith.mulf %244, %248 : vector<1x1xf32>
    %250 = vector.broadcast %249 : vector<1x1xf32> to vector<64x32xf32>
    %251 = arith.mulf %116, %250 : vector<64x32xf32>
    %252 = arith.mulf %246, %248 : vector<1x1xf32>
    %253 = vector.broadcast %252 : vector<1x1xf32> to vector<64x32xf32>
    %254 = arith.mulf %229, %253 : vector<64x32xf32>
    %255 = arith.addf %251, %254 : vector<64x32xf32>
    %c0_74 = arith.constant 0 : index
    %c0_75 = arith.constant 0 : index
    %256 = vector.load %arg8[%c0_74, %c0_75] : memref<32x256xf32, #tpu.memory_space<vmem>>, vector<32x256xf32>
    %cst_76 = arith.constant dense<0.000000e+00> : vector<64x256xf32>
    %257 = tpu.matmul %255, %256, %cst_76 {dimension_numbers = #tpu.dot_dimension_numbers<[1], [0], [0], [1], [0, 0, 1, 1], [], []>} : vector<64x32xf32>, vector<32x256xf32>, vector<64x256xf32> -> vector<64x256xf32>
    %c0_77 = arith.constant 0 : index
    %c0_78 = arith.constant 0 : index
    %258 = vector.load %arg9[%c0_77, %c0_78] : memref<256x4xf32, #tpu.memory_space<vmem>>, vector<256x4xf32>
    %259 = vector.extract_strided_slice %258 {offsets = [0, 0], sizes = [256, 2], strides = [1, 1]} : vector<256x4xf32> to vector<256x2xf32>
    %cst_79 = arith.constant dense<0.000000e+00> : vector<64x2xf32>
    %260 = tpu.matmul %257, %259, %cst_79 {dimension_numbers = #tpu.dot_dimension_numbers<[1], [0], [0], [1], [0, 0, 1, 1], [], []>} : vector<64x256xf32>, vector<256x2xf32>, vector<64x2xf32> -> vector<64x2xf32>
    %261 = vector.extract_strided_slice %258 {offsets = [0, 2], sizes = [256, 2], strides = [1, 1]} : vector<256x4xf32> to vector<256x2xf32>
    %cst_80 = arith.constant dense<0.000000e+00> : vector<2x64xf32>
    %262 = tpu.matmul %261, %257, %cst_80 {dimension_numbers = #tpu.dot_dimension_numbers<[0], [1], [1], [0], [0, 1, 1, 0], [], []>} : vector<256x2xf32>, vector<64x256xf32>, vector<2x64xf32> -> vector<2x64xf32>
    %263 = vector.extract_strided_slice %257 {offsets = [0, 0], sizes = [64, 128], strides = [1, 1]} : vector<64x256xf32> to vector<64x128xf32>
    %264 = vector.extract_strided_slice %257 {offsets = [0, 128], sizes = [64, 128], strides = [1, 1]} : vector<64x256xf32> to vector<64x128xf32>
    %c0_81 = arith.constant 0 : index
    %c0_82 = arith.constant 0 : index
    %265 = vector.load %arg10[%c0_81, %c0_82] : memref<1x256xf32, #tpu.memory_space<vmem>>, vector<1x256xf32>
    %c0_83 = arith.constant 0 : index
    %c0_84 = arith.constant 0 : index
    %266 = vector.load %arg12[%c0_83, %c0_84] : memref<2x128xf32, #tpu.memory_space<vmem>>, vector<1x128xf32>
    %c1_85 = arith.constant 1 : index
    %c0_86 = arith.constant 0 : index
    %267 = vector.load %arg12[%c1_85, %c0_86] : memref<2x128xf32, #tpu.memory_space<vmem>>, vector<1x128xf32>
    %c0_87 = arith.constant 0 : index
    %c0_88 = arith.constant 0 : index
    %268 = vector.load %arg11[%c0_87, %c0_88] : memref<256x128xf32, #tpu.memory_space<vmem>>, vector<256x128xf32>
    %c0_89 = arith.constant 0 : index
    %c0_90 = arith.constant 0 : index
    %c0_91 = arith.constant 0 : index
    %269 = vector.load %arg2[%c0_89, %c0_90, %c0_91] : memref<2x64x64xf32, #tpu.memory_space<vmem>>, vector<1x64x64xf32>
    %270 = vector.shape_cast %269 : vector<1x64x64xf32> to vector<64x64xf32>
    %271 = vector.extract_strided_slice %260 {offsets = [0, 0], sizes = [64, 1], strides = [1, 1]} : vector<64x2xf32> to vector<64x1xf32>
    %272 = vector.extract_strided_slice %262 {offsets = [0, 0], sizes = [1, 64], strides = [1, 1]} : vector<2x64xf32> to vector<1x64xf32>
    %273 = vector.broadcast %271 : vector<64x1xf32> to vector<64x64xf32>
    %274 = vector.broadcast %272 : vector<1x64xf32> to vector<64x64xf32>
    %275 = arith.addf %273, %274 : vector<64x64xf32>
    %cst_92 = arith.constant 0.000000e+00 : f32
    %276 = vector.broadcast %cst_92 : f32 to vector<64x64xf32>
    %277 = arith.cmpf ogt, %275, %276 : vector<64x64xf32>
    %cst_93 = arith.constant 2.000000e-01 : f32
    %278 = vector.broadcast %cst_93 : f32 to vector<64x64xf32>
    %279 = arith.mulf %278, %275 : vector<64x64xf32>
    %280 = arith.select %277, %275, %279 : vector<64x64xi1>, vector<64x64xf32>
    %281 = arith.addf %280, %270 : vector<64x64xf32>
    %cst_94 = arith.constant dense<0xFF800000> : vector<64xf32>
    %282 = vector.multi_reduction <maximumf>, %281, %cst_94 [1] : vector<64x64xf32> to vector<64xf32>
    %283 = vector.shape_cast %282 : vector<64xf32> to vector<64x1xf32>
    %284 = vector.broadcast %283 : vector<64x1xf32> to vector<64x64xf32>
    %285 = arith.subf %281, %284 : vector<64x64xf32>
    %286 = math.exp %285 : vector<64x64xf32>
    %cst_95 = arith.constant dense<0.000000e+00> : vector<64xf32>
    %287 = vector.multi_reduction <add>, %286, %cst_95 [1] : vector<64x64xf32> to vector<64xf32>
    %288 = vector.shape_cast %287 : vector<64xf32> to vector<64x1xf32>
    %289 = tpu.reciprocal %288 {approx = true} : vector<64x1xf32> -> vector<64x1xf32>
    %290 = vector.broadcast %289 : vector<64x1xf32> to vector<64x64xf32>
    %291 = arith.mulf %286, %290 : vector<64x64xf32>
    %cst_96 = arith.constant dense<0.000000e+00> : vector<64x128xf32>
    %292 = tpu.matmul %291, %263, %cst_96 {dimension_numbers = #tpu.dot_dimension_numbers<[1], [0], [0], [1], [0, 0, 1, 1], [], []>} : vector<64x64xf32>, vector<64x128xf32>, vector<64x128xf32> -> vector<64x128xf32>
    %293 = vector.extract_strided_slice %260 {offsets = [0, 1], sizes = [64, 1], strides = [1, 1]} : vector<64x2xf32> to vector<64x1xf32>
    %294 = vector.extract_strided_slice %262 {offsets = [1, 0], sizes = [1, 64], strides = [1, 1]} : vector<2x64xf32> to vector<1x64xf32>
    %295 = vector.broadcast %293 : vector<64x1xf32> to vector<64x64xf32>
    %296 = vector.broadcast %294 : vector<1x64xf32> to vector<64x64xf32>
    %297 = arith.addf %295, %296 : vector<64x64xf32>
    %cst_97 = arith.constant 0.000000e+00 : f32
    %298 = vector.broadcast %cst_97 : f32 to vector<64x64xf32>
    %299 = arith.cmpf ogt, %297, %298 : vector<64x64xf32>
    %cst_98 = arith.constant 2.000000e-01 : f32
    %300 = vector.broadcast %cst_98 : f32 to vector<64x64xf32>
    %301 = arith.mulf %300, %297 : vector<64x64xf32>
    %302 = arith.select %299, %297, %301 : vector<64x64xi1>, vector<64x64xf32>
    %303 = arith.addf %302, %270 : vector<64x64xf32>
    %cst_99 = arith.constant dense<0xFF800000> : vector<64xf32>
    %304 = vector.multi_reduction <maximumf>, %303, %cst_99 [1] : vector<64x64xf32> to vector<64xf32>
    %305 = vector.shape_cast %304 : vector<64xf32> to vector<64x1xf32>
    %306 = vector.broadcast %305 : vector<64x1xf32> to vector<64x64xf32>
    %307 = arith.subf %303, %306 : vector<64x64xf32>
    %308 = math.exp %307 : vector<64x64xf32>
    %cst_100 = arith.constant dense<0.000000e+00> : vector<64xf32>
    %309 = vector.multi_reduction <add>, %308, %cst_100 [1] : vector<64x64xf32> to vector<64xf32>
    %310 = vector.shape_cast %309 : vector<64xf32> to vector<64x1xf32>
    %311 = tpu.reciprocal %310 {approx = true} : vector<64x1xf32> -> vector<64x1xf32>
    %312 = vector.broadcast %311 : vector<64x1xf32> to vector<64x64xf32>
    %313 = arith.mulf %308, %312 : vector<64x64xf32>
    %cst_101 = arith.constant dense<0.000000e+00> : vector<64x128xf32>
    %314 = tpu.matmul %313, %264, %cst_101 {dimension_numbers = #tpu.dot_dimension_numbers<[1], [0], [0], [1], [0, 0, 1, 1], [], []>} : vector<64x64xf32>, vector<64x128xf32>, vector<64x128xf32> -> vector<64x128xf32>
    %315 = tpu.concatenate %292, %314 in 1 : vector<64x128xf32>, vector<64x128xf32> -> vector<64x256xf32>
    %316 = vector.broadcast %265 : vector<1x256xf32> to vector<64x256xf32>
    %317 = arith.addf %315, %316 : vector<64x256xf32>
    %cst_102 = arith.constant dense<0.000000e+00> : vector<64x128xf32>
    %318 = tpu.matmul %317, %268, %cst_102 {dimension_numbers = #tpu.dot_dimension_numbers<[1], [0], [0], [1], [0, 0, 1, 1], [], []>} : vector<64x256xf32>, vector<256x128xf32>, vector<64x128xf32> -> vector<64x128xf32>
    %319 = vector.broadcast %266 : vector<1x128xf32> to vector<64x128xf32>
    %320 = arith.addf %318, %319 : vector<64x128xf32>
    %321 = math.tanh %320 : vector<64x128xf32>
    %322 = vector.broadcast %267 : vector<1x128xf32> to vector<64x128xf32>
    %323 = arith.mulf %321, %322 : vector<64x128xf32>
    %cst_103 = arith.constant dense<0.000000e+00> : vector<64xf32>
    %324 = vector.multi_reduction <add>, %323, %cst_103 [1] : vector<64x128xf32> to vector<64xf32>
    %325 = vector.shape_cast %324 : vector<64xf32> to vector<64x1xf32>
    %cst_104 = arith.constant dense<0.000000e+00> : vector<1xf32>
    %326 = vector.multi_reduction <add>, %325, %cst_104 [0] : vector<64x1xf32> to vector<1xf32>
    %327 = vector.shape_cast %326 : vector<1xf32> to vector<1x1xf32>
    %cst_105 = arith.constant 1.562500e-02 : f32
    %328 = vector.broadcast %cst_105 : f32 to vector<1x1xf32>
    %329 = arith.mulf %327, %328 : vector<1x1xf32>
    %c1_106 = arith.constant 1 : index
    %c0_107 = arith.constant 0 : index
    %c0_108 = arith.constant 0 : index
    %330 = vector.load %arg2[%c1_106, %c0_107, %c0_108] : memref<2x64x64xf32, #tpu.memory_space<vmem>>, vector<1x64x64xf32>
    %331 = vector.shape_cast %330 : vector<1x64x64xf32> to vector<64x64xf32>
    %332 = vector.extract_strided_slice %260 {offsets = [0, 0], sizes = [64, 1], strides = [1, 1]} : vector<64x2xf32> to vector<64x1xf32>
    %333 = vector.extract_strided_slice %262 {offsets = [0, 0], sizes = [1, 64], strides = [1, 1]} : vector<2x64xf32> to vector<1x64xf32>
    %334 = vector.broadcast %332 : vector<64x1xf32> to vector<64x64xf32>
    %335 = vector.broadcast %333 : vector<1x64xf32> to vector<64x64xf32>
    %336 = arith.addf %334, %335 : vector<64x64xf32>
    %cst_109 = arith.constant 0.000000e+00 : f32
    %337 = vector.broadcast %cst_109 : f32 to vector<64x64xf32>
    %338 = arith.cmpf ogt, %336, %337 : vector<64x64xf32>
    %cst_110 = arith.constant 2.000000e-01 : f32
    %339 = vector.broadcast %cst_110 : f32 to vector<64x64xf32>
    %340 = arith.mulf %339, %336 : vector<64x64xf32>
    %341 = arith.select %338, %336, %340 : vector<64x64xi1>, vector<64x64xf32>
    %342 = arith.addf %341, %331 : vector<64x64xf32>
    %cst_111 = arith.constant dense<0xFF800000> : vector<64xf32>
    %343 = vector.multi_reduction <maximumf>, %342, %cst_111 [1] : vector<64x64xf32> to vector<64xf32>
    %344 = vector.shape_cast %343 : vector<64xf32> to vector<64x1xf32>
    %345 = vector.broadcast %344 : vector<64x1xf32> to vector<64x64xf32>
    %346 = arith.subf %342, %345 : vector<64x64xf32>
    %347 = math.exp %346 : vector<64x64xf32>
    %cst_112 = arith.constant dense<0.000000e+00> : vector<64xf32>
    %348 = vector.multi_reduction <add>, %347, %cst_112 [1] : vector<64x64xf32> to vector<64xf32>
    %349 = vector.shape_cast %348 : vector<64xf32> to vector<64x1xf32>
    %350 = tpu.reciprocal %349 {approx = true} : vector<64x1xf32> -> vector<64x1xf32>
    %351 = vector.broadcast %350 : vector<64x1xf32> to vector<64x64xf32>
    %352 = arith.mulf %347, %351 : vector<64x64xf32>
    %cst_113 = arith.constant dense<0.000000e+00> : vector<64x128xf32>
    %353 = tpu.matmul %352, %263, %cst_113 {dimension_numbers = #tpu.dot_dimension_numbers<[1], [0], [0], [1], [0, 0, 1, 1], [], []>} : vector<64x64xf32>, vector<64x128xf32>, vector<64x128xf32> -> vector<64x128xf32>
    %354 = vector.extract_strided_slice %260 {offsets = [0, 1], sizes = [64, 1], strides = [1, 1]} : vector<64x2xf32> to vector<64x1xf32>
    %355 = vector.extract_strided_slice %262 {offsets = [1, 0], sizes = [1, 64], strides = [1, 1]} : vector<2x64xf32> to vector<1x64xf32>
    %356 = vector.broadcast %354 : vector<64x1xf32> to vector<64x64xf32>
    %357 = vector.broadcast %355 : vector<1x64xf32> to vector<64x64xf32>
    %358 = arith.addf %356, %357 : vector<64x64xf32>
    %cst_114 = arith.constant 0.000000e+00 : f32
    %359 = vector.broadcast %cst_114 : f32 to vector<64x64xf32>
    %360 = arith.cmpf ogt, %358, %359 : vector<64x64xf32>
    %cst_115 = arith.constant 2.000000e-01 : f32
    %361 = vector.broadcast %cst_115 : f32 to vector<64x64xf32>
    %362 = arith.mulf %361, %358 : vector<64x64xf32>
    %363 = arith.select %360, %358, %362 : vector<64x64xi1>, vector<64x64xf32>
    %364 = arith.addf %363, %331 : vector<64x64xf32>
    %cst_116 = arith.constant dense<0xFF800000> : vector<64xf32>
    %365 = vector.multi_reduction <maximumf>, %364, %cst_116 [1] : vector<64x64xf32> to vector<64xf32>
    %366 = vector.shape_cast %365 : vector<64xf32> to vector<64x1xf32>
    %367 = vector.broadcast %366 : vector<64x1xf32> to vector<64x64xf32>
    %368 = arith.subf %364, %367 : vector<64x64xf32>
    %369 = math.exp %368 : vector<64x64xf32>
    %cst_117 = arith.constant dense<0.000000e+00> : vector<64xf32>
    %370 = vector.multi_reduction <add>, %369, %cst_117 [1] : vector<64x64xf32> to vector<64xf32>
    %371 = vector.shape_cast %370 : vector<64xf32> to vector<64x1xf32>
    %372 = tpu.reciprocal %371 {approx = true} : vector<64x1xf32> -> vector<64x1xf32>
    %373 = vector.broadcast %372 : vector<64x1xf32> to vector<64x64xf32>
    %374 = arith.mulf %369, %373 : vector<64x64xf32>
    %cst_118 = arith.constant dense<0.000000e+00> : vector<64x128xf32>
    %375 = tpu.matmul %374, %264, %cst_118 {dimension_numbers = #tpu.dot_dimension_numbers<[1], [0], [0], [1], [0, 0, 1, 1], [], []>} : vector<64x64xf32>, vector<64x128xf32>, vector<64x128xf32> -> vector<64x128xf32>
    %376 = tpu.concatenate %353, %375 in 1 : vector<64x128xf32>, vector<64x128xf32> -> vector<64x256xf32>
    %377 = vector.broadcast %265 : vector<1x256xf32> to vector<64x256xf32>
    %378 = arith.addf %376, %377 : vector<64x256xf32>
    %cst_119 = arith.constant dense<0.000000e+00> : vector<64x128xf32>
    %379 = tpu.matmul %378, %268, %cst_119 {dimension_numbers = #tpu.dot_dimension_numbers<[1], [0], [0], [1], [0, 0, 1, 1], [], []>} : vector<64x256xf32>, vector<256x128xf32>, vector<64x128xf32> -> vector<64x128xf32>
    %380 = vector.broadcast %266 : vector<1x128xf32> to vector<64x128xf32>
    %381 = arith.addf %379, %380 : vector<64x128xf32>
    %382 = math.tanh %381 : vector<64x128xf32>
    %383 = vector.broadcast %267 : vector<1x128xf32> to vector<64x128xf32>
    %384 = arith.mulf %382, %383 : vector<64x128xf32>
    %cst_120 = arith.constant dense<0.000000e+00> : vector<64xf32>
    %385 = vector.multi_reduction <add>, %384, %cst_120 [1] : vector<64x128xf32> to vector<64xf32>
    %386 = vector.shape_cast %385 : vector<64xf32> to vector<64x1xf32>
    %cst_121 = arith.constant dense<0.000000e+00> : vector<1xf32>
    %387 = vector.multi_reduction <add>, %386, %cst_121 [0] : vector<64x1xf32> to vector<1xf32>
    %388 = vector.shape_cast %387 : vector<1xf32> to vector<1x1xf32>
    %cst_122 = arith.constant 1.562500e-02 : f32
    %389 = vector.broadcast %cst_122 : f32 to vector<1x1xf32>
    %390 = arith.mulf %388, %389 : vector<1x1xf32>
    %391 = arith.maximumf %329, %390 : vector<1x1xf32>
    %392 = arith.subf %329, %391 : vector<1x1xf32>
    %393 = math.exp %392 : vector<1x1xf32>
    %394 = arith.subf %390, %391 : vector<1x1xf32>
    %395 = math.exp %394 : vector<1x1xf32>
    %396 = arith.addf %393, %395 : vector<1x1xf32>
    %397 = tpu.reciprocal %396 {approx = true} : vector<1x1xf32> -> vector<1x1xf32>
    %398 = arith.mulf %393, %397 : vector<1x1xf32>
    %399 = vector.broadcast %398 : vector<1x1xf32> to vector<64x256xf32>
    %400 = arith.mulf %317, %399 : vector<64x256xf32>
    %401 = arith.mulf %395, %397 : vector<1x1xf32>
    %402 = vector.broadcast %401 : vector<1x1xf32> to vector<64x256xf32>
    %403 = arith.mulf %378, %402 : vector<64x256xf32>
    %404 = arith.addf %400, %403 : vector<64x256xf32>
    %c0_123 = arith.constant 0 : index
    %c0_124 = arith.constant 0 : index
    %405 = vector.load %arg13[%c0_123, %c0_124] : memref<64x256xf32, #tpu.memory_space<vmem>>, vector<64x256xf32>
    tpu.vector_store %arg13[%c0_123, %c0_124], %404 {strides = array<i32>} : memref<64x256xf32, #tpu.memory_space<vmem>>, vector<64x256xf32>,
    return
  }
  func.func @transform_0(%arg0: i32) -> (i32, i32) {
    %c0_i32 = arith.constant 0 : i32
    %c0_i32_0 = arith.constant 0 : i32
    %c0_i32_1 = arith.constant 0 : i32
    return %c0_i32, %c0_i32_0 : i32, i32
  }
  func.func @transform_1(%arg0: i32) -> (i32, i32, i32) {
    %c0_i32 = arith.constant 0 : i32
    %c0_i32_0 = arith.constant 0 : i32
    %c0_i32_1 = arith.constant 0 : i32
    %c0_i32_2 = arith.constant 0 : i32
    return %c0_i32, %c0_i32_0, %c0_i32_1 : i32, i32, i32
  }
  func.func @transform_2(%arg0: i32) -> (i32, i32) {
    %c0_i32 = arith.constant 0 : i32
    %c0_i32_0 = arith.constant 0 : i32
    %c0_i32_1 = arith.constant 0 : i32
    return %c0_i32, %c0_i32_0 : i32, i32
  }
  func.func @transform_3(%arg0: i32) -> (i32, i32) {
    %c0_i32 = arith.constant 0 : i32
    %c0_i32_0 = arith.constant 0 : i32
    %c0_i32_1 = arith.constant 0 : i32
    return %c0_i32, %c0_i32_0 : i32, i32
  }
  func.func @transform_4(%arg0: i32) -> (i32, i32) {
    %c0_i32 = arith.constant 0 : i32
    %c0_i32_0 = arith.constant 0 : i32
    %c0_i32_1 = arith.constant 0 : i32
    return %c0_i32, %c0_i32_0 : i32, i32
  }
  func.func @transform_5(%arg0: i32) -> (i32, i32) {
    %c0_i32 = arith.constant 0 : i32
    %c0_i32_0 = arith.constant 0 : i32
    %c0_i32_1 = arith.constant 0 : i32
    return %c0_i32, %c0_i32_0 : i32, i32
  }
  func.func @transform_6(%arg0: i32) -> (i32, i32) {
    %c0_i32 = arith.constant 0 : i32
    %c0_i32_0 = arith.constant 0 : i32
    %c0_i32_1 = arith.constant 0 : i32
    return %c0_i32, %c0_i32_0 : i32, i32
  }
  func.func @transform_7(%arg0: i32) -> (i32, i32) {
    %c0_i32 = arith.constant 0 : i32
    %c0_i32_0 = arith.constant 0 : i32
    %c0_i32_1 = arith.constant 0 : i32
    return %c0_i32, %c0_i32_0 : i32, i32
  }
  func.func @transform_8(%arg0: i32) -> (i32, i32) {
    %c0_i32 = arith.constant 0 : i32
    %c0_i32_0 = arith.constant 0 : i32
    %c0_i32_1 = arith.constant 0 : i32
    return %c0_i32, %c0_i32_0 : i32, i32
  }
  func.func @transform_9(%arg0: i32) -> (i32, i32) {
    %c0_i32 = arith.constant 0 : i32
    %c0_i32_0 = arith.constant 0 : i32
    %c0_i32_1 = arith.constant 0 : i32
    return %c0_i32, %c0_i32_0 : i32, i32
  }
  func.func @transform_10(%arg0: i32) -> (i32, i32) {
    %c0_i32 = arith.constant 0 : i32
    %c0_i32_0 = arith.constant 0 : i32
    %c0_i32_1 = arith.constant 0 : i32
    return %c0_i32, %c0_i32_0 : i32, i32
  }
  func.func @transform_11(%arg0: i32) -> (i32, i32) {
    %c0_i32 = arith.constant 0 : i32
    %c0_i32_0 = arith.constant 0 : i32
    %c0_i32_1 = arith.constant 0 : i32
    return %c0_i32, %c0_i32_0 : i32, i32
  }
  func.func @transform_12(%arg0: i32) -> (i32, i32) {
    %c0_i32 = arith.constant 0 : i32
    %c0_i32_0 = arith.constant 0 : i32
    %c0_i32_1 = arith.constant 0 : i32
    return %c0_i32, %c0_i32_0 : i32, i32
  }
}

</mosaic_0001>

<llo_original>
// kernel: tpu_custom_call.1
$region0: #{tpu_custom_call.1}
  #allocation0 [shape = 'u32[]', space=smem, size = 0x4, offset = 0x4, fixed_abs, tag = 'smem constant byte address 0x4 - core index']
  #allocation1 [shape = 'u32[144,128]{1,0:T(1,128)}', space=vmem, size = 0x12000, scoped, tag = 'internal scratch']
  %s0 = inlined_call_operand.hbm [shape: f32[64,64], index: 0, kind: input, shape index: {}]
  %s1 = inlined_call_operand.vmem [shape: f32[2,64,64], index: 1, kind: input, shape index: {}]
  %s2 = inlined_call_operand.vmem [shape: f32[64,32], index: 2, kind: input, shape index: {}]
  %s3 = inlined_call_operand.vmem [shape: f32[32,8], index: 3, kind: input, shape index: {}]
  %s4 = inlined_call_operand.vmem [shape: f32[1,32], index: 4, kind: input, shape index: {}]
  %s5 = inlined_call_operand.vmem [shape: f32[32,128], index: 5, kind: input, shape index: {}]
  %s6 = inlined_call_operand.vmem [shape: f32[2,128], index: 6, kind: input, shape index: {}]
  %s7 = inlined_call_operand.hbm [shape: f32[32,256], index: 7, kind: input, shape index: {}]
  %s8 = inlined_call_operand.vmem [shape: f32[256,4], index: 8, kind: input, shape index: {}]
  %s9 = inlined_call_operand.vmem [shape: f32[1,256], index: 9, kind: input, shape index: {}]
  %s10 = inlined_call_operand.vmem [shape: f32[256,128], index: 10, kind: input, shape index: {}]
  %s11 = inlined_call_operand.vmem [shape: f32[2,128], index: 11, kind: input, shape index: {}]
  %s12 = inlined_call_operand.hbm [shape: f32[64,256], index: 12, kind: output, shape index: {}]
  %s13 = sld [smem:[#allocation0]]
  $region66: #{tpu_custom_call.1} parent=0
    _
  %s15 = ssub.s32 1, %s13
  %s16 = scalar_select 0, %s15, %s13
  $region1: #{tpu_custom_call.1} parent=0
    #allocation2 [shape = 'u8[32768]{0}', space=vmem, size = 0x8000, scoped, tag = 'input window, operand 0, single buffered']
    #allocation3 [shape = 's32[1]{0}', space=sflag, size = 0x4, scoped, tag = 'scoped memory for tpu_custom_call.1']
    #allocation4 [shape = 's32[1]{0}', space=sflag, size = 0x4, scoped, tag = 'scoped memory for tpu_custom_call.1']
    #allocation5 [shape = 'u8[32768]{0}', space=vmem, size = 0x8000, scoped, tag = 'input window, operand 7, single buffered']
    #allocation6 [shape = 's32[1]{0}', space=sflag, size = 0x4, scoped, tag = 'scoped memory for tpu_custom_call.1']
    #allocation7 [shape = 'u8[65536]{0}', space=vmem, size = 0x10000, scoped, tag = 'output window, operand 0, single buffered']
    %17 = vsyncpa [#allocation3], 0
    %18 = vsyncpa [#allocation6], 0
    %19 = vsyncpa [#allocation4], 0
    // Predicated region
    $region2: #{tpu_custom_call.1} parent=1 // pred_check
      _
    $region3: #{tpu_custom_call.1} parent=1 // pred_check_branch
      %21 = sbr.rel (0) target = $region5
    $region4: #{tpu_custom_call.1} parent=1 // pred_region
      %s23 = ssub.s32 1024, 1024
      %24 = vsyncadd [#allocation3], %s23
      %s25 = sshll.u32 [#allocation2], 4
      %s26 = int_to_ptr.vmem [resolvable:$true] %s25
      %31 = dma.hbm_to_vmem [thread:$0]  %s0, 1024, %s26, [#allocation3], 128, 128, 8
    $region5: #{tpu_custom_call.1} parent=1 // pred_fallthru
      _
    // Predicated region
    $region6: #{tpu_custom_call.1} parent=1 // pred_check
      _
    $region7: #{tpu_custom_call.1} parent=1 // pred_check_branch
      %33 = sbr.rel (0) target = $region9
    $region8: #{tpu_custom_call.1} parent=1 // pred_region
      _
    $region9: #{tpu_custom_call.1} parent=1 // pred_fallthru
      _
    // Predicated region
    $region10: #{tpu_custom_call.1} parent=1 // pred_check
      _
    $region11: #{tpu_custom_call.1} parent=1 // pred_check_branch
      %35 = sbr.rel (0) target = $region13
    $region12: #{tpu_custom_call.1} parent=1 // pred_region
      _
    $region13: #{tpu_custom_call.1} parent=1 // pred_fallthru
      _
    // Predicated region
    $region14: #{tpu_custom_call.1} parent=1 // pred_check
      _
    $region15: #{tpu_custom_call.1} parent=1 // pred_check_branch
      %37 = sbr.rel (0) target = $region17
    $region16: #{tpu_custom_call.1} parent=1 // pred_region
      _
    $region17: #{tpu_custom_call.1} parent=1 // pred_fallthru
      _
    // Predicated region
    $region18: #{tpu_custom_call.1} parent=1 // pred_check
      _
    $region19: #{tpu_custom_call.1} parent=1 // pred_check_branch
      %39 = sbr.rel (0) target = $region21
    $region20: #{tpu_custom_call.1} parent=1 // pred_region
      _
    $region21: #{tpu_custom_call.1} parent=1 // pred_fallthru
      _
    // Predicated region
    $region22: #{tpu_custom_call.1} parent=1 // pred_check
      _
    $region23: #{tpu_custom_call.1} parent=1 // pred_check_branch
      %41 = sbr.rel (0) target = $region25
    $region24: #{tpu_custom_call.1} parent=1 // pred_region
      _
    $region25: #{tpu_custom_call.1} parent=1 // pred_fallthru
      _
    // Predicated region
    $region26: #{tpu_custom_call.1} parent=1 // pred_check
      _
    $region27: #{tpu_custom_call.1} parent=1 // pred_check_branch
      %43 = sbr.rel (0) target = $region29
    $region28: #{tpu_custom_call.1} parent=1 // pred_region
      _
    $region29: #{tpu_custom_call.1} parent=1 // pred_fallthru
      _
    // Predicated region
    $region30: #{tpu_custom_call.1} parent=1 // pred_check
      _
    $region31: #{tpu_custom_call.1} parent=1 // pred_check_branch
      %45 = sbr.rel (0) target = $region33
    $region32: #{tpu_custom_call.1} parent=1 // pred_region
      %s47 = ssub.s32 1024, 1024
      %48 = vsyncadd [#allocation6], %s47
      %s49 = sshll.u32 [#allocation5], 4
      %s50 = int_to_ptr.vmem [resolvable:$true] %s49
      %55 = dma.hbm_to_vmem [thread:$0]  %s7, 1024, %s50, [#allocation6], 256, 256, 16
    $region33: #{tpu_custom_call.1} parent=1 // pred_fallthru
      _
    // Predicated region
    $region34: #{tpu_custom_call.1} parent=1 // pred_check
      _
    $region35: #{tpu_custom_call.1} parent=1 // pred_check_branch
      %57 = sbr.rel (0) target = $region37
    $region36: #{tpu_custom_call.1} parent=1 // pred_region
      _
    $region37: #{tpu_custom_call.1} parent=1 // pred_fallthru
      _
    // Predicated region
    $region38: #{tpu_custom_call.1} parent=1 // pred_check
      _
    $region39: #{tpu_custom_call.1} parent=1 // pred_check_branch
      %59 = sbr.rel (0) target = $region41
    $region40: #{tpu_custom_call.1} parent=1 // pred_region
      _
    $region41: #{tpu_custom_call.1} parent=1 // pred_fallthru
      _
    // Predicated region
    $region42: #{tpu_custom_call.1} parent=1 // pred_check
      _
    $region43: #{tpu_custom_call.1} parent=1 // pred_check_branch
      %61 = sbr.rel (0) target = $region45
    $region44: #{tpu_custom_call.1} parent=1 // pred_region
      _
    $region45: #{tpu_custom_call.1} parent=1 // pred_fallthru
      _
    // Predicated region
    $region46: #{tpu_custom_call.1} parent=1 // pred_check
      _
    $region47: #{tpu_custom_call.1} parent=1 // pred_check_branch
      %63 = sbr.rel (0) target = $region49
    $region48: #{tpu_custom_call.1} parent=1 // pred_region
      _
    $region49: #{tpu_custom_call.1} parent=1 // pred_fallthru
      _
    // Predicated region
    $region50: #{tpu_custom_call.1} parent=1 // pred_check
      _
    $region51: #{tpu_custom_call.1} parent=1 // pred_check_branch
      %65 = sbr.rel (0) target = $region53
    $region52: #{tpu_custom_call.1} parent=1 // pred_region
      %66 = dma.done [#allocation3], 1024
    $region53: #{tpu_custom_call.1} parent=1 // pred_fallthru
      _
    // Predicated region
    $region54: #{tpu_custom_call.1} parent=1 // pred_check
      _
    $region55: #{tpu_custom_call.1} parent=1 // pred_check_branch
      %68 = sbr.rel (0) target = $region57
    $region56: #{tpu_custom_call.1} parent=1 // pred_region
      %69 = dma.done [#allocation6], 1024
    $region57: #{tpu_custom_call.1} parent=1 // pred_fallthru
      _
    %v70 = vld [vmem:[#allocation2] sm:$0xff]
    %v71 = vld [vmem:[#allocation2 + $0x8] sm:$0xff]
    %v72 = vld [vmem:[#allocation2 + $0x10] sm:$0xff]
    %v73 = vld [vmem:[#allocation2 + $0x18] sm:$0xff]
    %v74 = vld [vmem:[#allocation2 + $0x20] sm:$0xff]
    %v75 = vld [vmem:[#allocation2 + $0x28] sm:$0xff]
    %v76 = vld [vmem:[#allocation2 + $0x30] sm:$0xff]
    %v77 = vld [vmem:[#allocation2 + $0x38] sm:$0xff]
    %v78 = vld [vmem:[%s2] sm:$0xff]
    %v79 = vld [vmem:[%s2 + $0x8] sm:$0xff]
    %v80 = vld [vmem:[%s2 + $0x10] sm:$0xff]
    %v81 = vld [vmem:[%s2 + $0x18] sm:$0xff]
    %v82 = vld [vmem:[%s2 + $0x20] sm:$0xff]
    %v83 = vld [vmem:[%s2 + $0x28] sm:$0xff]
    %v84 = vld [vmem:[%s2 + $0x30] sm:$0xff]
    %v85 = vld [vmem:[%s2 + $0x38] sm:$0xff]
    %vm86 = vcmask 523264
    %v88 = vsel %vm86, %v70, 0
    %v91 = vsel %vm86, %v71, 0
    %v94 = vsel %vm86, %v72, 0
    %v97 = vsel %vm86, %v73, 0
    %v100 = vsel %vm86, %v74, 0
    %v103 = vsel %vm86, %v75, 0
    %v106 = vsel %vm86, %v76, 0
    %v109 = vsel %vm86, %v77, 0
    %111 = vmatprep.subr.mxu0 0.0
    %112 = vmatpush1.msra.mxu0 %v78
    %113 = vmatprep.subr.mxu0 0.0
    %114 = vmatpush1.msra.mxu0 %v79
    %115 = vmatprep.subr.mxu0 0.0
    %116 = vmatpush1.msra.mxu0 %v80
    %117 = vmatprep.subr.mxu0 0.0
    %118 = vmatpush1.msra.mxu0 %v81
    %119 = vmatprep.subr.mxu0 0.0
    %120 = vmatpush1.msra.mxu0 %v82
    %121 = vmatprep.subr.mxu0 0.0
    %122 = vmatpush1.msra.mxu0 %v83
    %123 = vmatprep.subr.mxu0 0.0
    %124 = vmatpush1.msra.mxu0 %v84
    %125 = vmatprep.subr.mxu0 0.0
    %126 = vmatpush1.msra.mxu0 %v85
    %127 = vmatprep.subr.mxu0 0.0
    %128 = vmatpush1.msra.mxu0 0.0
    %129 = vmatprep.subr.mxu0 0.0
    %130 = vmatpush1.msra.mxu0 0.0
    %131 = vmatprep.subr.mxu0 0.0
    %132 = vmatpush1.msra.mxu0 0.0
    %133 = vmatprep.subr.mxu0 0.0
    %134 = vmatpush1.msra.mxu0 0.0
    %135 = vmatprep.subr.mxu0 0.0
    %136 = vmatpush1.msra.mxu0 0.0
    %137 = vmatprep.subr.mxu0 0.0
    %138 = vmatpush1.msra.mxu0 0.0
    %139 = vmatprep.subr.mxu0 0.0
    %140 = vmatpush1.msra.mxu0 0.0
    %141 = vmatprep.subr.mxu0 0.0
    %142 = vmatpush1.msra.mxu0 0.0
    %143 = vmatprep.subr.mxu0 0.0
    %144 = vmatpush1.msra.mxu0 0.0
    %145 = vmatprep.subr.mxu0 0.0
    %146 = vmatpush1.msra.mxu0 0.0
    %147 = vmatprep.subr.mxu0 0.0
    %148 = vmatpush1.msra.mxu0 0.0
    %149 = vmatprep.subr.mxu0 0.0
    %150 = vmatpush1.msra.mxu0 0.0
    %151 = vmatprep.subr.mxu0 0.0
    %152 = vmatpush1.msra.mxu0 0.0
    %153 = vmatprep.subr.mxu0 0.0
    %154 = vmatpush1.msra.mxu0 0.0
    %155 = vmatprep.subr.mxu0 0.0
    %156 = vmatpush1.msra.mxu0 0.0
    %157 = vmatprep.subr.mxu0 0.0
    %158 = vmatpush1.msra.mxu0 0.0
    %159 = vmatprep.subr.mxu0 0.0
    %160 = vmatpush1.msra.mxu0 0.0
    %161 = vmatprep.subr.mxu0 0.0
    %162 = vmatpush1.msra.mxu0 0.0
    %163 = vmatprep.subr.mxu0 0.0
    %164 = vmatpush1.msra.mxu0 0.0
    %165 = vmatprep.subr.mxu0 0.0
    %166 = vmatpush1.msra.mxu0 0.0
    %167 = vmatprep.subr.mxu0 0.0
    %168 = vmatpush1.msra.mxu0 0.0
    %169 = vmatprep.subr.mxu0 0.0
    %170 = vmatpush1.msra.mxu0 0.0
    %171 = vmatprep.subr.mxu0 0.0
    %172 = vmatpush1.msra.mxu0 0.0
    %173 = vmatprep.subr.mxu0 0.0
    %174 = vmatpush1.msra.mxu0 0.0
    %175 = vmatprep.mubr.f32.mxu0 0.0
    %176 = vmatmul.mubr.f32.gmra.mrb[0].mxu0 %v88
    %v177 = vpop.f32.mrb[0].mxu0
    %v178 = vadd.f32 0.0, %v177
    %v179 = vpop.f32.mrb[0].mxu0
    %180 = vmatprep.mubr.f32.mxu0 0.0
    %181 = vmatmul.mubr.f32.gmra.mrb[0].mxu0 %v91
    %v182 = vpop.f32.mrb[0].mxu0
    %v183 = vadd.f32 0.0, %v182
    %v184 = vpop.f32.mrb[0].mxu0
    %185 = vmatprep.mubr.f32.mxu0 0.0
    %186 = vmatmul.mubr.f32.gmra.mrb[0].mxu0 %v94
    %v187 = vpop.f32.mrb[0].mxu0
    %v188 = vadd.f32 0.0, %v187
    %v189 = vpop.f32.mrb[0].mxu0
    %190 = vmatprep.mubr.f32.mxu0 0.0
    %191 = vmatmul.mubr.f32.gmra.mrb[0].mxu0 %v97
    %v192 = vpop.f32.mrb[0].mxu0
    %v193 = vadd.f32 0.0, %v192
    %v194 = vpop.f32.mrb[0].mxu0
    %195 = vmatprep.mubr.f32.mxu0 0.0
    %196 = vmatmul.mubr.f32.gmra.mrb[0].mxu0 %v100
    %v197 = vpop.f32.mrb[0].mxu0
    %v198 = vadd.f32 0.0, %v197
    %v199 = vpop.f32.mrb[0].mxu0
    %200 = vmatprep.mubr.f32.mxu0 0.0
    %201 = vmatmul.mubr.f32.gmra.mrb[0].mxu0 %v103
    %v202 = vpop.f32.mrb[0].mxu0
    %v203 = vadd.f32 0.0, %v202
    %v204 = vpop.f32.mrb[0].mxu0
    %205 = vmatprep.mubr.f32.mxu0 0.0
    %206 = vmatmul.mubr.f32.gmra.mrb[0].mxu0 %v106
    %v207 = vpop.f32.mrb[0].mxu0
    %v208 = vadd.f32 0.0, %v207
    %v209 = vpop.f32.mrb[0].mxu0
    %210 = vmatprep.mubr.f32.mxu0 0.0
    %211 = vmatmul.mubr.f32.gmra.mrb[0].mxu0 %v109
    %v212 = vpop.f32.mrb[0].mxu0
    %v213 = vadd.f32 0.0, %v212
    %v214 = vpop.f32.mrb[0].mxu0
    %215 = vdwg.mxu0
    %v216 = vld [vmem:[%s3] sm:$0xff]
    %v217 = vld [vmem:[%s3 + $0x8] sm:$0xff]
    %v218 = vld [vmem:[%s3 + $0x10] sm:$0xff]
    %v219 = vld [vmem:[%s3 + $0x18] sm:$0xff]
    %vm220 = vcmask 261120
    %v222 = vsel %vm220, %v178, 0
    %v225 = vsel %vm220, %v183, 0
    %v228 = vsel %vm220, %v188, 0
    %v231 = vsel %vm220, %v193, 0
    %v234 = vsel %vm220, %v198, 0
    %v237 = vsel %vm220, %v203, 0
    %v240 = vsel %vm220, %v208, 0
    %v243 = vsel %vm220, %v213, 0
    %245 = vmatprep.subr.mxu0 0.0
    %246 = vmatpush1.msra.mxu0 %v216
    %247 = vmatprep.subr.mxu0 0.0
    %248 = vmatpush1.msra.mxu0 %v217
    %249 = vmatprep.subr.mxu0 0.0
    %250 = vmatpush1.msra.mxu0 %v218
    %251 = vmatprep.subr.mxu0 0.0
    %252 = vmatpush1.msra.mxu0 %v219
    %253 = vmatprep.subr.mxu0 0.0
    %254 = vmatpush1.msra.mxu0 0.0
    %255 = vmatprep.subr.mxu0 0.0
    %256 = vmatpush1.msra.mxu0 0.0
    %257 = vmatprep.subr.mxu0 0.0
    %258 = vmatpush1.msra.mxu0 0.0
    %259 = vmatprep.subr.mxu0 0.0
    %260 = vmatpush1.msra.mxu0 0.0
    %261 = vmatprep.subr.mxu0 0.0
    %262 = vmatpush1.msra.mxu0 0.0
    %263 = vmatprep.subr.mxu0 0.0
    %264 = vmatpush1.msra.mxu0 0.0
    %265 = vmatprep.subr.mxu0 0.0
    %266 = vmatpush1.msra.mxu0 0.0
    %267 = vmatprep.subr.mxu0 0.0
    %268 = vmatpush1.msra.mxu0 0.0
    %269 = vmatprep.subr.mxu0 0.0
    %270 = vmatpush1.msra.mxu0 0.0
    %271 = vmatprep.subr.mxu0 0.0
    %272 = vmatpush1.msra.mxu0 0.0
    %273 = vmatprep.subr.mxu0 0.0
    %274 = vmatpush1.msra.mxu0 0.0
    %275 = vmatprep.subr.mxu0 0.0
    %276 = vmatpush1.msra.mxu0 0.0
    %277 = vmatprep.subr.mxu0 0.0
    %278 = vmatpush1.msra.mxu0 0.0
    %279 = vmatprep.subr.mxu0 0.0
    %280 = vmatpush1.msra.mxu0 0.0
    %281 = vmatprep.subr.mxu0 0.0
    %282 = vmatpush1.msra.mxu0 0.0
    %283 = vmatprep.subr.mxu0 0.0
    %284 = vmatpush1.msra.mxu0 0.0
    %285 = vmatprep.subr.mxu0 0.0
    %286 = vmatpush1.msra.mxu0 0.0
    %287 = vmatprep.subr.mxu0 0.0
    %288 = vmatpush1.msra.mxu0 0.0
    %289 = vmatprep.subr.mxu0 0.0
    %290 = vmatpush1.msra.mxu0 0.0
    %291 = vmatprep.subr.mxu0 0.0
    %292 = vmatpush1.msra.mxu0 0.0
    %293 = vmatprep.subr.mxu0 0.0
    %294 = vmatpush1.msra.mxu0 0.0
    %295 = vmatprep.subr.mxu0 0.0
    %296 = vmatpush1.msra.mxu0 0.0
    %297 = vmatprep.subr.mxu0 0.0
    %298 = vmatpush1.msra.mxu0 0.0
    %299 = vmatprep.subr.mxu0 0.0
    %300 = vmatpush1.msra.mxu0 0.0
    %301 = vmatprep.subr.mxu0 0.0
    %302 = vmatpush1.msra.mxu0 0.0
    %303 = vmatprep.subr.mxu0 0.0
    %304 = vmatpush1.msra.mxu0 0.0
    %305 = vmatprep.subr.mxu0 0.0
    %306 = vmatpush1.msra.mxu0 0.0
    %307 = vmatprep.subr.mxu0 0.0
    %308 = vmatpush1.msra.mxu0 0.0
    %309 = vmatprep.mubr.f32.mxu0 0.0
    %310 = vmatmul.mubr.f32.gmra.mrb[0].mxu0 %v222
    %v311 = vpop.f32.mrb[0].mxu0
    %v312 = vadd.f32 0.0, %v311
    %v313 = vpop.f32.mrb[0].mxu0
    %314 = vmatprep.mubr.f32.mxu0 0.0
    %315 = vmatmul.mubr.f32.gmra.mrb[0].mxu0 %v225
    %v316 = vpop.f32.mrb[0].mxu0
    %v317 = vadd.f32 0.0, %v316
    %v318 = vpop.f32.mrb[0].mxu0
    %319 = vmatprep.mubr.f32.mxu0 0.0
    %320 = vmatmul.mubr.f32.gmra.mrb[0].mxu0 %v228
    %v321 = vpop.f32.mrb[0].mxu0
    %v322 = vadd.f32 0.0, %v321
    %v323 = vpop.f32.mrb[0].mxu0
    %324 = vmatprep.mubr.f32.mxu0 0.0
    %325 = vmatmul.mubr.f32.gmra.mrb[0].mxu0 %v231
    %v326 = vpop.f32.mrb[0].mxu0
    %v327 = vadd.f32 0.0, %v326
    %v328 = vpop.f32.mrb[0].mxu0
    %329 = vmatprep.mubr.f32.mxu0 0.0
    %330 = vmatmul.mubr.f32.gmra.mrb[0].mxu0 %v234
    %v331 = vpop.f32.mrb[0].mxu0
    %v332 = vadd.f32 0.0, %v331
    %v333 = vpop.f32.mrb[0].mxu0
    %334 = vmatprep.mubr.f32.mxu0 0.0
    %335 = vmatmul.mubr.f32.gmra.mrb[0].mxu0 %v237
    %v336 = vpop.f32.mrb[0].mxu0
    %v337 = vadd.f32 0.0, %v336
    %v338 = vpop.f32.mrb[0].mxu0
    %339 = vmatprep.mubr.f32.mxu0 0.0
    %340 = vmatmul.mubr.f32.gmra.mrb[0].mxu0 %v240
    %v341 = vpop.f32.mrb[0].mxu0
    %v342 = vadd.f32 0.0, %v341
    %v343 = vpop.f32.mrb[0].mxu0
    %344 = vmatprep.mubr.f32.mxu0 0.0
    %345 = vmatmul.mubr.f32.gmra.mrb[0].mxu0 %v243
    %v346 = vpop.f32.mrb[0].mxu0
    %v347 = vadd.f32 0.0, %v346
    %v348 = vpop.f32.mrb[0].mxu0
    %349 = vdwg.mxu0
    %354 = vrot.lane.b32.xlu0 %v216, 124
    %v355 = vpop.permute.xlu0 %354
    %356 = vrot.lane.b32.xlu0 %v217, 124
    %v357 = vpop.permute.xlu0 %356
    %358 = vrot.lane.b32.xlu0 %v218, 124
    %v359 = vpop.permute.xlu0 %358
    %360 = vrot.lane.b32.xlu0 %v219, 124
    %v361 = vpop.permute.xlu0 %360
    %366 = vxpose.xlu0.b32.start [1/16] %v355, 128
    %367 = vxpose.xlu0.b32.cont [2/16] %v357, 128
    %368 = vxpose.xlu0.b32.cont [3/16] %v359, 128
    %369 = vxpose.xlu0.b32.cont [4/16] %v361, 128
    %370 = vxpose.xlu0.b32.cont [5/16] 0.0, 128
    %371 = vxpose.xlu0.b32.cont [6/16] 0.0, 128
    %372 = vxpose.xlu0.b32.cont [7/16] 0.0, 128
    %373 = vxpose.xlu0.b32.cont [8/16] 0.0, 128
    %374 = vxpose.xlu0.b32.cont [9/16] 0.0, 128
    %375 = vxpose.xlu0.b32.cont [10/16] 0.0, 128
    %376 = vxpose.xlu0.b32.cont [11/16] 0.0, 128
    %377 = vxpose.xlu0.b32.cont [12/16] 0.0, 128
    %378 = vxpose.xlu0.b32.cont [13/16] 0.0, 128
    %379 = vxpose.xlu0.b32.cont [14/16] 0.0, 128
    %380 = vxpose.xlu0.b32.cont [15/16] 0.0, 128
    %381 = vxpose.xlu0.b32.end [16/16] 0.0, 128
    %v382 = vpop.trf.xlu0
    %v383 = vpop.trf.xlu0
    %v384 = vpop.trf.xlu0
    %v385 = vpop.trf.xlu0
    %v386 = vpop.trf.xlu0
    %v387 = vpop.trf.xlu0
    %v388 = vpop.trf.xlu0
    %v389 = vpop.trf.xlu0
    %v390 = vpop.trf.xlu0
    %v391 = vpop.trf.xlu0
    %v392 = vpop.trf.xlu0
    %v393 = vpop.trf.xlu0
    %v394 = vpop.trf.xlu0
    %v395 = vpop.trf.xlu0
    %v396 = vpop.trf.xlu0
    %v397 = vpop.trf.xlu0
    %v399 = vsel %vm220, %v382, 0
    %401 = vmatprep.subr.mxu0 0.0
    %402 = vmatpush1.xpose.msra.mxu0 %v222
    %403 = vmatprep.subr.mxu0 0.0
    %404 = vmatpush1.xpose.msra.mxu0 %v225
    %405 = vmatprep.subr.mxu0 0.0
    %406 = vmatpush1.xpose.msra.mxu0 %v228
    %407 = vmatprep.subr.mxu0 0.0
    %408 = vmatpush1.xpose.msra.mxu0 %v231
    %409 = vmatprep.subr.mxu0 0.0
    %410 = vmatpush1.xpose.msra.mxu0 %v234
    %411 = vmatprep.subr.mxu0 0.0
    %412 = vmatpush1.xpose.msra.mxu0 %v237
    %413 = vmatprep.subr.mxu0 0.0
    %414 = vmatpush1.xpose.msra.mxu0 %v240
    %415 = vmatprep.subr.mxu0 0.0
    %416 = vmatpush1.xpose.msra.mxu0 %v243
    %417 = vmatprep.subr.mxu0 0.0
    %418 = vmatpush1.xpose.msra.mxu0 0.0
    %419 = vmatprep.subr.mxu0 0.0
    %420 = vmatpush1.xpose.msra.mxu0 0.0
    %421 = vmatprep.subr.mxu0 0.0
    %422 = vmatpush1.xpose.msra.mxu0 0.0
    %423 = vmatprep.subr.mxu0 0.0
    %424 = vmatpush1.xpose.msra.mxu0 0.0
    %425 = vmatprep.subr.mxu0 0.0
    %426 = vmatpush1.xpose.msra.mxu0 0.0
    %427 = vmatprep.subr.mxu0 0.0
    %428 = vmatpush1.xpose.msra.mxu0 0.0
    %429 = vmatprep.subr.mxu0 0.0
    %430 = vmatpush1.xpose.msra.mxu0 0.0
    %431 = vmatprep.subr.mxu0 0.0
    %432 = vmatpush1.xpose.msra.mxu0 0.0
    %433 = vmatprep.subr.mxu0 0.0
    %434 = vmatpush1.xpose.msra.mxu0 0.0
    %435 = vmatprep.subr.mxu0 0.0
    %436 = vmatpush1.xpose.msra.mxu0 0.0
    %437 = vmatprep.subr.mxu0 0.0
    %438 = vmatpush1.xpose.msra.mxu0 0.0
    %439 = vmatprep.subr.mxu0 0.0
    %440 = vmatpush1.xpose.msra.mxu0 0.0
    %441 = vmatprep.subr.mxu0 0.0
    %442 = vmatpush1.xpose.msra.mxu0 0.0
    %443 = vmatprep.subr.mxu0 0.0
    %444 = vmatpush1.xpose.msra.mxu0 0.0
    %445 = vmatprep.subr.mxu0 0.0
    %446 = vmatpush1.xpose.msra.mxu0 0.0
    %447 = vmatprep.subr.mxu0 0.0
    %448 = vmatpush1.xpose.msra.mxu0 0.0
    %449 = vmatprep.subr.mxu0 0.0
    %450 = vmatpush1.xpose.msra.mxu0 0.0
    %451 = vmatprep.subr.mxu0 0.0
    %452 = vmatpush1.xpose.msra.mxu0 0.0
    %453 = vmatprep.subr.mxu0 0.0
    %454 = vmatpush1.xpose.msra.mxu0 0.0
    %455 = vmatprep.subr.mxu0 0.0
    %456 = vmatpush1.xpose.msra.mxu0 0.0
    %457 = vmatprep.subr.mxu0 0.0
    %458 = vmatpush1.xpose.msra.mxu0 0.0
    %459 = vmatprep.subr.mxu0 0.0
    %460 = vmatpush1.xpose.msra.mxu0 0.0
    %461 = vmatprep.subr.mxu0 0.0
    %462 = vmatpush1.xpose.msra.mxu0 0.0
    %463 = vmatprep.subr.mxu0 0.0
    %464 = vmatpush1.xpose.msra.mxu0 0.0
    %465 = vmatprep.mubr.f32.mxu0 0.0
    %466 = vmatmul.mubr.f32.gmra.mrb[0].mxu0 %v399
    %v467 = vpop.f32.mrb[0].mxu0
    %v468 = vadd.f32 0.0, %v467
    %v469 = vpop.f32.mrb[0].mxu0
    %470 = vdwg.mxu0
    %v471 = vld [vmem:[%s4] sm:$0x1]
    %v472 = vld [vmem:[%s6] sm:$0x1]
    %v473 = vld [vmem:[%s6 + $0x1] sm:$0x1]
    %v474 = vld [vmem:[%s5] sm:$0xff]
    %v475 = vld [vmem:[%s5 + $0x8] sm:$0xff]
    %v476 = vld [vmem:[%s5 + $0x10] sm:$0xff]
    %v477 = vld [vmem:[%s5 + $0x18] sm:$0xff]
    %v478 = vld [vmem:[%s1] sm:$0xff]
    %v479 = vld [vmem:[%s1 + $0x8] sm:$0xff]
    %v480 = vld [vmem:[%s1 + $0x10] sm:$0xff]
    %v481 = vld [vmem:[%s1 + $0x18] sm:$0xff]
    %v482 = vld [vmem:[%s1 + $0x20] sm:$0xff]
    %v483 = vld [vmem:[%s1 + $0x28] sm:$0xff]
    %v484 = vld [vmem:[%s1 + $0x30] sm:$0xff]
    %v485 = vld [vmem:[%s1 + $0x38] sm:$0xff]
    %487 = vset.pattern.permute.xlu0 0
    %488 = vperm.xlu0 %487, %v312
    %v489 = vpop.permute.xlu0 %488
    %492 = vset.pattern.permute.xlu0 0
    %493 = vperm.xlu0 %492, %v317
    %v494 = vpop.permute.xlu0 %493
    %497 = vset.pattern.permute.xlu0 0
    %498 = vperm.xlu0 %497, %v322
    %v499 = vpop.permute.xlu0 %498
    %502 = vset.pattern.permute.xlu0 0
    %503 = vperm.xlu0 %502, %v327
    %v504 = vpop.permute.xlu0 %503
    %507 = vset.pattern.permute.xlu0 0
    %508 = vperm.xlu0 %507, %v332
    %v509 = vpop.permute.xlu0 %508
    %512 = vset.pattern.permute.xlu0 0
    %513 = vperm.xlu0 %512, %v337
    %v514 = vpop.permute.xlu0 %513
    %517 = vset.pattern.permute.xlu0 0
    %518 = vperm.xlu0 %517, %v342
    %v519 = vpop.permute.xlu0 %518
    %522 = vset.pattern.permute.xlu0 0
    %523 = vperm.xlu0 %522, %v347
    %v524 = vpop.permute.xlu0 %523
    %v526 = vlaneseq
    %v527 = vshrl.u32 %v526, 7
    %v528 = vsub.s32 0, %v527
    %v529 = vrot.slane %v468, %v528
    %v530 = vadd.f32 %v489, %v529
    %v531 = vadd.f32 %v494, %v529
    %v532 = vadd.f32 %v499, %v529
    %v533 = vadd.f32 %v504, %v529
    %v534 = vadd.f32 %v509, %v529
    %v535 = vadd.f32 %v514, %v529
    %v536 = vadd.f32 %v519, %v529
    %v537 = vadd.f32 %v524, %v529
    %vm538 = vcmp.gt.f32.partialorder %v530, 0.0
    %vm539 = vcmp.gt.f32.partialorder %v531, 0.0
    %vm540 = vcmp.gt.f32.partialorder %v532, 0.0
    %vm541 = vcmp.gt.f32.partialorder %v533, 0.0
    %vm542 = vcmp.gt.f32.partialorder %v534, 0.0
    %vm543 = vcmp.gt.f32.partialorder %v535, 0.0
    %vm544 = vcmp.gt.f32.partialorder %v536, 0.0
    %vm545 = vcmp.gt.f32.partialorder %v537, 0.0
    %v546 = vmul.f32 %v530, 0.2
    %v547 = vmul.f32 %v531, 0.2
    %v548 = vmul.f32 %v532, 0.2
    %v549 = vmul.f32 %v533, 0.2
    %v550 = vmul.f32 %v534, 0.2
    %v551 = vmul.f32 %v535, 0.2
    %v552 = vmul.f32 %v536, 0.2
    %v553 = vmul.f32 %v537, 0.2
    %v554 = vsel %vm538, %v530, %v546
    %v555 = vsel %vm539, %v531, %v547
    %v556 = vsel %vm540, %v532, %v548
    %v557 = vsel %vm541, %v533, %v549
    %v558 = vsel %vm542, %v534, %v550
    %v559 = vsel %vm543, %v535, %v551
    %v560 = vsel %vm544, %v536, %v552
    %v561 = vsel %vm545, %v537, %v553
    %v562 = vadd.f32 %v554, %v478
    %v563 = vadd.f32 %v555, %v479
    %v564 = vadd.f32 %v556, %v480
    %v565 = vadd.f32 %v557, %v481
    %v566 = vadd.f32 %v558, %v482
    %v567 = vadd.f32 %v559, %v483
    %v568 = vadd.f32 %v560, %v484
    %v569 = vadd.f32 %v561, %v485
    %v570 = vsel %vm86, %v562, -inf
    %571 = vmax.xlane.f32.xlu0 %v570
    %v572 = vpop.xlane.xlu0 %571
    %v573 = vsel %vm86, %v563, -inf
    %574 = vmax.xlane.f32.xlu0 %v573
    %v575 = vpop.xlane.xlu0 %574
    %v576 = vsel %vm86, %v564, -inf
    %577 = vmax.xlane.f32.xlu0 %v576
    %v578 = vpop.xlane.xlu0 %577
    %v579 = vsel %vm86, %v565, -inf
    %580 = vmax.xlane.f32.xlu0 %v579
    %v581 = vpop.xlane.xlu0 %580
    %v582 = vsel %vm86, %v566, -inf
    %583 = vmax.xlane.f32.xlu0 %v582
    %v584 = vpop.xlane.xlu0 %583
    %v585 = vsel %vm86, %v567, -inf
    %586 = vmax.xlane.f32.xlu0 %v585
    %v587 = vpop.xlane.xlu0 %586
    %v588 = vsel %vm86, %v568, -inf
    %589 = vmax.xlane.f32.xlu0 %v588
    %v590 = vpop.xlane.xlu0 %589
    %v591 = vsel %vm86, %v569, -inf
    %592 = vmax.xlane.f32.xlu0 %v591
    %v593 = vpop.xlane.xlu0 %592
    %v594 = vsub.f32 %v562, %v572
    %v595 = vsub.f32 %v563, %v575
    %v596 = vsub.f32 %v564, %v578
    %v597 = vsub.f32 %v565, %v581
    %v598 = vsub.f32 %v566, %v584
    %v599 = vsub.f32 %v567, %v587
    %v600 = vsub.f32 %v568, %v590
    %v601 = vsub.f32 %v569, %v593
    %v602 = vmul.f32 %v594, 1.442695
    %v603 = vpow.pop %v602
    %v604 = vmul.f32 %v595, 1.442695
    %v605 = vpow.pop %v604
    %v606 = vmul.f32 %v596, 1.442695
    %v607 = vpow.pop %v606
    %v608 = vmul.f32 %v597, 1.442695
    %v609 = vpow.pop %v608
    %v610 = vmul.f32 %v598, 1.442695
    %v611 = vpow.pop %v610
    %v612 = vmul.f32 %v599, 1.442695
    %v613 = vpow.pop %v612
    %v614 = vmul.f32 %v600, 1.442695
    %v615 = vpow.pop %v614
    %v616 = vmul.f32 %v601, 1.442695
    %v617 = vpow.pop %v616
    %v618 = vsel %vm86, %v603, 0.0
    %619 = vadd.xlane.f32.xlu0 %v618
    %v620 = vpop.xlane.xlu0 %619
    %v621 = vsel %vm86, %v605, 0.0
    %622 = vadd.xlane.f32.xlu0 %v621
    %v623 = vpop.xlane.xlu0 %622
    %v624 = vsel %vm86, %v607, 0.0
    %625 = vadd.xlane.f32.xlu0 %v624
    %v626 = vpop.xlane.xlu0 %625
    %v627 = vsel %vm86, %v609, 0.0
    %628 = vadd.xlane.f32.xlu0 %v627
    %v629 = vpop.xlane.xlu0 %628
    %v630 = vsel %vm86, %v611, 0.0
    %631 = vadd.xlane.f32.xlu0 %v630
    %v632 = vpop.xlane.xlu0 %631
    %v633 = vsel %vm86, %v613, 0.0
    %634 = vadd.xlane.f32.xlu0 %v633
    %v635 = vpop.xlane.xlu0 %634
    %v636 = vsel %vm86, %v615, 0.0
    %637 = vadd.xlane.f32.xlu0 %v636
    %v638 = vpop.xlane.xlu0 %637
    %v639 = vsel %vm86, %v617, 0.0
    %640 = vadd.xlane.f32.xlu0 %v639
    %v641 = vpop.xlane.xlu0 %640
    %v642 = vrcp.pop %v620
    %v643 = vrcp.pop %v623
    %v644 = vrcp.pop %v626
    %v645 = vrcp.pop %v629
    %v646 = vrcp.pop %v632
    %v647 = vrcp.pop %v635
    %v648 = vrcp.pop %v638
    %v649 = vrcp.pop %v641
    %v650 = vmul.f32 %v603, %v642
    %v651 = vmul.f32 %v605, %v643
    %v652 = vmul.f32 %v607, %v644
    %v653 = vmul.f32 %v609, %v645
    %v654 = vmul.f32 %v611, %v646
    %v655 = vmul.f32 %v613, %v647
    %v656 = vmul.f32 %v615, %v648
    %v657 = vmul.f32 %v617, %v649
    %v659 = vsel %vm86, %v650, 0
    %v662 = vsel %vm86, %v651, 0
    %v665 = vsel %vm86, %v652, 0
    %v668 = vsel %vm86, %v653, 0
    %v671 = vsel %vm86, %v654, 0
    %v674 = vsel %vm86, %v655, 0
    %v677 = vsel %vm86, %v656, 0
    %v680 = vsel %vm86, %v657, 0
    %682 = vmatprep.subr.mxu0 0.0
    %683 = vmatpush1.msra.mxu0 %v178
    %684 = vmatprep.subr.mxu0 0.0
    %685 = vmatpush1.msra.mxu0 %v183
    %686 = vmatprep.subr.mxu0 0.0
    %687 = vmatpush1.msra.mxu0 %v188
    %688 = vmatprep.subr.mxu0 0.0
    %689 = vmatpush1.msra.mxu0 %v193
    %690 = vmatprep.subr.mxu0 0.0
    %691 = vmatpush1.msra.mxu0 %v198
    %692 = vmatprep.subr.mxu0 0.0
    %693 = vmatpush1.msra.mxu0 %v203
    %694 = vmatprep.subr.mxu0 0.0
    %695 = vmatpush1.msra.mxu0 %v208
    %696 = vmatprep.subr.mxu0 0.0
    %697 = vmatpush1.msra.mxu0 %v213
    %698 = vmatprep.subr.mxu0 0.0
    %699 = vmatpush1.msra.mxu0 0.0
    %700 = vmatprep.subr.mxu0 0.0
    %701 = vmatpush1.msra.mxu0 0.0
    %702 = vmatprep.subr.mxu0 0.0
    %703 = vmatpush1.msra.mxu0 0.0
    %704 = vmatprep.subr.mxu0 0.0
    %705 = vmatpush1.msra.mxu0 0.0
    %706 = vmatprep.subr.mxu0 0.0
    %707 = vmatpush1.msra.mxu0 0.0
    %708 = vmatprep.subr.mxu0 0.0
    %709 = vmatpush1.msra.mxu0 0.0
    %710 = vmatprep.subr.mxu0 0.0
    %711 = vmatpush1.msra.mxu0 0.0
    %712 = vmatprep.subr.mxu0 0.0
    %713 = vmatpush1.msra.mxu0 0.0
    %714 = vmatprep.subr.mxu0 0.0
    %715 = vmatpush1.msra.mxu0 0.0
    %716 = vmatprep.subr.mxu0 0.0
    %717 = vmatpush1.msra.mxu0 0.0
    %718 = vmatprep.subr.mxu0 0.0
    %719 = vmatpush1.msra.mxu0 0.0
    %720 = vmatprep.subr.mxu0 0.0
    %721 = vmatpush1.msra.mxu0 0.0
    %722 = vmatprep.subr.mxu0 0.0
    %723 = vmatpush1.msra.mxu0 0.0
    %724 = vmatprep.subr.mxu0 0.0
    %725 = vmatpush1.msra.mxu0 0.0
    %726 = vmatprep.subr.mxu0 0.0
    %727 = vmatpush1.msra.mxu0 0.0
    %728 = vmatprep.subr.mxu0 0.0
    %729 = vmatpush1.msra.mxu0 0.0
    %730 = vmatprep.subr.mxu0 0.0
    %731 = vmatpush1.msra.mxu0 0.0
    %732 = vmatprep.subr.mxu0 0.0
    %733 = vmatpush1.msra.mxu0 0.0
    %734 = vmatprep.subr.mxu0 0.0
    %735 = vmatpush1.msra.mxu0 0.0
    %736 = vmatprep.subr.mxu0 0.0
    %737 = vmatpush1.msra.mxu0 0.0
    %738 = vmatprep.subr.mxu0 0.0
    %739 = vmatpush1.msra.mxu0 0.0
    %740 = vmatprep.subr.mxu0 0.0
    %741 = vmatpush1.msra.mxu0 0.0
    %742 = vmatprep.subr.mxu0 0.0
    %743 = vmatpush1.msra.mxu0 0.0
    %744 = vmatprep.subr.mxu0 0.0
    %745 = vmatpush1.msra.mxu0 0.0
    %746 = vmatprep.mubr.f32.mxu0 0.0
    %747 = vmatmul.mubr.f32.gmra.mrb[0].mxu0 %v659
    %v748 = vpop.f32.mrb[0].mxu0
    %v749 = vadd.f32 0.0, %v748
    %v750 = vpop.f32.mrb[0].mxu0
    %751 = vmatprep.mubr.f32.mxu0 0.0
    %752 = vmatmul.mubr.f32.gmra.mrb[0].mxu0 %v662
    %v753 = vpop.f32.mrb[0].mxu0
    %v754 = vadd.f32 0.0, %v753
    %v755 = vpop.f32.mrb[0].mxu0
    %756 = vmatprep.mubr.f32.mxu0 0.0
    %757 = vmatmul.mubr.f32.gmra.mrb[0].mxu0 %v665
    %v758 = vpop.f32.mrb[0].mxu0
    %v759 = vadd.f32 0.0, %v758
    %v760 = vpop.f32.mrb[0].mxu0
    %761 = vmatprep.mubr.f32.mxu0 0.0
    %762 = vmatmul.mubr.f32.gmra.mrb[0].mxu0 %v668
    %v763 = vpop.f32.mrb[0].mxu0
    %v764 = vadd.f32 0.0, %v763
    %v765 = vpop.f32.mrb[0].mxu0
    %766 = vmatprep.mubr.f32.mxu0 0.0
    %767 = vmatmul.mubr.f32.gmra.mrb[0].mxu0 %v671
    %v768 = vpop.f32.mrb[0].mxu0
    %v769 = vadd.f32 0.0, %v768
    %v770 = vpop.f32.mrb[0].mxu0
    %771 = vmatprep.mubr.f32.mxu0 0.0
    %772 = vmatmul.mubr.f32.gmra.mrb[0].mxu0 %v674
    %v773 = vpop.f32.mrb[0].mxu0
    %v774 = vadd.f32 0.0, %v773
    %v775 = vpop.f32.mrb[0].mxu0
    %776 = vmatprep.mubr.f32.mxu0 0.0
    %777 = vmatmul.mubr.f32.gmra.mrb[0].mxu0 %v677
    %v778 = vpop.f32.mrb[0].mxu0
    %v779 = vadd.f32 0.0, %v778
    %v780 = vpop.f32.mrb[0].mxu0
    %781 = vmatprep.mubr.f32.mxu0 0.0
    %782 = vmatmul.mubr.f32.gmra.mrb[0].mxu0 %v680
    %v783 = vpop.f32.mrb[0].mxu0
    %v784 = vadd.f32 0.0, %v783
    %v785 = vpop.f32.mrb[0].mxu0
    %786 = vdwg.mxu0
    %787 = vset.pattern.permute.xlu0 1
    %788 = vperm.xlu0 %787, %v312
    %v789 = vpop.permute.xlu0 %788
    %791 = vset.pattern.permute.xlu0 1
    %792 = vperm.xlu0 %791, %v317
    %v793 = vpop.permute.xlu0 %792
    %795 = vset.pattern.permute.xlu0 1
    %796 = vperm.xlu0 %795, %v322
    %v797 = vpop.permute.xlu0 %796
    %799 = vset.pattern.permute.xlu0 1
    %800 = vperm.xlu0 %799, %v327
    %v801 = vpop.permute.xlu0 %800
    %803 = vset.pattern.permute.xlu0 1
    %804 = vperm.xlu0 %803, %v332
    %v805 = vpop.permute.xlu0 %804
    %807 = vset.pattern.permute.xlu0 1
    %808 = vperm.xlu0 %807, %v337
    %v809 = vpop.permute.xlu0 %808
    %811 = vset.pattern.permute.xlu0 1
    %812 = vperm.xlu0 %811, %v342
    %v813 = vpop.permute.xlu0 %812
    %815 = vset.pattern.permute.xlu0 1
    %816 = vperm.xlu0 %815, %v347
    %v817 = vpop.permute.xlu0 %816
    %v819 = vlaneseq
    %v820 = vshrl.u32 %v819, 7
    %v821 = vsub.s32 1, %v820
    %v822 = vrot.slane %v468, %v821
    %v823 = vadd.f32 %v789, %v822
    %v824 = vadd.f32 %v793, %v822
    %v825 = vadd.f32 %v797, %v822
    %v826 = vadd.f32 %v801, %v822
    %v827 = vadd.f32 %v805, %v822
    %v828 = vadd.f32 %v809, %v822
    %v829 = vadd.f32 %v813, %v822
    %v830 = vadd.f32 %v817, %v822
    %vm831 = vcmp.gt.f32.partialorder %v823, 0.0
    %vm832 = vcmp.gt.f32.partialorder %v824, 0.0
    %vm833 = vcmp.gt.f32.partialorder %v825, 0.0
    %vm834 = vcmp.gt.f32.partialorder %v826, 0.0
    %vm835 = vcmp.gt.f32.partialorder %v827, 0.0
    %vm836 = vcmp.gt.f32.partialorder %v828, 0.0
    %vm837 = vcmp.gt.f32.partialorder %v829, 0.0
    %vm838 = vcmp.gt.f32.partialorder %v830, 0.0
    %v839 = vmul.f32 %v823, 0.2
    %v840 = vmul.f32 %v824, 0.2
    %v841 = vmul.f32 %v825, 0.2
    %v842 = vmul.f32 %v826, 0.2
    %v843 = vmul.f32 %v827, 0.2
    %v844 = vmul.f32 %v828, 0.2
    %v845 = vmul.f32 %v829, 0.2
    %v846 = vmul.f32 %v830, 0.2
    %v847 = vsel %vm831, %v823, %v839
    %v848 = vsel %vm832, %v824, %v840
    %v849 = vsel %vm833, %v825, %v841
    %v850 = vsel %vm834, %v826, %v842
    %v851 = vsel %vm835, %v827, %v843
    %v852 = vsel %vm836, %v828, %v844
    %v853 = vsel %vm837, %v829, %v845
    %v854 = vsel %vm838, %v830, %v846
    %v855 = vadd.f32 %v847, %v478
    %v856 = vadd.f32 %v848, %v479
    %v857 = vadd.f32 %v849, %v480
    %v858 = vadd.f32 %v850, %v481
    %v859 = vadd.f32 %v851, %v482
    %v860 = vadd.f32 %v852, %v483
    %v861 = vadd.f32 %v853, %v484
    %v862 = vadd.f32 %v854, %v485
    %v863 = vsel %vm86, %v855, -inf
    %864 = vmax.xlane.f32.xlu0 %v863
    %v865 = vpop.xlane.xlu0 %864
    %v866 = vsel %vm86, %v856, -inf
    %867 = vmax.xlane.f32.xlu0 %v866
    %v868 = vpop.xlane.xlu0 %867
    %v869 = vsel %vm86, %v857, -inf
    %870 = vmax.xlane.f32.xlu0 %v869
    %v871 = vpop.xlane.xlu0 %870
    %v872 = vsel %vm86, %v858, -inf
    %873 = vmax.xlane.f32.xlu0 %v872
    %v874 = vpop.xlane.xlu0 %873
    %v875 = vsel %vm86, %v859, -inf
    %876 = vmax.xlane.f32.xlu0 %v875
    %v877 = vpop.xlane.xlu0 %876
    %v878 = vsel %vm86, %v860, -inf
    %879 = vmax.xlane.f32.xlu0 %v878
    %v880 = vpop.xlane.xlu0 %879
    %v881 = vsel %vm86, %v861, -inf
    %882 = vmax.xlane.f32.xlu0 %v881
    %v883 = vpop.xlane.xlu0 %882
    %v884 = vsel %vm86, %v862, -inf
    %885 = vmax.xlane.f32.xlu0 %v884
    %v886 = vpop.xlane.xlu0 %885
    %v887 = vsub.f32 %v855, %v865
    %v888 = vsub.f32 %v856, %v868
    %v889 = vsub.f32 %v857, %v871
    %v890 = vsub.f32 %v858, %v874
    %v891 = vsub.f32 %v859, %v877
    %v892 = vsub.f32 %v860, %v880
    %v893 = vsub.f32 %v861, %v883
    %v894 = vsub.f32 %v862, %v886
    %v895 = vmul.f32 %v887, 1.442695
    %v896 = vpow.pop %v895
    %v897 = vmul.f32 %v888, 1.442695
    %v898 = vpow.pop %v897
    %v899 = vmul.f32 %v889, 1.442695
    %v900 = vpow.pop %v899
    %v901 = vmul.f32 %v890, 1.442695
    %v902 = vpow.pop %v901
    %v903 = vmul.f32 %v891, 1.442695
    %v904 = vpow.pop %v903
    %v905 = vmul.f32 %v892, 1.442695
    %v906 = vpow.pop %v905
    %v907 = vmul.f32 %v893, 1.442695
    %v908 = vpow.pop %v907
    %v909 = vmul.f32 %v894, 1.442695
    %v910 = vpow.pop %v909
    %v911 = vsel %vm86, %v896, 0.0
    %912 = vadd.xlane.f32.xlu0 %v911
    %v913 = vpop.xlane.xlu0 %912
    %v914 = vsel %vm86, %v898, 0.0
    %915 = vadd.xlane.f32.xlu0 %v914
    %v916 = vpop.xlane.xlu0 %915
    %v917 = vsel %vm86, %v900, 0.0
    %918 = vadd.xlane.f32.xlu0 %v917
    %v919 = vpop.xlane.xlu0 %918
    %v920 = vsel %vm86, %v902, 0.0
    %921 = vadd.xlane.f32.xlu0 %v920
    %v922 = vpop.xlane.xlu0 %921
    %v923 = vsel %vm86, %v904, 0.0
    %924 = vadd.xlane.f32.xlu0 %v923
    %v925 = vpop.xlane.xlu0 %924
    %v926 = vsel %vm86, %v906, 0.0
    %927 = vadd.xlane.f32.xlu0 %v926
    %v928 = vpop.xlane.xlu0 %927
    %v929 = vsel %vm86, %v908, 0.0
    %930 = vadd.xlane.f32.xlu0 %v929
    %v931 = vpop.xlane.xlu0 %930
    %v932 = vsel %vm86, %v910, 0.0
    %933 = vadd.xlane.f32.xlu0 %v932
    %v934 = vpop.xlane.xlu0 %933
    %v935 = vrcp.pop %v913
    %v936 = vrcp.pop %v916
    %v937 = vrcp.pop %v919
    %v938 = vrcp.pop %v922
    %v939 = vrcp.pop %v925
    %v940 = vrcp.pop %v928
    %v941 = vrcp.pop %v931
    %v942 = vrcp.pop %v934
    %v943 = vmul.f32 %v896, %v935
    %v944 = vmul.f32 %v898, %v936
    %v945 = vmul.f32 %v900, %v937
    %v946 = vmul.f32 %v902, %v938
    %v947 = vmul.f32 %v904, %v939
    %v948 = vmul.f32 %v906, %v940
    %v949 = vmul.f32 %v908, %v941
    %v950 = vmul.f32 %v910, %v942
    %951 = vrot.lane.b32.xlu0 %v178, 120
    %v952 = vpop.permute.xlu0 %951
    %953 = vrot.lane.b32.xlu0 %v183, 120
    %v954 = vpop.permute.xlu0 %953
    %955 = vrot.lane.b32.xlu0 %v188, 120
    %v956 = vpop.permute.xlu0 %955
    %957 = vrot.lane.b32.xlu0 %v193, 120
    %v958 = vpop.permute.xlu0 %957
    %959 = vrot.lane.b32.xlu0 %v198, 120
    %v960 = vpop.permute.xlu0 %959
    %961 = vrot.lane.b32.xlu0 %v203, 120
    %v962 = vpop.permute.xlu0 %961
    %963 = vrot.lane.b32.xlu0 %v208, 120
    %v964 = vpop.permute.xlu0 %963
    %965 = vrot.lane.b32.xlu0 %v213, 120
    %v966 = vpop.permute.xlu0 %965
    %v976 = vsel %vm86, %v943, 0
    %v979 = vsel %vm86, %v944, 0
    %v982 = vsel %vm86, %v945, 0
    %v985 = vsel %vm86, %v946, 0
    %v988 = vsel %vm86, %v947, 0
    %v991 = vsel %vm86, %v948, 0
    %v994 = vsel %vm86, %v949, 0
    %v997 = vsel %vm86, %v950, 0
    %999 = vmatprep.subr.mxu0 0.0
    %1000 = vmatpush1.msra.mxu0 %v952
    %1001 = vmatprep.subr.mxu0 0.0
    %1002 = vmatpush1.msra.mxu0 %v954
    %1003 = vmatprep.subr.mxu0 0.0
    %1004 = vmatpush1.msra.mxu0 %v956
    %1005 = vmatprep.subr.mxu0 0.0
    %1006 = vmatpush1.msra.mxu0 %v958
    %1007 = vmatprep.subr.mxu0 0.0
    %1008 = vmatpush1.msra.mxu0 %v960
    %1009 = vmatprep.subr.mxu0 0.0
    %1010 = vmatpush1.msra.mxu0 %v962
    %1011 = vmatprep.subr.mxu0 0.0
    %1012 = vmatpush1.msra.mxu0 %v964
    %1013 = vmatprep.subr.mxu0 0.0
    %1014 = vmatpush1.msra.mxu0 %v966
    %1015 = vmatprep.subr.mxu0 0.0
    %1016 = vmatpush1.msra.mxu0 0.0
    %1017 = vmatprep.subr.mxu0 0.0
    %1018 = vmatpush1.msra.mxu0 0.0
    %1019 = vmatprep.subr.mxu0 0.0
    %1020 = vmatpush1.msra.mxu0 0.0
    %1021 = vmatprep.subr.mxu0 0.0
    %1022 = vmatpush1.msra.mxu0 0.0
    %1023 = vmatprep.subr.mxu0 0.0
    %1024 = vmatpush1.msra.mxu0 0.0
    %1025 = vmatprep.subr.mxu0 0.0
    %1026 = vmatpush1.msra.mxu0 0.0
    %1027 = vmatprep.subr.mxu0 0.0
    %1028 = vmatpush1.msra.mxu0 0.0
    %1029 = vmatprep.subr.mxu0 0.0
    %1030 = vmatpush1.msra.mxu0 0.0
    %1031 = vmatprep.subr.mxu0 0.0
    %1032 = vmatpush1.msra.mxu0 0.0
    %1033 = vmatprep.subr.mxu0 0.0
    %1034 = vmatpush1.msra.mxu0 0.0
    %1035 = vmatprep.subr.mxu0 0.0
    %1036 = vmatpush1.msra.mxu0 0.0
    %1037 = vmatprep.subr.mxu0 0.0
    %1038 = vmatpush1.msra.mxu0 0.0
    %1039 = vmatprep.subr.mxu0 0.0
    %1040 = vmatpush1.msra.mxu0 0.0
    %1041 = vmatprep.subr.mxu0 0.0
    %1042 = vmatpush1.msra.mxu0 0.0
    %1043 = vmatprep.subr.mxu0 0.0
    %1044 = vmatpush1.msra.mxu0 0.0
    %1045 = vmatprep.subr.mxu0 0.0
    %1046 = vmatpush1.msra.mxu0 0.0
    %1047 = vmatprep.subr.mxu0 0.0
    %1048 = vmatpush1.msra.mxu0 0.0
    %1049 = vmatprep.subr.mxu0 0.0
    %1050 = vmatpush1.msra.mxu0 0.0
    %1051 = vmatprep.subr.mxu0 0.0
    %1052 = vmatpush1.msra.mxu0 0.0
    %1053 = vmatprep.subr.mxu0 0.0
    %1054 = vmatpush1.msra.mxu0 0.0
    %1055 = vmatprep.subr.mxu0 0.0
    %1056 = vmatpush1.msra.mxu0 0.0
    %1057 = vmatprep.subr.mxu0 0.0
    %1058 = vmatpush1.msra.mxu0 0.0
    %1059 = vmatprep.subr.mxu0 0.0
    %1060 = vmatpush1.msra.mxu0 0.0
    %1061 = vmatprep.subr.mxu0 0.0
    %1062 = vmatpush1.msra.mxu0 0.0
    %1063 = vmatprep.mubr.f32.mxu0 0.0
    %1064 = vmatmul.mubr.f32.gmra.mrb[0].mxu0 %v976
    %v1065 = vpop.f32.mrb[0].mxu0
    %v1066 = vadd.f32 0.0, %v1065
    %v1067 = vpop.f32.mrb[0].mxu0
    %1068 = vmatprep.mubr.f32.mxu0 0.0
    %1069 = vmatmul.mubr.f32.gmra.mrb[0].mxu0 %v979
    %v1070 = vpop.f32.mrb[0].mxu0
    %v1071 = vadd.f32 0.0, %v1070
    %v1072 = vpop.f32.mrb[0].mxu0
    %1073 = vmatprep.mubr.f32.mxu0 0.0
    %1074 = vmatmul.mubr.f32.gmra.mrb[0].mxu0 %v982
    %v1075 = vpop.f32.mrb[0].mxu0
    %v1076 = vadd.f32 0.0, %v1075
    %v1077 = vpop.f32.mrb[0].mxu0
    %1078 = vmatprep.mubr.f32.mxu0 0.0
    %1079 = vmatmul.mubr.f32.gmra.mrb[0].mxu0 %v985
    %v1080 = vpop.f32.mrb[0].mxu0
    %v1081 = vadd.f32 0.0, %v1080
    %v1082 = vpop.f32.mrb[0].mxu0
    %1083 = vmatprep.mubr.f32.mxu0 0.0
    %1084 = vmatmul.mubr.f32.gmra.mrb[0].mxu0 %v988
    %v1085 = vpop.f32.mrb[0].mxu0
    %v1086 = vadd.f32 0.0, %v1085
    %v1087 = vpop.f32.mrb[0].mxu0
    %1088 = vmatprep.mubr.f32.mxu0 0.0
    %1089 = vmatmul.mubr.f32.gmra.mrb[0].mxu0 %v991
    %v1090 = vpop.f32.mrb[0].mxu0
    %v1091 = vadd.f32 0.0, %v1090
    %v1092 = vpop.f32.mrb[0].mxu0
    %1093 = vmatprep.mubr.f32.mxu0 0.0
    %1094 = vmatmul.mubr.f32.gmra.mrb[0].mxu0 %v994
    %v1095 = vpop.f32.mrb[0].mxu0
    %v1096 = vadd.f32 0.0, %v1095
    %v1097 = vpop.f32.mrb[0].mxu0
    %1098 = vmatprep.mubr.f32.mxu0 0.0
    %1099 = vmatmul.mubr.f32.gmra.mrb[0].mxu0 %v997
    %v1100 = vpop.f32.mrb[0].mxu0
    %v1101 = vadd.f32 0.0, %v1100
    %v1102 = vpop.f32.mrb[0].mxu0
    %1103 = vdwg.mxu0
    %1104 = vset.pattern.permute.xlu0 2
    %1105 = vperm.xlu0 %1104, %v312
    %v1106 = vpop.permute.xlu0 %1105
    %1108 = vset.pattern.permute.xlu0 2
    %1109 = vperm.xlu0 %1108, %v317
    %v1110 = vpop.permute.xlu0 %1109
    %1112 = vset.pattern.permute.xlu0 2
    %1113 = vperm.xlu0 %1112, %v322
    %v1114 = vpop.permute.xlu0 %1113
    %1116 = vset.pattern.permute.xlu0 2
    %1117 = vperm.xlu0 %1116, %v327
    %v1118 = vpop.permute.xlu0 %1117
    %1120 = vset.pattern.permute.xlu0 2
    %1121 = vperm.xlu0 %1120, %v332
    %v1122 = vpop.permute.xlu0 %1121
    %1124 = vset.pattern.permute.xlu0 2
    %1125 = vperm.xlu0 %1124, %v337
    %v1126 = vpop.permute.xlu0 %1125
    %1128 = vset.pattern.permute.xlu0 2
    %1129 = vperm.xlu0 %1128, %v342
    %v1130 = vpop.permute.xlu0 %1129
    %1132 = vset.pattern.permute.xlu0 2
    %1133 = vperm.xlu0 %1132, %v347
    %v1134 = vpop.permute.xlu0 %1133
    %v1136 = vlaneseq
    %v1137 = vshrl.u32 %v1136, 7
    %v1138 = vsub.s32 2, %v1137
    %v1139 = vrot.slane %v468, %v1138
    %v1140 = vadd.f32 %v1106, %v1139
    %v1141 = vadd.f32 %v1110, %v1139
    %v1142 = vadd.f32 %v1114, %v1139
    %v1143 = vadd.f32 %v1118, %v1139
    %v1144 = vadd.f32 %v1122, %v1139
    %v1145 = vadd.f32 %v1126, %v1139
    %v1146 = vadd.f32 %v1130, %v1139
    %v1147 = vadd.f32 %v1134, %v1139
    %vm1148 = vcmp.gt.f32.partialorder %v1140, 0.0
    %vm1149 = vcmp.gt.f32.partialorder %v1141, 0.0
    %vm1150 = vcmp.gt.f32.partialorder %v1142, 0.0
    %vm1151 = vcmp.gt.f32.partialorder %v1143, 0.0
    %vm1152 = vcmp.gt.f32.partialorder %v1144, 0.0
    %vm1153 = vcmp.gt.f32.partialorder %v1145, 0.0
    %vm1154 = vcmp.gt.f32.partialorder %v1146, 0.0
    %vm1155 = vcmp.gt.f32.partialorder %v1147, 0.0
    %v1156 = vmul.f32 %v1140, 0.2
    %v1157 = vmul.f32 %v1141, 0.2
    %v1158 = vmul.f32 %v1142, 0.2
    %v1159 = vmul.f32 %v1143, 0.2
    %v1160 = vmul.f32 %v1144, 0.2
    %v1161 = vmul.f32 %v1145, 0.2
    %v1162 = vmul.f32 %v1146, 0.2
    %v1163 = vmul.f32 %v1147, 0.2
    %v1164 = vsel %vm1148, %v1140, %v1156
    %v1165 = vsel %vm1149, %v1141, %v1157
    %v1166 = vsel %vm1150, %v1142, %v1158
    %v1167 = vsel %vm1151, %v1143, %v1159
    %v1168 = vsel %vm1152, %v1144, %v1160
    %v1169 = vsel %vm1153, %v1145, %v1161
    %v1170 = vsel %vm1154, %v1146, %v1162
    %v1171 = vsel %vm1155, %v1147, %v1163
    %v1172 = vadd.f32 %v1164, %v478
    %v1173 = vadd.f32 %v1165, %v479
    %v1174 = vadd.f32 %v1166, %v480
    %v1175 = vadd.f32 %v1167, %v481
    %v1176 = vadd.f32 %v1168, %v482
    %v1177 = vadd.f32 %v1169, %v483
    %v1178 = vadd.f32 %v1170, %v484
    %v1179 = vadd.f32 %v1171, %v485
    %v1180 = vsel %vm86, %v1172, -inf
    %1181 = vmax.xlane.f32.xlu0 %v1180
    %v1182 = vpop.xlane.xlu0 %1181
    %v1183 = vsel %vm86, %v1173, -inf
    %1184 = vmax.xlane.f32.xlu0 %v1183
    %v1185 = vpop.xlane.xlu0 %1184
    %v1186 = vsel %vm86, %v1174, -inf
    %1187 = vmax.xlane.f32.xlu0 %v1186
    %v1188 = vpop.xlane.xlu0 %1187
    %v1189 = vsel %vm86, %v1175, -inf
    %1190 = vmax.xlane.f32.xlu0 %v1189
    %v1191 = vpop.xlane.xlu0 %1190
    %v1192 = vsel %vm86, %v1176, -inf
    %1193 = vmax.xlane.f32.xlu0 %v1192
    %v1194 = vpop.xlane.xlu0 %1193
    %v1195 = vsel %vm86, %v1177, -inf
    %1196 = vmax.xlane.f32.xlu0 %v1195
    %v1197 = vpop.xlane.xlu0 %1196
    %v1198 = vsel %vm86, %v1178, -inf
    %1199 = vmax.xlane.f32.xlu0 %v1198
    %v1200 = vpop.xlane.xlu0 %1199
    %v1201 = vsel %vm86, %v1179, -inf
    %1202 = vmax.xlane.f32.xlu0 %v1201
    %v1203 = vpop.xlane.xlu0 %1202
    %v1204 = vsub.f32 %v1172, %v1182
    %v1205 = vsub.f32 %v1173, %v1185
    %v1206 = vsub.f32 %v1174, %v1188
    %v1207 = vsub.f32 %v1175, %v1191
    %v1208 = vsub.f32 %v1176, %v1194
    %v1209 = vsub.f32 %v1177, %v1197
    %v1210 = vsub.f32 %v1178, %v1200
    %v1211 = vsub.f32 %v1179, %v1203
    %v1212 = vmul.f32 %v1204, 1.442695
    %v1213 = vpow.pop %v1212
    %v1214 = vmul.f32 %v1205, 1.442695
    %v1215 = vpow.pop %v1214
    %v1216 = vmul.f32 %v1206, 1.442695
    %v1217 = vpow.pop %v1216
    %v1218 = vmul.f32 %v1207, 1.442695
    %v1219 = vpow.pop %v1218
    %v1220 = vmul.f32 %v1208, 1.442695
    %v1221 = vpow.pop %v1220
    %v1222 = vmul.f32 %v1209, 1.442695
    %v1223 = vpow.pop %v1222
    %v1224 = vmul.f32 %v1210, 1.442695
    %v1225 = vpow.pop %v1224
    %v1226 = vmul.f32 %v1211, 1.442695
    %v1227 = vpow.pop %v1226
    %v1228 = vsel %vm86, %v1213, 0.0
    %1229 = vadd.xlane.f32.xlu0 %v1228
    %v1230 = vpop.xlane.xlu0 %1229
    %v1231 = vsel %vm86, %v1215, 0.0
    %1232 = vadd.xlane.f32.xlu0 %v1231
    %v1233 = vpop.xlane.xlu0 %1232
    %v1234 = vsel %vm86, %v1217, 0.0
    %1235 = vadd.xlane.f32.xlu0 %v1234
    %v1236 = vpop.xlane.xlu0 %1235
    %v1237 = vsel %vm86, %v1219, 0.0
    %1238 = vadd.xlane.f32.xlu0 %v1237
    %v1239 = vpop.xlane.xlu0 %1238
    %v1240 = vsel %vm86, %v1221, 0.0
    %1241 = vadd.xlane.f32.xlu0 %v1240
    %v1242 = vpop.xlane.xlu0 %1241
    %v1243 = vsel %vm86, %v1223, 0.0
    %1244 = vadd.xlane.f32.xlu0 %v1243
    %v1245 = vpop.xlane.xlu0 %1244
    %v1246 = vsel %vm86, %v1225, 0.0
    %1247 = vadd.xlane.f32.xlu0 %v1246
    %v1248 = vpop.xlane.xlu0 %1247
    %v1249 = vsel %vm86, %v1227, 0.0
    %1250 = vadd.xlane.f32.xlu0 %v1249
    %v1251 = vpop.xlane.xlu0 %1250
    %v1252 = vrcp.pop %v1230
    %v1253 = vrcp.pop %v1233
    %v1254 = vrcp.pop %v1236
    %v1255 = vrcp.pop %v1239
    %v1256 = vrcp.pop %v1242
    %v1257 = vrcp.pop %v1245
    %v1258 = vrcp.pop %v1248
    %v1259 = vrcp.pop %v1251
    %v1260 = vmul.f32 %v1213, %v1252
    %v1261 = vmul.f32 %v1215, %v1253
    %v1262 = vmul.f32 %v1217, %v1254
    %v1263 = vmul.f32 %v1219, %v1255
    %v1264 = vmul.f32 %v1221, %v1256
    %v1265 = vmul.f32 %v1223, %v1257
    %v1266 = vmul.f32 %v1225, %v1258
    %v1267 = vmul.f32 %v1227, %v1259
    %1268 = vrot.lane.b32.xlu0 %v178, 112
    %v1269 = vpop.permute.xlu0 %1268
    %1270 = vrot.lane.b32.xlu0 %v183, 112
    %v1271 = vpop.permute.xlu0 %1270
    %1272 = vrot.lane.b32.xlu0 %v188, 112
    %v1273 = vpop.permute.xlu0 %1272
    %1274 = vrot.lane.b32.xlu0 %v193, 112
    %v1275 = vpop.permute.xlu0 %1274
    %1276 = vrot.lane.b32.xlu0 %v198, 112
    %v1277 = vpop.permute.xlu0 %1276
    %1278 = vrot.lane.b32.xlu0 %v203, 112
    %v1279 = vpop.permute.xlu0 %1278
    %1280 = vrot.lane.b32.xlu0 %v208, 112
    %v1281 = vpop.permute.xlu0 %1280
    %1282 = vrot.lane.b32.xlu0 %v213, 112
    %v1283 = vpop.permute.xlu0 %1282
    %v1293 = vsel %vm86, %v1260, 0
    %v1296 = vsel %vm86, %v1261, 0
    %v1299 = vsel %vm86, %v1262, 0
    %v1302 = vsel %vm86, %v1263, 0
    %v1305 = vsel %vm86, %v1264, 0
    %v1308 = vsel %vm86, %v1265, 0
    %v1311 = vsel %vm86, %v1266, 0
    %v1314 = vsel %vm86, %v1267, 0
    %1316 = vmatprep.subr.mxu0 0.0
    %1317 = vmatpush1.msra.mxu0 %v1269
    %1318 = vmatprep.subr.mxu0 0.0
    %1319 = vmatpush1.msra.mxu0 %v1271
    %1320 = vmatprep.subr.mxu0 0.0
    %1321 = vmatpush1.msra.mxu0 %v1273
    %1322 = vmatprep.subr.mxu0 0.0
    %1323 = vmatpush1.msra.mxu0 %v1275
    %1324 = vmatprep.subr.mxu0 0.0
    %1325 = vmatpush1.msra.mxu0 %v1277
    %1326 = vmatprep.subr.mxu0 0.0
    %1327 = vmatpush1.msra.mxu0 %v1279
    %1328 = vmatprep.subr.mxu0 0.0
    %1329 = vmatpush1.msra.mxu0 %v1281
    %1330 = vmatprep.subr.mxu0 0.0
    %1331 = vmatpush1.msra.mxu0 %v1283
    %1332 = vmatprep.subr.mxu0 0.0
    %1333 = vmatpush1.msra.mxu0 0.0
    %1334 = vmatprep.subr.mxu0 0.0
    %1335 = vmatpush1.msra.mxu0 0.0
    %1336 = vmatprep.subr.mxu0 0.0
    %1337 = vmatpush1.msra.mxu0 0.0
    %1338 = vmatprep.subr.mxu0 0.0
    %1339 = vmatpush1.msra.mxu0 0.0
    %1340 = vmatprep.subr.mxu0 0.0
    %1341 = vmatpush1.msra.mxu0 0.0
    %1342 = vmatprep.subr.mxu0 0.0
    %1343 = vmatpush1.msra.mxu0 0.0
    %1344 = vmatprep.subr.mxu0 0.0
    %1345 = vmatpush1.msra.mxu0 0.0
    %1346 = vmatprep.subr.mxu0 0.0
    %1347 = vmatpush1.msra.mxu0 0.0
    %1348 = vmatprep.subr.mxu0 0.0
    %1349 = vmatpush1.msra.mxu0 0.0
    %1350 = vmatprep.subr.mxu0 0.0
    %1351 = vmatpush1.msra.mxu0 0.0
    %1352 = vmatprep.subr.mxu0 0.0
    %1353 = vmatpush1.msra.mxu0 0.0
    %1354 = vmatprep.subr.mxu0 0.0
    %1355 = vmatpush1.msra.mxu0 0.0
    %1356 = vmatprep.subr.mxu0 0.0
    %1357 = vmatpush1.msra.mxu0 0.0
    %1358 = vmatprep.subr.mxu0 0.0
    %1359 = vmatpush1.msra.mxu0 0.0
    %1360 = vmatprep.subr.mxu0 0.0
    %1361 = vmatpush1.msra.mxu0 0.0
    %1362 = vmatprep.subr.mxu0 0.0
    %1363 = vmatpush1.msra.mxu0 0.0
    %1364 = vmatprep.subr.mxu0 0.0
    %1365 = vmatpush1.msra.mxu0 0.0
    %1366 = vmatprep.subr.mxu0 0.0
    %1367 = vmatpush1.msra.mxu0 0.0
    %1368 = vmatprep.subr.mxu0 0.0
    %1369 = vmatpush1.msra.mxu0 0.0
    %1370 = vmatprep.subr.mxu0 0.0
    %1371 = vmatpush1.msra.mxu0 0.0
    %1372 = vmatprep.subr.mxu0 0.0
    %1373 = vmatpush1.msra.mxu0 0.0
    %1374 = vmatprep.subr.mxu0 0.0
    %1375 = vmatpush1.msra.mxu0 0.0
    %1376 = vmatprep.subr.mxu0 0.0
    %1377 = vmatpush1.msra.mxu0 0.0
    %1378 = vmatprep.subr.mxu0 0.0
    %1379 = vmatpush1.msra.mxu0 0.0
    %1380 = vmatprep.mubr.f32.mxu0 0.0
    %1381 = vmatmul.mubr.f32.gmra.mrb[0].mxu0 %v1293
    %v1382 = vpop.f32.mrb[0].mxu0
    %v1383 = vadd.f32 0.0, %v1382
    %v1384 = vpop.f32.mrb[0].mxu0
    %1385 = vmatprep.mubr.f32.mxu0 0.0
    %1386 = vmatmul.mubr.f32.gmra.mrb[0].mxu0 %v1296
    %v1387 = vpop.f32.mrb[0].mxu0
    %v1388 = vadd.f32 0.0, %v1387
    %v1389 = vpop.f32.mrb[0].mxu0
    %1390 = vmatprep.mubr.f32.mxu0 0.0
    %1391 = vmatmul.mubr.f32.gmra.mrb[0].mxu0 %v1299
    %v1392 = vpop.f32.mrb[0].mxu0
    %v1393 = vadd.f32 0.0, %v1392
    %v1394 = vpop.f32.mrb[0].mxu0
    %1395 = vmatprep.mubr.f32.mxu0 0.0
    %1396 = vmatmul.mubr.f32.gmra.mrb[0].mxu0 %v1302
    %v1397 = vpop.f32.mrb[0].mxu0
    %v1398 = vadd.f32 0.0, %v1397
    %v1399 = vpop.f32.mrb[0].mxu0
    %1400 = vmatprep.mubr.f32.mxu0 0.0
    %1401 = vmatmul.mubr.f32.gmra.mrb[0].mxu0 %v1305
    %v1402 = vpop.f32.mrb[0].mxu0
    %v1403 = vadd.f32 0.0, %v1402
    %v1404 = vpop.f32.mrb[0].mxu0
    %1405 = vmatprep.mubr.f32.mxu0 0.0
    %1406 = vmatmul.mubr.f32.gmra.mrb[0].mxu0 %v1308
    %v1407 = vpop.f32.mrb[0].mxu0
    %v1408 = vadd.f32 0.0, %v1407
    %v1409 = vpop.f32.mrb[0].mxu0
    %1410 = vmatprep.mubr.f32.mxu0 0.0
    %1411 = vmatmul.mubr.f32.gmra.mrb[0].mxu0 %v1311
    %v1412 = vpop.f32.mrb[0].mxu0
    %v1413 = vadd.f32 0.0, %v1412
    %v1414 = vpop.f32.mrb[0].mxu0
    %1415 = vmatprep.mubr.f32.mxu0 0.0
    %1416 = vmatmul.mubr.f32.gmra.mrb[0].mxu0 %v1314
    %v1417 = vpop.f32.mrb[0].mxu0
    %v1418 = vadd.f32 0.0, %v1417
    %v1419 = vpop.f32.mrb[0].mxu0
    %1420 = vdwg.mxu0
    %1421 = vset.pattern.permute.xlu0 3
    %1422 = vperm.xlu0 %1421, %v312
    %v1423 = vpop.permute.xlu0 %1422
    %1425 = vset.pattern.permute.xlu0 3
    %1426 = vperm.xlu0 %1425, %v317
    %v1427 = vpop.permute.xlu0 %1426
    %1429 = vset.pattern.permute.xlu0 3
    %1430 = vperm.xlu0 %1429, %v322
    %v1431 = vpop.permute.xlu0 %1430
    %1433 = vset.pattern.permute.xlu0 3
    %1434 = vperm.xlu0 %1433, %v327
    %v1435 = vpop.permute.xlu0 %1434
    %1437 = vset.pattern.permute.xlu0 3
    %1438 = vperm.xlu0 %1437, %v332
    %v1439 = vpop.permute.xlu0 %1438
    %1441 = vset.pattern.permute.xlu0 3
    %1442 = vperm.xlu0 %1441, %v337
    %v1443 = vpop.permute.xlu0 %1442
    %1445 = vset.pattern.permute.xlu0 3
    %1446 = vperm.xlu0 %1445, %v342
    %v1447 = vpop.permute.xlu0 %1446
    %1449 = vset.pattern.permute.xlu0 3
    %1450 = vperm.xlu0 %1449, %v347
    %v1451 = vpop.permute.xlu0 %1450
    %v1453 = vlaneseq
    %v1454 = vshrl.u32 %v1453, 7
    %v1455 = vsub.s32 3, %v1454
    %v1456 = vrot.slane %v468, %v1455
    %v1457 = vadd.f32 %v1423, %v1456
    %v1458 = vadd.f32 %v1427, %v1456
    %v1459 = vadd.f32 %v1431, %v1456
    %v1460 = vadd.f32 %v1435, %v1456
    %v1461 = vadd.f32 %v1439, %v1456
    %v1462 = vadd.f32 %v1443, %v1456
    %v1463 = vadd.f32 %v1447, %v1456
    %v1464 = vadd.f32 %v1451, %v1456
    %vm1465 = vcmp.gt.f32.partialorder %v1457, 0.0
    %vm1466 = vcmp.gt.f32.partialorder %v1458, 0.0
    %vm1467 = vcmp.gt.f32.partialorder %v1459, 0.0
    %vm1468 = vcmp.gt.f32.partialorder %v1460, 0.0
    %vm1469 = vcmp.gt.f32.partialorder %v1461, 0.0
    %vm1470 = vcmp.gt.f32.partialorder %v1462, 0.0
    %vm1471 = vcmp.gt.f32.partialorder %v1463, 0.0
    %vm1472 = vcmp.gt.f32.partialorder %v1464, 0.0
    %v1473 = vmul.f32 %v1457, 0.2
    %v1474 = vmul.f32 %v1458, 0.2
    %v1475 = vmul.f32 %v1459, 0.2
    %v1476 = vmul.f32 %v1460, 0.2
    %v1477 = vmul.f32 %v1461, 0.2
    %v1478 = vmul.f32 %v1462, 0.2
    %v1479 = vmul.f32 %v1463, 0.2
    %v1480 = vmul.f32 %v1464, 0.2
    %v1481 = vsel %vm1465, %v1457, %v1473
    %v1482 = vsel %vm1466, %v1458, %v1474
    %v1483 = vsel %vm1467, %v1459, %v1475
    %v1484 = vsel %vm1468, %v1460, %v1476
    %v1485 = vsel %vm1469, %v1461, %v1477
    %v1486 = vsel %vm1470, %v1462, %v1478
    %v1487 = vsel %vm1471, %v1463, %v1479
    %v1488 = vsel %vm1472, %v1464, %v1480
    %v1489 = vadd.f32 %v1481, %v478
    %v1490 = vadd.f32 %v1482, %v479
    %v1491 = vadd.f32 %v1483, %v480
    %v1492 = vadd.f32 %v1484, %v481
    %v1493 = vadd.f32 %v1485, %v482
    %v1494 = vadd.f32 %v1486, %v483
    %v1495 = vadd.f32 %v1487, %v484
    %v1496 = vadd.f32 %v1488, %v485
    %v1497 = vsel %vm86, %v1489, -inf
    %1498 = vmax.xlane.f32.xlu0 %v1497
    %v1499 = vpop.xlane.xlu0 %1498
    %v1500 = vsel %vm86, %v1490, -inf
    %1501 = vmax.xlane.f32.xlu0 %v1500
    %v1502 = vpop.xlane.xlu0 %1501
    %v1503 = vsel %vm86, %v1491, -inf
    %1504 = vmax.xlane.f32.xlu0 %v1503
    %v1505 = vpop.xlane.xlu0 %1504
    %v1506 = vsel %vm86, %v1492, -inf
    %1507 = vmax.xlane.f32.xlu0 %v1506
    %v1508 = vpop.xlane.xlu0 %1507
    %v1509 = vsel %vm86, %v1493, -inf
    %1510 = vmax.xlane.f32.xlu0 %v1509
    %v1511 = vpop.xlane.xlu0 %1510
    %v1512 = vsel %vm86, %v1494, -inf
    %1513 = vmax.xlane.f32.xlu0 %v1512
    %v1514 = vpop.xlane.xlu0 %1513
    %v1515 = vsel %vm86, %v1495, -inf
    %1516 = vmax.xlane.f32.xlu0 %v1515
    %v1517 = vpop.xlane.xlu0 %1516
    %v1518 = vsel %vm86, %v1496, -inf
    %1519 = vmax.xlane.f32.xlu0 %v1518
    %v1520 = vpop.xlane.xlu0 %1519
    %v1521 = vsub.f32 %v1489, %v1499
    %v1522 = vsub.f32 %v1490, %v1502
    %v1523 = vsub.f32 %v1491, %v1505
    %v1524 = vsub.f32 %v1492, %v1508
    %v1525 = vsub.f32 %v1493, %v1511
    %v1526 = vsub.f32 %v1494, %v1514
    %v1527 = vsub.f32 %v1495, %v1517
    %v1528 = vsub.f32 %v1496, %v1520
    %v1529 = vmul.f32 %v1521, 1.442695
    %v1530 = vpow.pop %v1529
    %v1531 = vmul.f32 %v1522, 1.442695
    %v1532 = vpow.pop %v1531
    %v1533 = vmul.f32 %v1523, 1.442695
    %v1534 = vpow.pop %v1533
    %v1535 = vmul.f32 %v1524, 1.442695
    %v1536 = vpow.pop %v1535
    %v1537 = vmul.f32 %v1525, 1.442695
    %v1538 = vpow.pop %v1537
    %v1539 = vmul.f32 %v1526, 1.442695
    %v1540 = vpow.pop %v1539
    %v1541 = vmul.f32 %v1527, 1.442695
    %v1542 = vpow.pop %v1541
    %v1543 = vmul.f32 %v1528, 1.442695
    %v1544 = vpow.pop %v1543
    %v1545 = vsel %vm86, %v1530, 0.0
    %1546 = vadd.xlane.f32.xlu0 %v1545
    %v1547 = vpop.xlane.xlu0 %1546
    %v1548 = vsel %vm86, %v1532, 0.0
    %1549 = vadd.xlane.f32.xlu0 %v1548
    %v1550 = vpop.xlane.xlu0 %1549
    %v1551 = vsel %vm86, %v1534, 0.0
    %1552 = vadd.xlane.f32.xlu0 %v1551
    %v1553 = vpop.xlane.xlu0 %1552
    %v1554 = vsel %vm86, %v1536, 0.0
    %1555 = vadd.xlane.f32.xlu0 %v1554
    %v1556 = vpop.xlane.xlu0 %1555
    %v1557 = vsel %vm86, %v1538, 0.0
    %1558 = vadd.xlane.f32.xlu0 %v1557
    %v1559 = vpop.xlane.xlu0 %1558
    %v1560 = vsel %vm86, %v1540, 0.0
    %1561 = vadd.xlane.f32.xlu0 %v1560
    %v1562 = vpop.xlane.xlu0 %1561
    %v1563 = vsel %vm86, %v1542, 0.0
    %1564 = vadd.xlane.f32.xlu0 %v1563
    %v1565 = vpop.xlane.xlu0 %1564
    %v1566 = vsel %vm86, %v1544, 0.0
    %1567 = vadd.xlane.f32.xlu0 %v1566
    %v1568 = vpop.xlane.xlu0 %1567
    %v1569 = vrcp.pop %v1547
    %v1570 = vrcp.pop %v1550
    %v1571 = vrcp.pop %v1553
    %v1572 = vrcp.pop %v1556
    %v1573 = vrcp.pop %v1559
    %v1574 = vrcp.pop %v1562
    %v1575 = vrcp.pop %v1565
    %v1576 = vrcp.pop %v1568
    %v1577 = vmul.f32 %v1530, %v1569
    %v1578 = vmul.f32 %v1532, %v1570
    %v1579 = vmul.f32 %v1534, %v1571
    %v1580 = vmul.f32 %v1536, %v1572
    %v1581 = vmul.f32 %v1538, %v1573
    %v1582 = vmul.f32 %v1540, %v1574
    %v1583 = vmul.f32 %v1542, %v1575
    %v1584 = vmul.f32 %v1544, %v1576
    %1585 = vrot.lane.b32.xlu0 %v178, 104
    %v1586 = vpop.permute.xlu0 %1585
    %1587 = vrot.lane.b32.xlu0 %v183, 104
    %v1588 = vpop.permute.xlu0 %1587
    %1589 = vrot.lane.b32.xlu0 %v188, 104
    %v1590 = vpop.permute.xlu0 %1589
    %1591 = vrot.lane.b32.xlu0 %v193, 104
    %v1592 = vpop.permute.xlu0 %1591
    %1593 = vrot.lane.b32.xlu0 %v198, 104
    %v1594 = vpop.permute.xlu0 %1593
    %1595 = vrot.lane.b32.xlu0 %v203, 104
    %v1596 = vpop.permute.xlu0 %1595
    %1597 = vrot.lane.b32.xlu0 %v208, 104
    %v1598 = vpop.permute.xlu0 %1597
    %1599 = vrot.lane.b32.xlu0 %v213, 104
    %v1600 = vpop.permute.xlu0 %1599
    %v1610 = vsel %vm86, %v1577, 0
    %v1613 = vsel %vm86, %v1578, 0
    %v1616 = vsel %vm86, %v1579, 0
    %v1619 = vsel %vm86, %v1580, 0
    %v1622 = vsel %vm86, %v1581, 0
    %v1625 = vsel %vm86, %v1582, 0
    %v1628 = vsel %vm86, %v1583, 0
    %v1631 = vsel %vm86, %v1584, 0
    %1633 = vmatprep.subr.mxu0 0.0
    %1634 = vmatpush1.msra.mxu0 %v1586
    %1635 = vmatprep.subr.mxu0 0.0
    %1636 = vmatpush1.msra.mxu0 %v1588
    %1637 = vmatprep.subr.mxu0 0.0
    %1638 = vmatpush1.msra.mxu0 %v1590
    %1639 = vmatprep.subr.mxu0 0.0
    %1640 = vmatpush1.msra.mxu0 %v1592
    %1641 = vmatprep.subr.mxu0 0.0
    %1642 = vmatpush1.msra.mxu0 %v1594
    %1643 = vmatprep.subr.mxu0 0.0
    %1644 = vmatpush1.msra.mxu0 %v1596
    %1645 = vmatprep.subr.mxu0 0.0
    %1646 = vmatpush1.msra.mxu0 %v1598
    %1647 = vmatprep.subr.mxu0 0.0
    %1648 = vmatpush1.msra.mxu0 %v1600
    %1649 = vmatprep.subr.mxu0 0.0
    %1650 = vmatpush1.msra.mxu0 0.0
    %1651 = vmatprep.subr.mxu0 0.0
    %1652 = vmatpush1.msra.mxu0 0.0
    %1653 = vmatprep.subr.mxu0 0.0
    %1654 = vmatpush1.msra.mxu0 0.0
    %1655 = vmatprep.subr.mxu0 0.0
    %1656 = vmatpush1.msra.mxu0 0.0
    %1657 = vmatprep.subr.mxu0 0.0
    %1658 = vmatpush1.msra.mxu0 0.0
    %1659 = vmatprep.subr.mxu0 0.0
    %1660 = vmatpush1.msra.mxu0 0.0
    %1661 = vmatprep.subr.mxu0 0.0
    %1662 = vmatpush1.msra.mxu0 0.0
    %1663 = vmatprep.subr.mxu0 0.0
    %1664 = vmatpush1.msra.mxu0 0.0
    %1665 = vmatprep.subr.mxu0 0.0
    %1666 = vmatpush1.msra.mxu0 0.0
    %1667 = vmatprep.subr.mxu0 0.0
    %1668 = vmatpush1.msra.mxu0 0.0
    %1669 = vmatprep.subr.mxu0 0.0
    %1670 = vmatpush1.msra.mxu0 0.0
    %1671 = vmatprep.subr.mxu0 0.0
    %1672 = vmatpush1.msra.mxu0 0.0
    %1673 = vmatprep.subr.mxu0 0.0
    %1674 = vmatpush1.msra.mxu0 0.0
    %1675 = vmatprep.subr.mxu0 0.0
    %1676 = vmatpush1.msra.mxu0 0.0
    %1677 = vmatprep.subr.mxu0 0.0
    %1678 = vmatpush1.msra.mxu0 0.0
    %1679 = vmatprep.subr.mxu0 0.0
    %1680 = vmatpush1.msra.mxu0 0.0
    %1681 = vmatprep.subr.mxu0 0.0
    %1682 = vmatpush1.msra.mxu0 0.0
    %1683 = vmatprep.subr.mxu0 0.0
    %1684 = vmatpush1.msra.mxu0 0.0
    %1685 = vmatprep.subr.mxu0 0.0
    %1686 = vmatpush1.msra.mxu0 0.0
    %1687 = vmatprep.subr.mxu0 0.0
    %1688 = vmatpush1.msra.mxu0 0.0
    %1689 = vmatprep.subr.mxu0 0.0
    %1690 = vmatpush1.msra.mxu0 0.0
    %1691 = vmatprep.subr.mxu0 0.0
    %1692 = vmatpush1.msra.mxu0 0.0
    %1693 = vmatprep.subr.mxu0 0.0
    %1694 = vmatpush1.msra.mxu0 0.0
    %1695 = vmatprep.subr.mxu0 0.0
    %1696 = vmatpush1.msra.mxu0 0.0
    %1697 = vmatprep.mubr.f32.mxu0 0.0
    %1698 = vmatmul.mubr.f32.gmra.mrb[0].mxu0 %v1610
    %v1699 = vpop.f32.mrb[0].mxu0
    %v1700 = vadd.f32 0.0, %v1699
    %v1701 = vpop.f32.mrb[0].mxu0
    %1702 = vmatprep.mubr.f32.mxu0 0.0
    %1703 = vmatmul.mubr.f32.gmra.mrb[0].mxu0 %v1613
    %v1704 = vpop.f32.mrb[0].mxu0
    %v1705 = vadd.f32 0.0, %v1704
    %v1706 = vpop.f32.mrb[0].mxu0
    %1707 = vmatprep.mubr.f32.mxu0 0.0
    %1708 = vmatmul.mubr.f32.gmra.mrb[0].mxu0 %v1616
    %v1709 = vpop.f32.mrb[0].mxu0
    %v1710 = vadd.f32 0.0, %v1709
    %v1711 = vpop.f32.mrb[0].mxu0
    %1712 = vmatprep.mubr.f32.mxu0 0.0
    %1713 = vmatmul.mubr.f32.gmra.mrb[0].mxu0 %v1619
    %v1714 = vpop.f32.mrb[0].mxu0
    %v1715 = vadd.f32 0.0, %v1714
    %v1716 = vpop.f32.mrb[0].mxu0
    %1717 = vmatprep.mubr.f32.mxu0 0.0
    %1718 = vmatmul.mubr.f32.gmra.mrb[0].mxu0 %v1622
    %v1719 = vpop.f32.mrb[0].mxu0
    %v1720 = vadd.f32 0.0, %v1719
    %v1721 = vpop.f32.mrb[0].mxu0
    %1722 = vmatprep.mubr.f32.mxu0 0.0
    %1723 = vmatmul.mubr.f32.gmra.mrb[0].mxu0 %v1625
    %v1724 = vpop.f32.mrb[0].mxu0
    %v1725 = vadd.f32 0.0, %v1724
    %v1726 = vpop.f32.mrb[0].mxu0
    %1727 = vmatprep.mubr.f32.mxu0 0.0
    %1728 = vmatmul.mubr.f32.gmra.mrb[0].mxu0 %v1628
    %v1729 = vpop.f32.mrb[0].mxu0
    %v1730 = vadd.f32 0.0, %v1729
    %v1731 = vpop.f32.mrb[0].mxu0
    %1732 = vmatprep.mubr.f32.mxu0 0.0
    %1733 = vmatmul.mubr.f32.gmra.mrb[0].mxu0 %v1631
    %v1734 = vpop.f32.mrb[0].mxu0
    %v1735 = vadd.f32 0.0, %v1734
    %v1736 = vpop.f32.mrb[0].mxu0
    %1737 = vdwg.mxu0
    %1746 = vrot.lane.b32.xlu0 %v1066, 8
    %v1747 = vpop.permute.xlu0 %1746
    %1748 = vrot.lane.b32.xlu0 %v1071, 8
    %v1749 = vpop.permute.xlu0 %1748
    %1750 = vrot.lane.b32.xlu0 %v1076, 8
    %v1751 = vpop.permute.xlu0 %1750
    %1752 = vrot.lane.b32.xlu0 %v1081, 8
    %v1753 = vpop.permute.xlu0 %1752
    %1754 = vrot.lane.b32.xlu0 %v1086, 8
    %v1755 = vpop.permute.xlu0 %1754
    %1756 = vrot.lane.b32.xlu0 %v1091, 8
    %v1757 = vpop.permute.xlu0 %1756
    %1758 = vrot.lane.b32.xlu0 %v1096, 8
    %v1759 = vpop.permute.xlu0 %1758
    %1760 = vrot.lane.b32.xlu0 %v1101, 8
    %v1761 = vpop.permute.xlu0 %1760
    %1778 = vrot.lane.b32.xlu0 %v1383, 16
    %v1779 = vpop.permute.xlu0 %1778
    %1780 = vrot.lane.b32.xlu0 %v1388, 16
    %v1781 = vpop.permute.xlu0 %1780
    %1782 = vrot.lane.b32.xlu0 %v1393, 16
    %v1783 = vpop.permute.xlu0 %1782
    %1784 = vrot.lane.b32.xlu0 %v1398, 16
    %v1785 = vpop.permute.xlu0 %1784
    %1786 = vrot.lane.b32.xlu0 %v1403, 16
    %v1787 = vpop.permute.xlu0 %1786
    %1788 = vrot.lane.b32.xlu0 %v1408, 16
    %v1789 = vpop.permute.xlu0 %1788
    %1790 = vrot.lane.b32.xlu0 %v1413, 16
    %v1791 = vpop.permute.xlu0 %1790
    %1792 = vrot.lane.b32.xlu0 %v1418, 16
    %v1793 = vpop.permute.xlu0 %1792
    %1810 = vrot.lane.b32.xlu0 %v1700, 24
    %v1811 = vpop.permute.xlu0 %1810
    %1812 = vrot.lane.b32.xlu0 %v1705, 24
    %v1813 = vpop.permute.xlu0 %1812
    %1814 = vrot.lane.b32.xlu0 %v1710, 24
    %v1815 = vpop.permute.xlu0 %1814
    %1816 = vrot.lane.b32.xlu0 %v1715, 24
    %v1817 = vpop.permute.xlu0 %1816
    %1818 = vrot.lane.b32.xlu0 %v1720, 24
    %v1819 = vpop.permute.xlu0 %1818
    %1820 = vrot.lane.b32.xlu0 %v1725, 24
    %v1821 = vpop.permute.xlu0 %1820
    %1822 = vrot.lane.b32.xlu0 %v1730, 24
    %v1823 = vpop.permute.xlu0 %1822
    %1824 = vrot.lane.b32.xlu0 %v1735, 24
    %v1825 = vpop.permute.xlu0 %1824
    %vm1834 = vcmask 64512
    %v1835 = vsel %vm1834, %v749, %v1747
    %v1836 = vsel %vm1834, %v754, %v1749
    %v1837 = vsel %vm1834, %v759, %v1751
    %v1838 = vsel %vm1834, %v764, %v1753
    %v1839 = vsel %vm1834, %v769, %v1755
    %v1840 = vsel %vm1834, %v774, %v1757
    %v1841 = vsel %vm1834, %v779, %v1759
    %v1842 = vsel %vm1834, %v784, %v1761
    %vm1843 = vcmask 130048
    %v1844 = vsel %vm1843, %v1835, %v1779
    %v1845 = vsel %vm1843, %v1836, %v1781
    %v1846 = vsel %vm1843, %v1837, %v1783
    %v1847 = vsel %vm1843, %v1838, %v1785
    %v1848 = vsel %vm1843, %v1839, %v1787
    %v1849 = vsel %vm1843, %v1840, %v1789
    %v1850 = vsel %vm1843, %v1841, %v1791
    %v1851 = vsel %vm1843, %v1842, %v1793
    %vm1852 = vcmask 195584
    %v1853 = vsel %vm1852, %v1844, %v1811
    %v1854 = vsel %vm1852, %v1845, %v1813
    %v1855 = vsel %vm1852, %v1846, %v1815
    %v1856 = vsel %vm1852, %v1847, %v1817
    %v1857 = vsel %vm1852, %v1848, %v1819
    %v1858 = vsel %vm1852, %v1849, %v1821
    %v1859 = vsel %vm1852, %v1850, %v1823
    %v1860 = vsel %vm1852, %v1851, %v1825
    %v1862 = vlaneseq
    %v1863 = vshrl.u32 %v1862, 7
    %v1864 = vsub.s32 0, %v1863
    %v1865 = vrot.slane %v471, %v1864
    %v1867 = vadd.f32 %v1853, %v1865
    %v1868 = vadd.f32 %v1854, %v1865
    %v1869 = vadd.f32 %v1855, %v1865
    %v1870 = vadd.f32 %v1856, %v1865
    %v1871 = vadd.f32 %v1857, %v1865
    %v1872 = vadd.f32 %v1858, %v1865
    %v1873 = vadd.f32 %v1859, %v1865
    %v1874 = vadd.f32 %v1860, %v1865
    %vm1875 = vcmp.gt.f32.partialorder %v1867, 0.0
    %vm1876 = vcmp.gt.f32.partialorder %v1868, 0.0
    %vm1877 = vcmp.gt.f32.partialorder %v1869, 0.0
    %vm1878 = vcmp.gt.f32.partialorder %v1870, 0.0
    %vm1879 = vcmp.gt.f32.partialorder %v1871, 0.0
    %vm1880 = vcmp.gt.f32.partialorder %v1872, 0.0
    %vm1881 = vcmp.gt.f32.partialorder %v1873, 0.0
    %vm1882 = vcmp.gt.f32.partialorder %v1874, 0.0
    %v1883 = vmin.f32 %v1867, 0.0
    %v1884 = vmin.f32 %v1868, 0.0
    %v1885 = vmin.f32 %v1869, 0.0
    %v1886 = vmin.f32 %v1870, 0.0
    %v1887 = vmin.f32 %v1871, 0.0
    %v1888 = vmin.f32 %v1872, 0.0
    %v1889 = vmin.f32 %v1873, 0.0
    %v1890 = vmin.f32 %v1874, 0.0
    %v1891 = vmul.f32 %v1883, 1.442695
    %v1892 = vpow.pop %v1891
    %v1893 = vmul.f32 %v1884, 1.442695
    %v1894 = vpow.pop %v1893
    %v1895 = vmul.f32 %v1885, 1.442695
    %v1896 = vpow.pop %v1895
    %v1897 = vmul.f32 %v1886, 1.442695
    %v1898 = vpow.pop %v1897
    %v1899 = vmul.f32 %v1887, 1.442695
    %v1900 = vpow.pop %v1899
    %v1901 = vmul.f32 %v1888, 1.442695
    %v1902 = vpow.pop %v1901
    %v1903 = vmul.f32 %v1889, 1.442695
    %v1904 = vpow.pop %v1903
    %v1905 = vmul.f32 %v1890, 1.442695
    %v1906 = vpow.pop %v1905
    %v1907 = vsub.f32 %v1892, 1.0
    %v1908 = vsub.f32 %v1894, 1.0
    %v1909 = vsub.f32 %v1896, 1.0
    %v1910 = vsub.f32 %v1898, 1.0
    %v1911 = vsub.f32 %v1900, 1.0
    %v1912 = vsub.f32 %v1902, 1.0
    %v1913 = vsub.f32 %v1904, 1.0
    %v1914 = vsub.f32 %v1906, 1.0
    %v1915 = vsel %vm1875, %v1867, %v1907
    %v1916 = vsel %vm1876, %v1868, %v1908
    %v1917 = vsel %vm1877, %v1869, %v1909
    %v1918 = vsel %vm1878, %v1870, %v1910
    %v1919 = vsel %vm1879, %v1871, %v1911
    %v1920 = vsel %vm1880, %v1872, %v1912
    %v1921 = vsel %vm1881, %v1873, %v1913
    %v1922 = vsel %vm1882, %v1874, %v1914
    %v1923 = vlaneseq
    %v1924 = vshrl.u32 %v1923, 7
    %v1925 = vsub.s32 0, %v1924
    %v1926 = vrot.slane %v472, %v1925
    %v1928 = vsel %vm220, %v1915, 0
    %v1931 = vsel %vm220, %v1916, 0
    %v1934 = vsel %vm220, %v1917, 0
    %v1937 = vsel %vm220, %v1918, 0
    %v1940 = vsel %vm220, %v1919, 0
    %v1943 = vsel %vm220, %v1920, 0
    %v1946 = vsel %vm220, %v1921, 0
    %v1949 = vsel %vm220, %v1922, 0
    %1951 = vmatprep.subr.mxu0 0.0
    %1952 = vmatpush1.msra.mxu0 %v474
    %1953 = vmatprep.subr.mxu0 0.0
    %1954 = vmatpush1.msra.mxu0 %v475
    %1955 = vmatprep.subr.mxu0 0.0
    %1956 = vmatpush1.msra.mxu0 %v476
    %1957 = vmatprep.subr.mxu0 0.0
    %1958 = vmatpush1.msra.mxu0 %v477
    %1959 = vmatprep.subr.mxu0 0.0
    %1960 = vmatpush1.msra.mxu0 0.0
    %1961 = vmatprep.subr.mxu0 0.0
    %1962 = vmatpush1.msra.mxu0 0.0
    %1963 = vmatprep.subr.mxu0 0.0
    %1964 = vmatpush1.msra.mxu0 0.0
    %1965 = vmatprep.subr.mxu0 0.0
    %1966 = vmatpush1.msra.mxu0 0.0
    %1967 = vmatprep.subr.mxu0 0.0
    %1968 = vmatpush1.msra.mxu0 0.0
    %1969 = vmatprep.subr.mxu0 0.0
    %1970 = vmatpush1.msra.mxu0 0.0
    %1971 = vmatprep.subr.mxu0 0.0
    %1972 = vmatpush1.msra.mxu0 0.0
    %1973 = vmatprep.subr.mxu0 0.0
    %1974 = vmatpush1.msra.mxu0 0.0
    %1975 = vmatprep.subr.mxu0 0.0
    %1976 = vmatpush1.msra.mxu0 0.0
    %1977 = vmatprep.subr.mxu0 0.0
    %1978 = vmatpush1.msra.mxu0 0.0
    %1979 = vmatprep.subr.mxu0 0.0
    %1980 = vmatpush1.msra.mxu0 0.0
    %1981 = vmatprep.subr.mxu0 0.0
    %1982 = vmatpush1.msra.mxu0 0.0
    %1983 = vmatprep.subr.mxu0 0.0
    %1984 = vmatpush1.msra.mxu0 0.0
    %1985 = vmatprep.subr.mxu0 0.0
    %1986 = vmatpush1.msra.mxu0 0.0
    %1987 = vmatprep.subr.mxu0 0.0
    %1988 = vmatpush1.msra.mxu0 0.0
    %1989 = vmatprep.subr.mxu0 0.0
    %1990 = vmatpush1.msra.mxu0 0.0
    %1991 = vmatprep.subr.mxu0 0.0
    %1992 = vmatpush1.msra.mxu0 0.0
    %1993 = vmatprep.subr.mxu0 0.0
    %1994 = vmatpush1.msra.mxu0 0.0
    %1995 = vmatprep.subr.mxu0 0.0
    %1996 = vmatpush1.msra.mxu0 0.0
    %1997 = vmatprep.subr.mxu0 0.0
    %1998 = vmatpush1.msra.mxu0 0.0
    %1999 = vmatprep.subr.mxu0 0.0
    %2000 = vmatpush1.msra.mxu0 0.0
    %2001 = vmatprep.subr.mxu0 0.0
    %2002 = vmatpush1.msra.mxu0 0.0
    %2003 = vmatprep.subr.mxu0 0.0
    %2004 = vmatpush1.msra.mxu0 0.0
    %2005 = vmatprep.subr.mxu0 0.0
    %2006 = vmatpush1.msra.mxu0 0.0
    %2007 = vmatprep.subr.mxu0 0.0
    %2008 = vmatpush1.msra.mxu0 0.0
    %2009 = vmatprep.subr.mxu0 0.0
    %2010 = vmatpush1.msra.mxu0 0.0
    %2011 = vmatprep.subr.mxu0 0.0
    %2012 = vmatpush1.msra.mxu0 0.0
    %2013 = vmatprep.subr.mxu0 0.0
    %2014 = vmatpush1.msra.mxu0 0.0
    %2015 = vmatprep.mubr.f32.mxu0 0.0
    %2016 = vmatmul.mubr.f32.gmra.mrb[0].mxu0 %v1928
    %v2017 = vpop.f32.mrb[0].mxu0
    %v2018 = vadd.f32 %v1926, %v2017
    %v2019 = vpop.f32.mrb[0].mxu0
    %2020 = vmatprep.mubr.f32.mxu0 0.0
    %2021 = vmatmul.mubr.f32.gmra.mrb[0].mxu0 %v1931
    %v2022 = vpop.f32.mrb[0].mxu0
    %v2023 = vadd.f32 %v1926, %v2022
    %v2024 = vpop.f32.mrb[0].mxu0
    %2025 = vmatprep.mubr.f32.mxu0 0.0
    %2026 = vmatmul.mubr.f32.gmra.mrb[0].mxu0 %v1934
    %v2027 = vpop.f32.mrb[0].mxu0
    %v2028 = vadd.f32 %v1926, %v2027
    %v2029 = vpop.f32.mrb[0].mxu0
    %2030 = vmatprep.mubr.f32.mxu0 0.0
    %2031 = vmatmul.mubr.f32.gmra.mrb[0].mxu0 %v1937
    %v2032 = vpop.f32.mrb[0].mxu0
    %v2033 = vadd.f32 %v1926, %v2032
    %v2034 = vpop.f32.mrb[0].mxu0
    %2035 = vmatprep.mubr.f32.mxu0 0.0
    %2036 = vmatmul.mubr.f32.gmra.mrb[0].mxu0 %v1940
    %v2037 = vpop.f32.mrb[0].mxu0
    %v2038 = vadd.f32 %v1926, %v2037
    %v2039 = vpop.f32.mrb[0].mxu0
    %2040 = vmatprep.mubr.f32.mxu0 0.0
    %2041 = vmatmul.mubr.f32.gmra.mrb[0].mxu0 %v1943
    %v2042 = vpop.f32.mrb[0].mxu0
    %v2043 = vadd.f32 %v1926, %v2042
    %v2044 = vpop.f32.mrb[0].mxu0
    %2045 = vmatprep.mubr.f32.mxu0 0.0
    %2046 = vmatmul.mubr.f32.gmra.mrb[0].mxu0 %v1946
    %v2047 = vpop.f32.mrb[0].mxu0
    %v2048 = vadd.f32 %v1926, %v2047
    %v2049 = vpop.f32.mrb[0].mxu0
    %2050 = vmatprep.mubr.f32.mxu0 0.0
    %2051 = vmatmul.mubr.f32.gmra.mrb[0].mxu0 %v1949
    %v2052 = vpop.f32.mrb[0].mxu0
    %v2053 = vadd.f32 %v1926, %v2052
    %v2054 = vpop.f32.mrb[0].mxu0
    %2055 = vdwg.mxu0
    %v2056 = vtanh.pop %v2018
    %v2057 = vtanh.pop %v2023
    %v2058 = vtanh.pop %v2028
    %v2059 = vtanh.pop %v2033
    %v2060 = vtanh.pop %v2038
    %v2061 = vtanh.pop %v2043
    %v2062 = vtanh.pop %v2048
    %v2063 = vtanh.pop %v2053
    %v2064 = vlaneseq
    %v2065 = vshrl.u32 %v2064, 7
    %v2066 = vsub.s32 0, %v2065
    %v2067 = vrot.slane %v473, %v2066
    %v2068 = vmul.f32 %v2056, %v2067
    %v2069 = vmul.f32 %v2057, %v2067
    %v2070 = vmul.f32 %v2058, %v2067
    %v2071 = vmul.f32 %v2059, %v2067
    %v2072 = vmul.f32 %v2060, %v2067
    %v2073 = vmul.f32 %v2061, %v2067
    %v2074 = vmul.f32 %v2062, %v2067
    %v2075 = vmul.f32 %v2063, %v2067
    %2076 = vadd.xlane.f32.xlu0 %v2068
    %v2077 = vpop.xlane.xlu0 %2076
    %2078 = vadd.xlane.f32.xlu0 %v2069
    %v2079 = vpop.xlane.xlu0 %2078
    %2080 = vadd.xlane.f32.xlu0 %v2070
    %v2081 = vpop.xlane.xlu0 %2080
    %2082 = vadd.xlane.f32.xlu0 %v2071
    %v2083 = vpop.xlane.xlu0 %2082
    %2084 = vadd.xlane.f32.xlu0 %v2072
    %v2085 = vpop.xlane.xlu0 %2084
    %2086 = vadd.xlane.f32.xlu0 %v2073
    %v2087 = vpop.xlane.xlu0 %2086
    %2088 = vadd.xlane.f32.xlu0 %v2074
    %v2089 = vpop.xlane.xlu0 %2088
    %2090 = vadd.xlane.f32.xlu0 %v2075
    %v2091 = vpop.xlane.xlu0 %2090
    %v2092 = vadd.f32 %v2077, %v2079
    %v2093 = vadd.f32 %v2092, %v2081
    %v2094 = vadd.f32 %v2093, %v2083
    %v2095 = vadd.f32 %v2094, %v2085
    %v2096 = vadd.f32 %v2095, %v2087
    %v2097 = vadd.f32 %v2096, %v2089
    %v2098 = vadd.f32 %v2097, %v2091
    %v2099 = vrot.slane %v2098, 4
    %v2100 = vadd.f32 %v2098, %v2099
    %v2101 = vrot.slane %v2100, 2
    %v2102 = vadd.f32 %v2100, %v2101
    %v2103 = vrot.slane %v2102, 1
    %v2104 = vadd.f32 %v2102, %v2103
    %v2105 = vmul.f32 %v2104, 0.015625
    %s2106 = scalar_lea.vmem %s1, 64
    %v2107 = vld [vmem:[%s2106] sm:$0xff]
    %v2108 = vld [vmem:[%s2106 + $0x8] sm:$0xff]
    %v2109 = vld [vmem:[%s2106 + $0x10] sm:$0xff]
    %v2110 = vld [vmem:[%s2106 + $0x18] sm:$0xff]
    %v2111 = vld [vmem:[%s2106 + $0x20] sm:$0xff]
    %v2112 = vld [vmem:[%s2106 + $0x28] sm:$0xff]
    %v2113 = vld [vmem:[%s2106 + $0x30] sm:$0xff]
    %v2114 = vld [vmem:[%s2106 + $0x38] sm:$0xff]
    %v2115 = vadd.f32 %v554, %v2107
    %v2116 = vadd.f32 %v555, %v2108
    %v2117 = vadd.f32 %v556, %v2109
    %v2118 = vadd.f32 %v557, %v2110
    %v2119 = vadd.f32 %v558, %v2111
    %v2120 = vadd.f32 %v559, %v2112
    %v2121 = vadd.f32 %v560, %v2113
    %v2122 = vadd.f32 %v561, %v2114
    %v2123 = vsel %vm86, %v2115, -inf
    %2124 = vmax.xlane.f32.xlu0 %v2123
    %v2125 = vpop.xlane.xlu0 %2124
    %v2126 = vsel %vm86, %v2116, -inf
    %2127 = vmax.xlane.f32.xlu0 %v2126
    %v2128 = vpop.xlane.xlu0 %2127
    %v2129 = vsel %vm86, %v2117, -inf
    %2130 = vmax.xlane.f32.xlu0 %v2129
    %v2131 = vpop.xlane.xlu0 %2130
    %v2132 = vsel %vm86, %v2118, -inf
    %2133 = vmax.xlane.f32.xlu0 %v2132
    %v2134 = vpop.xlane.xlu0 %2133
    %v2135 = vsel %vm86, %v2119, -inf
    %2136 = vmax.xlane.f32.xlu0 %v2135
    %v2137 = vpop.xlane.xlu0 %2136
    %v2138 = vsel %vm86, %v2120, -inf
    %2139 = vmax.xlane.f32.xlu0 %v2138
    %v2140 = vpop.xlane.xlu0 %2139
    %v2141 = vsel %vm86, %v2121, -inf
    %2142 = vmax.xlane.f32.xlu0 %v2141
    %v2143 = vpop.xlane.xlu0 %2142
    %v2144 = vsel %vm86, %v2122, -inf
    %2145 = vmax.xlane.f32.xlu0 %v2144
    %v2146 = vpop.xlane.xlu0 %2145
    %v2147 = vsub.f32 %v2115, %v2125
    %v2148 = vsub.f32 %v2116, %v2128
    %v2149 = vsub.f32 %v2117, %v2131
    %v2150 = vsub.f32 %v2118, %v2134
    %v2151 = vsub.f32 %v2119, %v2137
    %v2152 = vsub.f32 %v2120, %v2140
    %v2153 = vsub.f32 %v2121, %v2143
    %v2154 = vsub.f32 %v2122, %v2146
    %v2155 = vmul.f32 %v2147, 1.442695
    %v2156 = vpow.pop %v2155
    %v2157 = vmul.f32 %v2148, 1.442695
    %v2158 = vpow.pop %v2157
    %v2159 = vmul.f32 %v2149, 1.442695
    %v2160 = vpow.pop %v2159
    %v2161 = vmul.f32 %v2150, 1.442695
    %v2162 = vpow.pop %v2161
    %v2163 = vmul.f32 %v2151, 1.442695
    %v2164 = vpow.pop %v2163
    %v2165 = vmul.f32 %v2152, 1.442695
    %v2166 = vpow.pop %v2165
    %v2167 = vmul.f32 %v2153, 1.442695
    %v2168 = vpow.pop %v2167
    %v2169 = vmul.f32 %v2154, 1.442695
    %v2170 = vpow.pop %v2169
    %v2171 = vsel %vm86, %v2156, 0.0
    %2172 = vadd.xlane.f32.xlu0 %v2171
    %v2173 = vpop.xlane.xlu0 %2172
    %v2174 = vsel %vm86, %v2158, 0.0
    %2175 = vadd.xlane.f32.xlu0 %v2174
    %v2176 = vpop.xlane.xlu0 %2175
    %v2177 = vsel %vm86, %v2160, 0.0
    %2178 = vadd.xlane.f32.xlu0 %v2177
    %v2179 = vpop.xlane.xlu0 %2178
    %v2180 = vsel %vm86, %v2162, 0.0
    %2181 = vadd.xlane.f32.xlu0 %v2180
    %v2182 = vpop.xlane.xlu0 %2181
    %v2183 = vsel %vm86, %v2164, 0.0
    %2184 = vadd.xlane.f32.xlu0 %v2183
    %v2185 = vpop.xlane.xlu0 %2184
    %v2186 = vsel %vm86, %v2166, 0.0
    %2187 = vadd.xlane.f32.xlu0 %v2186
    %v2188 = vpop.xlane.xlu0 %2187
    %v2189 = vsel %vm86, %v2168, 0.0
    %2190 = vadd.xlane.f32.xlu0 %v2189
    %v2191 = vpop.xlane.xlu0 %2190
    %v2192 = vsel %vm86, %v2170, 0.0
    %2193 = vadd.xlane.f32.xlu0 %v2192
    %v2194 = vpop.xlane.xlu0 %2193
    %v2195 = vrcp.pop %v2173
    %v2196 = vrcp.pop %v2176
    %v2197 = vrcp.pop %v2179
    %v2198 = vrcp.pop %v2182
    %v2199 = vrcp.pop %v2185
    %v2200 = vrcp.pop %v2188
    %v2201 = vrcp.pop %v2191
    %v2202 = vrcp.pop %v2194
    %v2203 = vmul.f32 %v2156, %v2195
    %v2204 = vmul.f32 %v2158, %v2196
    %v2205 = vmul.f32 %v2160, %v2197
    %v2206 = vmul.f32 %v2162, %v2198
    %v2207 = vmul.f32 %v2164, %v2199
    %v2208 = vmul.f32 %v2166, %v2200
    %v2209 = vmul.f32 %v2168, %v2201
    %v2210 = vmul.f32 %v2170, %v2202
    %v2212 = vsel %vm86, %v2203, 0
    %v2215 = vsel %vm86, %v2204, 0
    %v2218 = vsel %vm86, %v2205, 0
    %v2221 = vsel %vm86, %v2206, 0
    %v2224 = vsel %vm86, %v2207, 0
    %v2227 = vsel %vm86, %v2208, 0
    %v2230 = vsel %vm86, %v2209, 0
    %v2233 = vsel %vm86, %v2210, 0
    %2235 = vmatprep.subr.mxu0 0.0
    %2236 = vmatpush1.msra.mxu0 %v178
    %2237 = vmatprep.subr.mxu0 0.0
    %2238 = vmatpush1.msra.mxu0 %v183
    %2239 = vmatprep.subr.mxu0 0.0
    %2240 = vmatpush1.msra.mxu0 %v188
    %2241 = vmatprep.subr.mxu0 0.0
    %2242 = vmatpush1.msra.mxu0 %v193
    %2243 = vmatprep.subr.mxu0 0.0
    %2244 = vmatpush1.msra.mxu0 %v198
    %2245 = vmatprep.subr.mxu0 0.0
    %2246 = vmatpush1.msra.mxu0 %v203
    %2247 = vmatprep.subr.mxu0 0.0
    %2248 = vmatpush1.msra.mxu0 %v208
    %2249 = vmatprep.subr.mxu0 0.0
    %2250 = vmatpush1.msra.mxu0 %v213
    %2251 = vmatprep.subr.mxu0 0.0
    %2252 = vmatpush1.msra.mxu0 0.0
    %2253 = vmatprep.subr.mxu0 0.0
    %2254 = vmatpush1.msra.mxu0 0.0
    %2255 = vmatprep.subr.mxu0 0.0
    %2256 = vmatpush1.msra.mxu0 0.0
    %2257 = vmatprep.subr.mxu0 0.0
    %2258 = vmatpush1.msra.mxu0 0.0
    %2259 = vmatprep.subr.mxu0 0.0
    %2260 = vmatpush1.msra.mxu0 0.0
    %2261 = vmatprep.subr.mxu0 0.0
    %2262 = vmatpush1.msra.mxu0 0.0
    %2263 = vmatprep.subr.mxu0 0.0
    %2264 = vmatpush1.msra.mxu0 0.0
    %2265 = vmatprep.subr.mxu0 0.0
    %2266 = vmatpush1.msra.mxu0 0.0
    %2267 = vmatprep.subr.mxu0 0.0
    %2268 = vmatpush1.msra.mxu0 0.0
    %2269 = vmatprep.subr.mxu0 0.0
    %2270 = vmatpush1.msra.mxu0 0.0
    %2271 = vmatprep.subr.mxu0 0.0
    %2272 = vmatpush1.msra.mxu0 0.0
    %2273 = vmatprep.subr.mxu0 0.0
    %2274 = vmatpush1.msra.mxu0 0.0
    %2275 = vmatprep.subr.mxu0 0.0
    %2276 = vmatpush1.msra.mxu0 0.0
    %2277 = vmatprep.subr.mxu0 0.0
    %2278 = vmatpush1.msra.mxu0 0.0
    %2279 = vmatprep.subr.mxu0 0.0
    %2280 = vmatpush1.msra.mxu0 0.0
    %2281 = vmatprep.subr.mxu0 0.0
    %2282 = vmatpush1.msra.mxu0 0.0
    %2283 = vmatprep.subr.mxu0 0.0
    %2284 = vmatpush1.msra.mxu0 0.0
    %2285 = vmatprep.subr.mxu0 0.0
    %2286 = vmatpush1.msra.mxu0 0.0
    %2287 = vmatprep.subr.mxu0 0.0
    %2288 = vmatpush1.msra.mxu0 0.0
    %2289 = vmatprep.subr.mxu0 0.0
    %2290 = vmatpush1.msra.mxu0 0.0
    %2291 = vmatprep.subr.mxu0 0.0
    %2292 = vmatpush1.msra.mxu0 0.0
    %2293 = vmatprep.subr.mxu0 0.0
    %2294 = vmatpush1.msra.mxu0 0.0
    %2295 = vmatprep.subr.mxu0 0.0
    %2296 = vmatpush1.msra.mxu0 0.0
    %2297 = vmatprep.subr.mxu0 0.0
    %2298 = vmatpush1.msra.mxu0 0.0
    %2299 = vmatprep.mubr.f32.mxu0 0.0
    %2300 = vmatmul.mubr.f32.gmra.mrb[0].mxu0 %v2212
    %v2301 = vpop.f32.mrb[0].mxu0
    %v2302 = vadd.f32 0.0, %v2301
    %v2303 = vpop.f32.mrb[0].mxu0
    %2304 = vmatprep.mubr.f32.mxu0 0.0
    %2305 = vmatmul.mubr.f32.gmra.mrb[0].mxu0 %v2215
    %v2306 = vpop.f32.mrb[0].mxu0
    %v2307 = vadd.f32 0.0, %v2306
    %v2308 = vpop.f32.mrb[0].mxu0
    %2309 = vmatprep.mubr.f32.mxu0 0.0
    %2310 = vmatmul.mubr.f32.gmra.mrb[0].mxu0 %v2218
    %v2311 = vpop.f32.mrb[0].mxu0
    %v2312 = vadd.f32 0.0, %v2311
    %v2313 = vpop.f32.mrb[0].mxu0
    %2314 = vmatprep.mubr.f32.mxu0 0.0
    %2315 = vmatmul.mubr.f32.gmra.mrb[0].mxu0 %v2221
    %v2316 = vpop.f32.mrb[0].mxu0
    %v2317 = vadd.f32 0.0, %v2316
    %v2318 = vpop.f32.mrb[0].mxu0
    %2319 = vmatprep.mubr.f32.mxu0 0.0
    %2320 = vmatmul.mubr.f32.gmra.mrb[0].mxu0 %v2224
    %v2321 = vpop.f32.mrb[0].mxu0
    %v2322 = vadd.f32 0.0, %v2321
    %v2323 = vpop.f32.mrb[0].mxu0
    %2324 = vmatprep.mubr.f32.mxu0 0.0
    %2325 = vmatmul.mubr.f32.gmra.mrb[0].mxu0 %v2227
    %v2326 = vpop.f32.mrb[0].mxu0
    %v2327 = vadd.f32 0.0, %v2326
    %v2328 = vpop.f32.mrb[0].mxu0
    %2329 = vmatprep.mubr.f32.mxu0 0.0
    %2330 = vmatmul.mubr.f32.gmra.mrb[0].mxu0 %v2230
    %v2331 = vpop.f32.mrb[0].mxu0
    %v2332 = vadd.f32 0.0, %v2331
    %v2333 = vpop.f32.mrb[0].mxu0
    %2334 = vmatprep.mubr.f32.mxu0 0.0
    %2335 = vmatmul.mubr.f32.gmra.mrb[0].mxu0 %v2233
    %v2336 = vpop.f32.mrb[0].mxu0
    %v2337 = vadd.f32 0.0, %v2336
    %v2338 = vpop.f32.mrb[0].mxu0
    %2339 = vdwg.mxu0
    %v2340 = vadd.f32 %v847, %v2107
    %v2341 = vadd.f32 %v848, %v2108
    %v2342 = vadd.f32 %v849, %v2109
    %v2343 = vadd.f32 %v850, %v2110
    %v2344 = vadd.f32 %v851, %v2111
    %v2345 = vadd.f32 %v852, %v2112
    %v2346 = vadd.f32 %v853, %v2113
    %v2347 = vadd.f32 %v854, %v2114
    %v2348 = vsel %vm86, %v2340, -inf
    %2349 = vmax.xlane.f32.xlu0 %v2348
    %v2350 = vpop.xlane.xlu0 %2349
    %v2351 = vsel %vm86, %v2341, -inf
    %2352 = vmax.xlane.f32.xlu0 %v2351
    %v2353 = vpop.xlane.xlu0 %2352
    %v2354 = vsel %vm86, %v2342, -inf
    %2355 = vmax.xlane.f32.xlu0 %v2354
    %v2356 = vpop.xlane.xlu0 %2355
    %v2357 = vsel %vm86, %v2343, -inf
    %2358 = vmax.xlane.f32.xlu0 %v2357
    %v2359 = vpop.xlane.xlu0 %2358
    %v2360 = vsel %vm86, %v2344, -inf
    %2361 = vmax.xlane.f32.xlu0 %v2360
    %v2362 = vpop.xlane.xlu0 %2361
    %v2363 = vsel %vm86, %v2345, -inf
    %2364 = vmax.xlane.f32.xlu0 %v2363
    %v2365 = vpop.xlane.xlu0 %2364
    %v2366 = vsel %vm86, %v2346, -inf
    %2367 = vmax.xlane.f32.xlu0 %v2366
    %v2368 = vpop.xlane.xlu0 %2367
    %v2369 = vsel %vm86, %v2347, -inf
    %2370 = vmax.xlane.f32.xlu0 %v2369
    %v2371 = vpop.xlane.xlu0 %2370
    %v2372 = vsub.f32 %v2340, %v2350
    %v2373 = vsub.f32 %v2341, %v2353
    %v2374 = vsub.f32 %v2342, %v2356
    %v2375 = vsub.f32 %v2343, %v2359
    %v2376 = vsub.f32 %v2344, %v2362
    %v2377 = vsub.f32 %v2345, %v2365
    %v2378 = vsub.f32 %v2346, %v2368
    %v2379 = vsub.f32 %v2347, %v2371
    %v2380 = vmul.f32 %v2372, 1.442695
    %v2381 = vpow.pop %v2380
    %v2382 = vmul.f32 %v2373, 1.442695
    %v2383 = vpow.pop %v2382
    %v2384 = vmul.f32 %v2374, 1.442695
    %v2385 = vpow.pop %v2384
    %v2386 = vmul.f32 %v2375, 1.442695
    %v2387 = vpow.pop %v2386
    %v2388 = vmul.f32 %v2376, 1.442695
    %v2389 = vpow.pop %v2388
    %v2390 = vmul.f32 %v2377, 1.442695
    %v2391 = vpow.pop %v2390
    %v2392 = vmul.f32 %v2378, 1.442695
    %v2393 = vpow.pop %v2392
    %v2394 = vmul.f32 %v2379, 1.442695
    %v2395 = vpow.pop %v2394
    %v2396 = vsel %vm86, %v2381, 0.0
    %2397 = vadd.xlane.f32.xlu0 %v2396
    %v2398 = vpop.xlane.xlu0 %2397
    %v2399 = vsel %vm86, %v2383, 0.0
    %2400 = vadd.xlane.f32.xlu0 %v2399
    %v2401 = vpop.xlane.xlu0 %2400
    %v2402 = vsel %vm86, %v2385, 0.0
    %2403 = vadd.xlane.f32.xlu0 %v2402
    %v2404 = vpop.xlane.xlu0 %2403
    %v2405 = vsel %vm86, %v2387, 0.0
    %2406 = vadd.xlane.f32.xlu0 %v2405
    %v2407 = vpop.xlane.xlu0 %2406
    %v2408 = vsel %vm86, %v2389, 0.0
    %2409 = vadd.xlane.f32.xlu0 %v2408
    %v2410 = vpop.xlane.xlu0 %2409
    %v2411 = vsel %vm86, %v2391, 0.0
    %2412 = vadd.xlane.f32.xlu0 %v2411
    %v2413 = vpop.xlane.xlu0 %2412
    %v2414 = vsel %vm86, %v2393, 0.0
    %2415 = vadd.xlane.f32.xlu0 %v2414
    %v2416 = vpop.xlane.xlu0 %2415
    %v2417 = vsel %vm86, %v2395, 0.0
    %2418 = vadd.xlane.f32.xlu0 %v2417
    %v2419 = vpop.xlane.xlu0 %2418
    %v2420 = vrcp.pop %v2398
    %v2421 = vrcp.pop %v2401
    %v2422 = vrcp.pop %v2404
    %v2423 = vrcp.pop %v2407
    %v2424 = vrcp.pop %v2410
    %v2425 = vrcp.pop %v2413
    %v2426 = vrcp.pop %v2416
    %v2427 = vrcp.pop %v2419
    %v2428 = vmul.f32 %v2381, %v2420
    %v2429 = vmul.f32 %v2383, %v2421
    %v2430 = vmul.f32 %v2385, %v2422
    %v2431 = vmul.f32 %v2387, %v2423
    %v2432 = vmul.f32 %v2389, %v2424
    %v2433 = vmul.f32 %v2391, %v2425
    %v2434 = vmul.f32 %v2393, %v2426
    %v2435 = vmul.f32 %v2395, %v2427
    %v2437 = vsel %vm86, %v2428, 0
    %v2440 = vsel %vm86, %v2429, 0
    %v2443 = vsel %vm86, %v2430, 0
    %v2446 = vsel %vm86, %v2431, 0
    %v2449 = vsel %vm86, %v2432, 0
    %v2452 = vsel %vm86, %v2433, 0
    %v2455 = vsel %vm86, %v2434, 0
    %v2458 = vsel %vm86, %v2435, 0
    %2460 = vmatprep.subr.mxu0 0.0
    %2461 = vmatpush1.msra.mxu0 %v952
    %2462 = vmatprep.subr.mxu0 0.0
    %2463 = vmatpush1.msra.mxu0 %v954
    %2464 = vmatprep.subr.mxu0 0.0
    %2465 = vmatpush1.msra.mxu0 %v956
    %2466 = vmatprep.subr.mxu0 0.0
    %2467 = vmatpush1.msra.mxu0 %v958
    %2468 = vmatprep.subr.mxu0 0.0
    %2469 = vmatpush1.msra.mxu0 %v960
    %2470 = vmatprep.subr.mxu0 0.0
    %2471 = vmatpush1.msra.mxu0 %v962
    %2472 = vmatprep.subr.mxu0 0.0
    %2473 = vmatpush1.msra.mxu0 %v964
    %2474 = vmatprep.subr.mxu0 0.0
    %2475 = vmatpush1.msra.mxu0 %v966
    %2476 = vmatprep.subr.mxu0 0.0
    %2477 = vmatpush1.msra.mxu0 0.0
    %2478 = vmatprep.subr.mxu0 0.0
    %2479 = vmatpush1.msra.mxu0 0.0
    %2480 = vmatprep.subr.mxu0 0.0
    %2481 = vmatpush1.msra.mxu0 0.0
    %2482 = vmatprep.subr.mxu0 0.0
    %2483 = vmatpush1.msra.mxu0 0.0
    %2484 = vmatprep.subr.mxu0 0.0
    %2485 = vmatpush1.msra.mxu0 0.0
    %2486 = vmatprep.subr.mxu0 0.0
    %2487 = vmatpush1.msra.mxu0 0.0
    %2488 = vmatprep.subr.mxu0 0.0
    %2489 = vmatpush1.msra.mxu0 0.0
    %2490 = vmatprep.subr.mxu0 0.0
    %2491 = vmatpush1.msra.mxu0 0.0
    %2492 = vmatprep.subr.mxu0 0.0
    %2493 = vmatpush1.msra.mxu0 0.0
    %2494 = vmatprep.subr.mxu0 0.0
    %2495 = vmatpush1.msra.mxu0 0.0
    %2496 = vmatprep.subr.mxu0 0.0
    %2497 = vmatpush1.msra.mxu0 0.0
    %2498 = vmatprep.subr.mxu0 0.0
    %2499 = vmatpush1.msra.mxu0 0.0
    %2500 = vmatprep.subr.mxu0 0.0
    %2501 = vmatpush1.msra.mxu0 0.0
    %2502 = vmatprep.subr.mxu0 0.0
    %2503 = vmatpush1.msra.mxu0 0.0
    %2504 = vmatprep.subr.mxu0 0.0
    %2505 = vmatpush1.msra.mxu0 0.0
    %2506 = vmatprep.subr.mxu0 0.0
    %2507 = vmatpush1.msra.mxu0 0.0
    %2508 = vmatprep.subr.mxu0 0.0
    %2509 = vmatpush1.msra.mxu0 0.0
    %2510 = vmatprep.subr.mxu0 0.0
    %2511 = vmatpush1.msra.mxu0 0.0
    %2512 = vmatprep.subr.mxu0 0.0
    %2513 = vmatpush1.msra.mxu0 0.0
    %2514 = vmatprep.subr.mxu0 0.0
    %2515 = vmatpush1.msra.mxu0 0.0
    %2516 = vmatprep.subr.mxu0 0.0
    %2517 = vmatpush1.msra.mxu0 0.0
    %2518 = vmatprep.subr.mxu0 0.0
    %2519 = vmatpush1.msra.mxu0 0.0
    %2520 = vmatprep.subr.mxu0 0.0
    %2521 = vmatpush1.msra.mxu0 0.0
    %2522 = vmatprep.subr.mxu0 0.0
    %2523 = vmatpush1.msra.mxu0 0.0
    %2524 = vmatprep.mubr.f32.mxu0 0.0
    %2525 = vmatmul.mubr.f32.gmra.mrb[0].mxu0 %v2437
    %v2526 = vpop.f32.mrb[0].mxu0
    %v2527 = vadd.f32 0.0, %v2526
    %v2528 = vpop.f32.mrb[0].mxu0
    %2529 = vmatprep.mubr.f32.mxu0 0.0
    %2530 = vmatmul.mubr.f32.gmra.mrb[0].mxu0 %v2440
    %v2531 = vpop.f32.mrb[0].mxu0
    %v2532 = vadd.f32 0.0, %v2531
    %v2533 = vpop.f32.mrb[0].mxu0
    %2534 = vmatprep.mubr.f32.mxu0 0.0
    %2535 = vmatmul.mubr.f32.gmra.mrb[0].mxu0 %v2443
    %v2536 = vpop.f32.mrb[0].mxu0
    %v2537 = vadd.f32 0.0, %v2536
    %v2538 = vpop.f32.mrb[0].mxu0
    %2539 = vmatprep.mubr.f32.mxu0 0.0
    %2540 = vmatmul.mubr.f32.gmra.mrb[0].mxu0 %v2446
    %v2541 = vpop.f32.mrb[0].mxu0
    %v2542 = vadd.f32 0.0, %v2541
    %v2543 = vpop.f32.mrb[0].mxu0
    %2544 = vmatprep.mubr.f32.mxu0 0.0
    %2545 = vmatmul.mubr.f32.gmra.mrb[0].mxu0 %v2449
    %v2546 = vpop.f32.mrb[0].mxu0
    %v2547 = vadd.f32 0.0, %v2546
    %v2548 = vpop.f32.mrb[0].mxu0
    %2549 = vmatprep.mubr.f32.mxu0 0.0
    %2550 = vmatmul.mubr.f32.gmra.mrb[0].mxu0 %v2452
    %v2551 = vpop.f32.mrb[0].mxu0
    %v2552 = vadd.f32 0.0, %v2551
    %v2553 = vpop.f32.mrb[0].mxu0
    %2554 = vmatprep.mubr.f32.mxu0 0.0
    %2555 = vmatmul.mubr.f32.gmra.mrb[0].mxu0 %v2455
    %v2556 = vpop.f32.mrb[0].mxu0
    %v2557 = vadd.f32 0.0, %v2556
    %v2558 = vpop.f32.mrb[0].mxu0
    %2559 = vmatprep.mubr.f32.mxu0 0.0
    %2560 = vmatmul.mubr.f32.gmra.mrb[0].mxu0 %v2458
    %v2561 = vpop.f32.mrb[0].mxu0
    %v2562 = vadd.f32 0.0, %v2561
    %v2563 = vpop.f32.mrb[0].mxu0
    %2564 = vdwg.mxu0
    %v2565 = vadd.f32 %v1164, %v2107
    %v2566 = vadd.f32 %v1165, %v2108
    %v2567 = vadd.f32 %v1166, %v2109
    %v2568 = vadd.f32 %v1167, %v2110
    %v2569 = vadd.f32 %v1168, %v2111
    %v2570 = vadd.f32 %v1169, %v2112
    %v2571 = vadd.f32 %v1170, %v2113
    %v2572 = vadd.f32 %v1171, %v2114
    %v2573 = vsel %vm86, %v2565, -inf
    %2574 = vmax.xlane.f32.xlu0 %v2573
    %v2575 = vpop.xlane.xlu0 %2574
    %v2576 = vsel %vm86, %v2566, -inf
    %2577 = vmax.xlane.f32.xlu0 %v2576
    %v2578 = vpop.xlane.xlu0 %2577
    %v2579 = vsel %vm86, %v2567, -inf
    %2580 = vmax.xlane.f32.xlu0 %v2579
    %v2581 = vpop.xlane.xlu0 %2580
    %v2582 = vsel %vm86, %v2568, -inf
    %2583 = vmax.xlane.f32.xlu0 %v2582
    %v2584 = vpop.xlane.xlu0 %2583
    %v2585 = vsel %vm86, %v2569, -inf
    %2586 = vmax.xlane.f32.xlu0 %v2585
    %v2587 = vpop.xlane.xlu0 %2586
    %v2588 = vsel %vm86, %v2570, -inf
    %2589 = vmax.xlane.f32.xlu0 %v2588
    %v2590 = vpop.xlane.xlu0 %2589
    %v2591 = vsel %vm86, %v2571, -inf
    %2592 = vmax.xlane.f32.xlu0 %v2591
    %v2593 = vpop.xlane.xlu0 %2592
    %v2594 = vsel %vm86, %v2572, -inf
    %2595 = vmax.xlane.f32.xlu0 %v2594
    %v2596 = vpop.xlane.xlu0 %2595
    %v2597 = vsub.f32 %v2565, %v2575
    %v2598 = vsub.f32 %v2566, %v2578
    %v2599 = vsub.f32 %v2567, %v2581
    %v2600 = vsub.f32 %v2568, %v2584
    %v2601 = vsub.f32 %v2569, %v2587
    %v2602 = vsub.f32 %v2570, %v2590
    %v2603 = vsub.f32 %v2571, %v2593
    %v2604 = vsub.f32 %v2572, %v2596
    %v2605 = vmul.f32 %v2597, 1.442695
    %v2606 = vpow.pop %v2605
    %v2607 = vmul.f32 %v2598, 1.442695
    %v2608 = vpow.pop %v2607
    %v2609 = vmul.f32 %v2599, 1.442695
    %v2610 = vpow.pop %v2609
    %v2611 = vmul.f32 %v2600, 1.442695
    %v2612 = vpow.pop %v2611
    %v2613 = vmul.f32 %v2601, 1.442695
    %v2614 = vpow.pop %v2613
    %v2615 = vmul.f32 %v2602, 1.442695
    %v2616 = vpow.pop %v2615
    %v2617 = vmul.f32 %v2603, 1.442695
    %v2618 = vpow.pop %v2617
    %v2619 = vmul.f32 %v2604, 1.442695
    %v2620 = vpow.pop %v2619
    %v2621 = vsel %vm86, %v2606, 0.0
    %2622 = vadd.xlane.f32.xlu0 %v2621
    %v2623 = vpop.xlane.xlu0 %2622
    %v2624 = vsel %vm86, %v2608, 0.0
    %2625 = vadd.xlane.f32.xlu0 %v2624
    %v2626 = vpop.xlane.xlu0 %2625
    %v2627 = vsel %vm86, %v2610, 0.0
    %2628 = vadd.xlane.f32.xlu0 %v2627
    %v2629 = vpop.xlane.xlu0 %2628
    %v2630 = vsel %vm86, %v2612, 0.0
    %2631 = vadd.xlane.f32.xlu0 %v2630
    %v2632 = vpop.xlane.xlu0 %2631
    %v2633 = vsel %vm86, %v2614, 0.0
    %2634 = vadd.xlane.f32.xlu0 %v2633
    %v2635 = vpop.xlane.xlu0 %2634
    %v2636 = vsel %vm86, %v2616, 0.0
    %2637 = vadd.xlane.f32.xlu0 %v2636
    %v2638 = vpop.xlane.xlu0 %2637
    %v2639 = vsel %vm86, %v2618, 0.0
    %2640 = vadd.xlane.f32.xlu0 %v2639
    %v2641 = vpop.xlane.xlu0 %2640
    %v2642 = vsel %vm86, %v2620, 0.0
    %2643 = vadd.xlane.f32.xlu0 %v2642
    %v2644 = vpop.xlane.xlu0 %2643
    %v2645 = vrcp.pop %v2623
    %v2646 = vrcp.pop %v2626
    %v2647 = vrcp.pop %v2629
    %v2648 = vrcp.pop %v2632
    %v2649 = vrcp.pop %v2635
    %v2650 = vrcp.pop %v2638
    %v2651 = vrcp.pop %v2641
    %v2652 = vrcp.pop %v2644
    %v2653 = vmul.f32 %v2606, %v2645
    %v2654 = vmul.f32 %v2608, %v2646
    %v2655 = vmul.f32 %v2610, %v2647
    %v2656 = vmul.f32 %v2612, %v2648
    %v2657 = vmul.f32 %v2614, %v2649
    %v2658 = vmul.f32 %v2616, %v2650
    %v2659 = vmul.f32 %v2618, %v2651
    %v2660 = vmul.f32 %v2620, %v2652
    %v2662 = vsel %vm86, %v2653, 0
    %v2665 = vsel %vm86, %v2654, 0
    %v2668 = vsel %vm86, %v2655, 0
    %v2671 = vsel %vm86, %v2656, 0
    %v2674 = vsel %vm86, %v2657, 0
    %v2677 = vsel %vm86, %v2658, 0
    %v2680 = vsel %vm86, %v2659, 0
    %v2683 = vsel %vm86, %v2660, 0
    %2685 = vmatprep.subr.mxu0 0.0
    %2686 = vmatpush1.msra.mxu0 %v1269
    %2687 = vmatprep.subr.mxu0 0.0
    %2688 = vmatpush1.msra.mxu0 %v1271
    %2689 = vmatprep.subr.mxu0 0.0
    %2690 = vmatpush1.msra.mxu0 %v1273
    %2691 = vmatprep.subr.mxu0 0.0
    %2692 = vmatpush1.msra.mxu0 %v1275
    %2693 = vmatprep.subr.mxu0 0.0
    %2694 = vmatpush1.msra.mxu0 %v1277
    %2695 = vmatprep.subr.mxu0 0.0
    %2696 = vmatpush1.msra.mxu0 %v1279
    %2697 = vmatprep.subr.mxu0 0.0
    %2698 = vmatpush1.msra.mxu0 %v1281
    %2699 = vmatprep.subr.mxu0 0.0
    %2700 = vmatpush1.msra.mxu0 %v1283
    %2701 = vmatprep.subr.mxu0 0.0
    %2702 = vmatpush1.msra.mxu0 0.0
    %2703 = vmatprep.subr.mxu0 0.0
    %2704 = vmatpush1.msra.mxu0 0.0
    %2705 = vmatprep.subr.mxu0 0.0
    %2706 = vmatpush1.msra.mxu0 0.0
    %2707 = vmatprep.subr.mxu0 0.0
    %2708 = vmatpush1.msra.mxu0 0.0
    %2709 = vmatprep.subr.mxu0 0.0
    %2710 = vmatpush1.msra.mxu0 0.0
    %2711 = vmatprep.subr.mxu0 0.0
    %2712 = vmatpush1.msra.mxu0 0.0
    %2713 = vmatprep.subr.mxu0 0.0
    %2714 = vmatpush1.msra.mxu0 0.0
    %2715 = vmatprep.subr.mxu0 0.0
    %2716 = vmatpush1.msra.mxu0 0.0
    %2717 = vmatprep.subr.mxu0 0.0
    %2718 = vmatpush1.msra.mxu0 0.0
    %2719 = vmatprep.subr.mxu0 0.0
    %2720 = vmatpush1.msra.mxu0 0.0
    %2721 = vmatprep.subr.mxu0 0.0
    %2722 = vmatpush1.msra.mxu0 0.0
    %2723 = vmatprep.subr.mxu0 0.0
    %2724 = vmatpush1.msra.mxu0 0.0
    %2725 = vmatprep.subr.mxu0 0.0
    %2726 = vmatpush1.msra.mxu0 0.0
    %2727 = vmatprep.subr.mxu0 0.0
    %2728 = vmatpush1.msra.mxu0 0.0
    %2729 = vmatprep.subr.mxu0 0.0
    %2730 = vmatpush1.msra.mxu0 0.0
    %2731 = vmatprep.subr.mxu0 0.0
    %2732 = vmatpush1.msra.mxu0 0.0
    %2733 = vmatprep.subr.mxu0 0.0
    %2734 = vmatpush1.msra.mxu0 0.0
    %2735 = vmatprep.subr.mxu0 0.0
    %2736 = vmatpush1.msra.mxu0 0.0
    %2737 = vmatprep.subr.mxu0 0.0
    %2738 = vmatpush1.msra.mxu0 0.0
    %2739 = vmatprep.subr.mxu0 0.0
    %2740 = vmatpush1.msra.mxu0 0.0
    %2741 = vmatprep.subr.mxu0 0.0
    %2742 = vmatpush1.msra.mxu0 0.0
    %2743 = vmatprep.subr.mxu0 0.0
    %2744 = vmatpush1.msra.mxu0 0.0
    %2745 = vmatprep.subr.mxu0 0.0
    %2746 = vmatpush1.msra.mxu0 0.0
    %2747 = vmatprep.subr.mxu0 0.0
    %2748 = vmatpush1.msra.mxu0 0.0
    %2749 = vmatprep.mubr.f32.mxu0 0.0
    %2750 = vmatmul.mubr.f32.gmra.mrb[0].mxu0 %v2662
    %v2751 = vpop.f32.mrb[0].mxu0
    %v2752 = vadd.f32 0.0, %v2751
    %v2753 = vpop.f32.mrb[0].mxu0
    %2754 = vmatprep.mubr.f32.mxu0 0.0
    %2755 = vmatmul.mubr.f32.gmra.mrb[0].mxu0 %v2665
    %v2756 = vpop.f32.mrb[0].mxu0
    %v2757 = vadd.f32 0.0, %v2756
    %v2758 = vpop.f32.mrb[0].mxu0
    %2759 = vmatprep.mubr.f32.mxu0 0.0
    %2760 = vmatmul.mubr.f32.gmra.mrb[0].mxu0 %v2668
    %v2761 = vpop.f32.mrb[0].mxu0
    %v2762 = vadd.f32 0.0, %v2761
    %v2763 = vpop.f32.mrb[0].mxu0
    %2764 = vmatprep.mubr.f32.mxu0 0.0
    %2765 = vmatmul.mubr.f32.gmra.mrb[0].mxu0 %v2671
    %v2766 = vpop.f32.mrb[0].mxu0
    %v2767 = vadd.f32 0.0, %v2766
    %v2768 = vpop.f32.mrb[0].mxu0
    %2769 = vmatprep.mubr.f32.mxu0 0.0
    %2770 = vmatmul.mubr.f32.gmra.mrb[0].mxu0 %v2674
    %v2771 = vpop.f32.mrb[0].mxu0
    %v2772 = vadd.f32 0.0, %v2771
    %v2773 = vpop.f32.mrb[0].mxu0
    %2774 = vmatprep.mubr.f32.mxu0 0.0
    %2775 = vmatmul.mubr.f32.gmra.mrb[0].mxu0 %v2677
    %v2776 = vpop.f32.mrb[0].mxu0
    %v2777 = vadd.f32 0.0, %v2776
    %v2778 = vpop.f32.mrb[0].mxu0
    %2779 = vmatprep.mubr.f32.mxu0 0.0
    %2780 = vmatmul.mubr.f32.gmra.mrb[0].mxu0 %v2680
    %v2781 = vpop.f32.mrb[0].mxu0
    %v2782 = vadd.f32 0.0, %v2781
    %v2783 = vpop.f32.mrb[0].mxu0
    %2784 = vmatprep.mubr.f32.mxu0 0.0
    %2785 = vmatmul.mubr.f32.gmra.mrb[0].mxu0 %v2683
    %v2786 = vpop.f32.mrb[0].mxu0
    %v2787 = vadd.f32 0.0, %v2786
    %v2788 = vpop.f32.mrb[0].mxu0
    %2789 = vdwg.mxu0
    %v2790 = vadd.f32 %v1481, %v2107
    %v2791 = vadd.f32 %v1482, %v2108
    %v2792 = vadd.f32 %v1483, %v2109
    %v2793 = vadd.f32 %v1484, %v2110
    %v2794 = vadd.f32 %v1485, %v2111
    %v2795 = vadd.f32 %v1486, %v2112
    %v2796 = vadd.f32 %v1487, %v2113
    %v2797 = vadd.f32 %v1488, %v2114
    %v2798 = vsel %vm86, %v2790, -inf
    %2799 = vmax.xlane.f32.xlu0 %v2798
    %v2800 = vpop.xlane.xlu0 %2799
    %v2801 = vsel %vm86, %v2791, -inf
    %2802 = vmax.xlane.f32.xlu0 %v2801
    %v2803 = vpop.xlane.xlu0 %2802
    %v2804 = vsel %vm86, %v2792, -inf
    %2805 = vmax.xlane.f32.xlu0 %v2804
    %v2806 = vpop.xlane.xlu0 %2805
    %v2807 = vsel %vm86, %v2793, -inf
    %2808 = vmax.xlane.f32.xlu0 %v2807
    %v2809 = vpop.xlane.xlu0 %2808
    %v2810 = vsel %vm86, %v2794, -inf
    %2811 = vmax.xlane.f32.xlu0 %v2810
    %v2812 = vpop.xlane.xlu0 %2811
    %v2813 = vsel %vm86, %v2795, -inf
    %2814 = vmax.xlane.f32.xlu0 %v2813
    %v2815 = vpop.xlane.xlu0 %2814
    %v2816 = vsel %vm86, %v2796, -inf
    %2817 = vmax.xlane.f32.xlu0 %v2816
    %v2818 = vpop.xlane.xlu0 %2817
    %v2819 = vsel %vm86, %v2797, -inf
    %2820 = vmax.xlane.f32.xlu0 %v2819
    %v2821 = vpop.xlane.xlu0 %2820
    %v2822 = vsub.f32 %v2790, %v2800
    %v2823 = vsub.f32 %v2791, %v2803
    %v2824 = vsub.f32 %v2792, %v2806
    %v2825 = vsub.f32 %v2793, %v2809
    %v2826 = vsub.f32 %v2794, %v2812
    %v2827 = vsub.f32 %v2795, %v2815
    %v2828 = vsub.f32 %v2796, %v2818
    %v2829 = vsub.f32 %v2797, %v2821
    %v2830 = vmul.f32 %v2822, 1.442695
    %v2831 = vpow.pop %v2830
    %v2832 = vmul.f32 %v2823, 1.442695
    %v2833 = vpow.pop %v2832
    %v2834 = vmul.f32 %v2824, 1.442695
    %v2835 = vpow.pop %v2834
    %v2836 = vmul.f32 %v2825, 1.442695
    %v2837 = vpow.pop %v2836
    %v2838 = vmul.f32 %v2826, 1.442695
    %v2839 = vpow.pop %v2838
    %v2840 = vmul.f32 %v2827, 1.442695
    %v2841 = vpow.pop %v2840
    %v2842 = vmul.f32 %v2828, 1.442695
    %v2843 = vpow.pop %v2842
    %v2844 = vmul.f32 %v2829, 1.442695
    %v2845 = vpow.pop %v2844
    %v2846 = vsel %vm86, %v2831, 0.0
    %2847 = vadd.xlane.f32.xlu0 %v2846
    %v2848 = vpop.xlane.xlu0 %2847
    %v2849 = vsel %vm86, %v2833, 0.0
    %2850 = vadd.xlane.f32.xlu0 %v2849
    %v2851 = vpop.xlane.xlu0 %2850
    %v2852 = vsel %vm86, %v2835, 0.0
    %2853 = vadd.xlane.f32.xlu0 %v2852
    %v2854 = vpop.xlane.xlu0 %2853
    %v2855 = vsel %vm86, %v2837, 0.0
    %2856 = vadd.xlane.f32.xlu0 %v2855
    %v2857 = vpop.xlane.xlu0 %2856
    %v2858 = vsel %vm86, %v2839, 0.0
    %2859 = vadd.xlane.f32.xlu0 %v2858
    %v2860 = vpop.xlane.xlu0 %2859
    %v2861 = vsel %vm86, %v2841, 0.0
    %2862 = vadd.xlane.f32.xlu0 %v2861
    %v2863 = vpop.xlane.xlu0 %2862
    %v2864 = vsel %vm86, %v2843, 0.0
    %2865 = vadd.xlane.f32.xlu0 %v2864
    %v2866 = vpop.xlane.xlu0 %2865
    %v2867 = vsel %vm86, %v2845, 0.0
    %2868 = vadd.xlane.f32.xlu0 %v2867
    %v2869 = vpop.xlane.xlu0 %2868
    %v2870 = vrcp.pop %v2848
    %v2871 = vrcp.pop %v2851
    %v2872 = vrcp.pop %v2854
    %v2873 = vrcp.pop %v2857
    %v2874 = vrcp.pop %v2860
    %v2875 = vrcp.pop %v2863
    %v2876 = vrcp.pop %v2866
    %v2877 = vrcp.pop %v2869
    %v2878 = vmul.f32 %v2831, %v2870
    %v2879 = vmul.f32 %v2833, %v2871
    %v2880 = vmul.f32 %v2835, %v2872
    %v2881 = vmul.f32 %v2837, %v2873
    %v2882 = vmul.f32 %v2839, %v2874
    %v2883 = vmul.f32 %v2841, %v2875
    %v2884 = vmul.f32 %v2843, %v2876
    %v2885 = vmul.f32 %v2845, %v2877
    %v2887 = vsel %vm86, %v2878, 0
    %v2890 = vsel %vm86, %v2879, 0
    %v2893 = vsel %vm86, %v2880, 0
    %v2896 = vsel %vm86, %v2881, 0
    %v2899 = vsel %vm86, %v2882, 0
    %v2902 = vsel %vm86, %v2883, 0
    %v2905 = vsel %vm86, %v2884, 0
    %v2908 = vsel %vm86, %v2885, 0
    %2910 = vmatprep.subr.mxu0 0.0
    %2911 = vmatpush1.msra.mxu0 %v1586
    %2912 = vmatprep.subr.mxu0 0.0
    %2913 = vmatpush1.msra.mxu0 %v1588
    %2914 = vmatprep.subr.mxu0 0.0
    %2915 = vmatpush1.msra.mxu0 %v1590
    %2916 = vmatprep.subr.mxu0 0.0
    %2917 = vmatpush1.msra.mxu0 %v1592
    %2918 = vmatprep.subr.mxu0 0.0
    %2919 = vmatpush1.msra.mxu0 %v1594
    %2920 = vmatprep.subr.mxu0 0.0
    %2921 = vmatpush1.msra.mxu0 %v1596
    %2922 = vmatprep.subr.mxu0 0.0
    %2923 = vmatpush1.msra.mxu0 %v1598
    %2924 = vmatprep.subr.mxu0 0.0
    %2925 = vmatpush1.msra.mxu0 %v1600
    %2926 = vmatprep.subr.mxu0 0.0
    %2927 = vmatpush1.msra.mxu0 0.0
    %2928 = vmatprep.subr.mxu0 0.0
    %2929 = vmatpush1.msra.mxu0 0.0
    %2930 = vmatprep.subr.mxu0 0.0
    %2931 = vmatpush1.msra.mxu0 0.0
    %2932 = vmatprep.subr.mxu0 0.0
    %2933 = vmatpush1.msra.mxu0 0.0
    %2934 = vmatprep.subr.mxu0 0.0
    %2935 = vmatpush1.msra.mxu0 0.0
    %2936 = vmatprep.subr.mxu0 0.0
    %2937 = vmatpush1.msra.mxu0 0.0
    %2938 = vmatprep.subr.mxu0 0.0
    %2939 = vmatpush1.msra.mxu0 0.0
    %2940 = vmatprep.subr.mxu0 0.0
    %2941 = vmatpush1.msra.mxu0 0.0
    %2942 = vmatprep.subr.mxu0 0.0
    %2943 = vmatpush1.msra.mxu0 0.0
    %2944 = vmatprep.subr.mxu0 0.0
    %2945 = vmatpush1.msra.mxu0 0.0
    %2946 = vmatprep.subr.mxu0 0.0
    %2947 = vmatpush1.msra.mxu0 0.0
    %2948 = vmatprep.subr.mxu0 0.0
    %2949 = vmatpush1.msra.mxu0 0.0
    %2950 = vmatprep.subr.mxu0 0.0
    %2951 = vmatpush1.msra.mxu0 0.0
    %2952 = vmatprep.subr.mxu0 0.0
    %2953 = vmatpush1.msra.mxu0 0.0
    %2954 = vmatprep.subr.mxu0 0.0
    %2955 = vmatpush1.msra.mxu0 0.0
    %2956 = vmatprep.subr.mxu0 0.0
    %2957 = vmatpush1.msra.mxu0 0.0
    %2958 = vmatprep.subr.mxu0 0.0
    %2959 = vmatpush1.msra.mxu0 0.0
    %2960 = vmatprep.subr.mxu0 0.0
    %2961 = vmatpush1.msra.mxu0 0.0
    %2962 = vmatprep.subr.mxu0 0.0
    %2963 = vmatpush1.msra.mxu0 0.0
    %2964 = vmatprep.subr.mxu0 0.0
    %2965 = vmatpush1.msra.mxu0 0.0
    %2966 = vmatprep.subr.mxu0 0.0
    %2967 = vmatpush1.msra.mxu0 0.0
    %2968 = vmatprep.subr.mxu0 0.0
    %2969 = vmatpush1.msra.mxu0 0.0
    %2970 = vmatprep.subr.mxu0 0.0
    %2971 = vmatpush1.msra.mxu0 0.0
    %2972 = vmatprep.subr.mxu0 0.0
    %2973 = vmatpush1.msra.mxu0 0.0
    %2974 = vmatprep.mubr.f32.mxu0 0.0
    %2975 = vmatmul.mubr.f32.gmra.mrb[0].mxu0 %v2887
    %v2976 = vpop.f32.mrb[0].mxu0
    %v2977 = vadd.f32 0.0, %v2976
    %v2978 = vpop.f32.mrb[0].mxu0
    %2979 = vmatprep.mubr.f32.mxu0 0.0
    %2980 = vmatmul.mubr.f32.gmra.mrb[0].mxu0 %v2890
    %v2981 = vpop.f32.mrb[0].mxu0
    %v2982 = vadd.f32 0.0, %v2981
    %v2983 = vpop.f32.mrb[0].mxu0
    %2984 = vmatprep.mubr.f32.mxu0 0.0
    %2985 = vmatmul.mubr.f32.gmra.mrb[0].mxu0 %v2893
    %v2986 = vpop.f32.mrb[0].mxu0
    %v2987 = vadd.f32 0.0, %v2986
    %v2988 = vpop.f32.mrb[0].mxu0
    %2989 = vmatprep.mubr.f32.mxu0 0.0
    %2990 = vmatmul.mubr.f32.gmra.mrb[0].mxu0 %v2896
    %v2991 = vpop.f32.mrb[0].mxu0
    %v2992 = vadd.f32 0.0, %v2991
    %v2993 = vpop.f32.mrb[0].mxu0
    %2994 = vmatprep.mubr.f32.mxu0 0.0
    %2995 = vmatmul.mubr.f32.gmra.mrb[0].mxu0 %v2899
    %v2996 = vpop.f32.mrb[0].mxu0
    %v2997 = vadd.f32 0.0, %v2996
    %v2998 = vpop.f32.mrb[0].mxu0
    %2999 = vmatprep.mubr.f32.mxu0 0.0
    %3000 = vmatmul.mubr.f32.gmra.mrb[0].mxu0 %v2902
    %v3001 = vpop.f32.mrb[0].mxu0
    %v3002 = vadd.f32 0.0, %v3001
    %v3003 = vpop.f32.mrb[0].mxu0
    %3004 = vmatprep.mubr.f32.mxu0 0.0
    %3005 = vmatmul.mubr.f32.gmra.mrb[0].mxu0 %v2905
    %v3006 = vpop.f32.mrb[0].mxu0
    %v3007 = vadd.f32 0.0, %v3006
    %v3008 = vpop.f32.mrb[0].mxu0
    %3009 = vmatprep.mubr.f32.mxu0 0.0
    %3010 = vmatmul.mubr.f32.gmra.mrb[0].mxu0 %v2908
    %v3011 = vpop.f32.mrb[0].mxu0
    %v3012 = vadd.f32 0.0, %v3011
    %v3013 = vpop.f32.mrb[0].mxu0
    %3014 = vdwg.mxu0
    %3023 = vrot.lane.b32.xlu0 %v2527, 8
    %v3024 = vpop.permute.xlu0 %3023
    %3025 = vrot.lane.b32.xlu0 %v2532, 8
    %v3026 = vpop.permute.xlu0 %3025
    %3027 = vrot.lane.b32.xlu0 %v2537, 8
    %v3028 = vpop.permute.xlu0 %3027
    %3029 = vrot.lane.b32.xlu0 %v2542, 8
    %v3030 = vpop.permute.xlu0 %3029
    %3031 = vrot.lane.b32.xlu0 %v2547, 8
    %v3032 = vpop.permute.xlu0 %3031
    %3033 = vrot.lane.b32.xlu0 %v2552, 8
    %v3034 = vpop.permute.xlu0 %3033
    %3035 = vrot.lane.b32.xlu0 %v2557, 8
    %v3036 = vpop.permute.xlu0 %3035
    %3037 = vrot.lane.b32.xlu0 %v2562, 8
    %v3038 = vpop.permute.xlu0 %3037
    %3055 = vrot.lane.b32.xlu0 %v2752, 16
    %v3056 = vpop.permute.xlu0 %3055
    %3057 = vrot.lane.b32.xlu0 %v2757, 16
    %v3058 = vpop.permute.xlu0 %3057
    %3059 = vrot.lane.b32.xlu0 %v2762, 16
    %v3060 = vpop.permute.xlu0 %3059
    %3061 = vrot.lane.b32.xlu0 %v2767, 16
    %v3062 = vpop.permute.xlu0 %3061
    %3063 = vrot.lane.b32.xlu0 %v2772, 16
    %v3064 = vpop.permute.xlu0 %3063
    %3065 = vrot.lane.b32.xlu0 %v2777, 16
    %v3066 = vpop.permute.xlu0 %3065
    %3067 = vrot.lane.b32.xlu0 %v2782, 16
    %v3068 = vpop.permute.xlu0 %3067
    %3069 = vrot.lane.b32.xlu0 %v2787, 16
    %v3070 = vpop.permute.xlu0 %3069
    %3087 = vrot.lane.b32.xlu0 %v2977, 24
    %v3088 = vpop.permute.xlu0 %3087
    %3089 = vrot.lane.b32.xlu0 %v2982, 24
    %v3090 = vpop.permute.xlu0 %3089
    %3091 = vrot.lane.b32.xlu0 %v2987, 24
    %v3092 = vpop.permute.xlu0 %3091
    %3093 = vrot.lane.b32.xlu0 %v2992, 24
    %v3094 = vpop.permute.xlu0 %3093
    %3095 = vrot.lane.b32.xlu0 %v2997, 24
    %v3096 = vpop.permute.xlu0 %3095
    %3097 = vrot.lane.b32.xlu0 %v3002, 24
    %v3098 = vpop.permute.xlu0 %3097
    %3099 = vrot.lane.b32.xlu0 %v3007, 24
    %v3100 = vpop.permute.xlu0 %3099
    %3101 = vrot.lane.b32.xlu0 %v3012, 24
    %v3102 = vpop.permute.xlu0 %3101
    %v3111 = vsel %vm1834, %v2302, %v3024
    %v3112 = vsel %vm1834, %v2307, %v3026
    %v3113 = vsel %vm1834, %v2312, %v3028
    %v3114 = vsel %vm1834, %v2317, %v3030
    %v3115 = vsel %vm1834, %v2322, %v3032
    %v3116 = vsel %vm1834, %v2327, %v3034
    %v3117 = vsel %vm1834, %v2332, %v3036
    %v3118 = vsel %vm1834, %v2337, %v3038
    %v3119 = vsel %vm1843, %v3111, %v3056
    %v3120 = vsel %vm1843, %v3112, %v3058
    %v3121 = vsel %vm1843, %v3113, %v3060
    %v3122 = vsel %vm1843, %v3114, %v3062
    %v3123 = vsel %vm1843, %v3115, %v3064
    %v3124 = vsel %vm1843, %v3116, %v3066
    %v3125 = vsel %vm1843, %v3117, %v3068
    %v3126 = vsel %vm1843, %v3118, %v3070
    %v3127 = vsel %vm1852, %v3119, %v3088
    %v3128 = vsel %vm1852, %v3120, %v3090
    %v3129 = vsel %vm1852, %v3121, %v3092
    %v3130 = vsel %vm1852, %v3122, %v3094
    %v3131 = vsel %vm1852, %v3123, %v3096
    %v3132 = vsel %vm1852, %v3124, %v3098
    %v3133 = vsel %vm1852, %v3125, %v3100
    %v3134 = vsel %vm1852, %v3126, %v3102
    %v3135 = vadd.f32 %v3127, %v1865
    %v3136 = vadd.f32 %v3128, %v1865
    %v3137 = vadd.f32 %v3129, %v1865
    %v3138 = vadd.f32 %v3130, %v1865
    %v3139 = vadd.f32 %v3131, %v1865
    %v3140 = vadd.f32 %v3132, %v1865
    %v3141 = vadd.f32 %v3133, %v1865
    %v3142 = vadd.f32 %v3134, %v1865
    %vm3143 = vcmp.gt.f32.partialorder %v3135, 0.0
    %vm3144 = vcmp.gt.f32.partialorder %v3136, 0.0
    %vm3145 = vcmp.gt.f32.partialorder %v3137, 0.0
    %vm3146 = vcmp.gt.f32.partialorder %v3138, 0.0
    %vm3147 = vcmp.gt.f32.partialorder %v3139, 0.0
    %vm3148 = vcmp.gt.f32.partialorder %v3140, 0.0
    %vm3149 = vcmp.gt.f32.partialorder %v3141, 0.0
    %vm3150 = vcmp.gt.f32.partialorder %v3142, 0.0
    %v3151 = vmin.f32 %v3135, 0.0
    %v3152 = vmin.f32 %v3136, 0.0
    %v3153 = vmin.f32 %v3137, 0.0
    %v3154 = vmin.f32 %v3138, 0.0
    %v3155 = vmin.f32 %v3139, 0.0
    %v3156 = vmin.f32 %v3140, 0.0
    %v3157 = vmin.f32 %v3141, 0.0
    %v3158 = vmin.f32 %v3142, 0.0
    %v3159 = vmul.f32 %v3151, 1.442695
    %v3160 = vpow.pop %v3159
    %v3161 = vmul.f32 %v3152, 1.442695
    %v3162 = vpow.pop %v3161
    %v3163 = vmul.f32 %v3153, 1.442695
    %v3164 = vpow.pop %v3163
    %v3165 = vmul.f32 %v3154, 1.442695
    %v3166 = vpow.pop %v3165
    %v3167 = vmul.f32 %v3155, 1.442695
    %v3168 = vpow.pop %v3167
    %v3169 = vmul.f32 %v3156, 1.442695
    %v3170 = vpow.pop %v3169
    %v3171 = vmul.f32 %v3157, 1.442695
    %v3172 = vpow.pop %v3171
    %v3173 = vmul.f32 %v3158, 1.442695
    %v3174 = vpow.pop %v3173
    %v3175 = vsub.f32 %v3160, 1.0
    %v3176 = vsub.f32 %v3162, 1.0
    %v3177 = vsub.f32 %v3164, 1.0
    %v3178 = vsub.f32 %v3166, 1.0
    %v3179 = vsub.f32 %v3168, 1.0
    %v3180 = vsub.f32 %v3170, 1.0
    %v3181 = vsub.f32 %v3172, 1.0
    %v3182 = vsub.f32 %v3174, 1.0
    %v3183 = vsel %vm3143, %v3135, %v3175
    %v3184 = vsel %vm3144, %v3136, %v3176
    %v3185 = vsel %vm3145, %v3137, %v3177
    %v3186 = vsel %vm3146, %v3138, %v3178
    %v3187 = vsel %vm3147, %v3139, %v3179
    %v3188 = vsel %vm3148, %v3140, %v3180
    %v3189 = vsel %vm3149, %v3141, %v3181
    %v3190 = vsel %vm3150, %v3142, %v3182
    %v3192 = vsel %vm220, %v3183, 0
    %v3195 = vsel %vm220, %v3184, 0
    %v3198 = vsel %vm220, %v3185, 0
    %v3201 = vsel %vm220, %v3186, 0
    %v3204 = vsel %vm220, %v3187, 0
    %v3207 = vsel %vm220, %v3188, 0
    %v3210 = vsel %vm220, %v3189, 0
    %v3213 = vsel %vm220, %v3190, 0
    %3215 = vmatprep.subr.mxu0 0.0
    %3216 = vmatpush1.msra.mxu0 %v474
    %3217 = vmatprep.subr.mxu0 0.0
    %3218 = vmatpush1.msra.mxu0 %v475
    %3219 = vmatprep.subr.mxu0 0.0
    %3220 = vmatpush1.msra.mxu0 %v476
    %3221 = vmatprep.subr.mxu0 0.0
    %3222 = vmatpush1.msra.mxu0 %v477
    %3223 = vmatprep.subr.mxu0 0.0
    %3224 = vmatpush1.msra.mxu0 0.0
    %3225 = vmatprep.subr.mxu0 0.0
    %3226 = vmatpush1.msra.mxu0 0.0
    %3227 = vmatprep.subr.mxu0 0.0
    %3228 = vmatpush1.msra.mxu0 0.0
    %3229 = vmatprep.subr.mxu0 0.0
    %3230 = vmatpush1.msra.mxu0 0.0
    %3231 = vmatprep.subr.mxu0 0.0
    %3232 = vmatpush1.msra.mxu0 0.0
    %3233 = vmatprep.subr.mxu0 0.0
    %3234 = vmatpush1.msra.mxu0 0.0
    %3235 = vmatprep.subr.mxu0 0.0
    %3236 = vmatpush1.msra.mxu0 0.0
    %3237 = vmatprep.subr.mxu0 0.0
    %3238 = vmatpush1.msra.mxu0 0.0
    %3239 = vmatprep.subr.mxu0 0.0
    %3240 = vmatpush1.msra.mxu0 0.0
    %3241 = vmatprep.subr.mxu0 0.0
    %3242 = vmatpush1.msra.mxu0 0.0
    %3243 = vmatprep.subr.mxu0 0.0
    %3244 = vmatpush1.msra.mxu0 0.0
    %3245 = vmatprep.subr.mxu0 0.0
    %3246 = vmatpush1.msra.mxu0 0.0
    %3247 = vmatprep.subr.mxu0 0.0
    %3248 = vmatpush1.msra.mxu0 0.0
    %3249 = vmatprep.subr.mxu0 0.0
    %3250 = vmatpush1.msra.mxu0 0.0
    %3251 = vmatprep.subr.mxu0 0.0
    %3252 = vmatpush1.msra.mxu0 0.0
    %3253 = vmatprep.subr.mxu0 0.0
    %3254 = vmatpush1.msra.mxu0 0.0
    %3255 = vmatprep.subr.mxu0 0.0
    %3256 = vmatpush1.msra.mxu0 0.0
    %3257 = vmatprep.subr.mxu0 0.0
    %3258 = vmatpush1.msra.mxu0 0.0
    %3259 = vmatprep.subr.mxu0 0.0
    %3260 = vmatpush1.msra.mxu0 0.0
    %3261 = vmatprep.subr.mxu0 0.0
    %3262 = vmatpush1.msra.mxu0 0.0
    %3263 = vmatprep.subr.mxu0 0.0
    %3264 = vmatpush1.msra.mxu0 0.0
    %3265 = vmatprep.subr.mxu0 0.0
    %3266 = vmatpush1.msra.mxu0 0.0
    %3267 = vmatprep.subr.mxu0 0.0
    %3268 = vmatpush1.msra.mxu0 0.0
    %3269 = vmatprep.subr.mxu0 0.0
    %3270 = vmatpush1.msra.mxu0 0.0
    %3271 = vmatprep.subr.mxu0 0.0
    %3272 = vmatpush1.msra.mxu0 0.0
    %3273 = vmatprep.subr.mxu0 0.0
    %3274 = vmatpush1.msra.mxu0 0.0
    %3275 = vmatprep.subr.mxu0 0.0
    %3276 = vmatpush1.msra.mxu0 0.0
    %3277 = vmatprep.subr.mxu0 0.0
    %3278 = vmatpush1.msra.mxu0 0.0
    %3279 = vmatprep.mubr.f32.mxu0 0.0
    %3280 = vmatmul.mubr.f32.gmra.mrb[0].mxu0 %v3192
    %v3281 = vpop.f32.mrb[0].mxu0
    %v3282 = vadd.f32 %v1926, %v3281
    %v3283 = vpop.f32.mrb[0].mxu0
    %3284 = vmatprep.mubr.f32.mxu0 0.0
    %3285 = vmatmul.mubr.f32.gmra.mrb[0].mxu0 %v3195
    %v3286 = vpop.f32.mrb[0].mxu0
    %v3287 = vadd.f32 %v1926, %v3286
    %v3288 = vpop.f32.mrb[0].mxu0
    %3289 = vmatprep.mubr.f32.mxu0 0.0
    %3290 = vmatmul.mubr.f32.gmra.mrb[0].mxu0 %v3198
    %v3291 = vpop.f32.mrb[0].mxu0
    %v3292 = vadd.f32 %v1926, %v3291
    %v3293 = vpop.f32.mrb[0].mxu0
    %3294 = vmatprep.mubr.f32.mxu0 0.0
    %3295 = vmatmul.mubr.f32.gmra.mrb[0].mxu0 %v3201
    %v3296 = vpop.f32.mrb[0].mxu0
    %v3297 = vadd.f32 %v1926, %v3296
    %v3298 = vpop.f32.mrb[0].mxu0
    %3299 = vmatprep.mubr.f32.mxu0 0.0
    %3300 = vmatmul.mubr.f32.gmra.mrb[0].mxu0 %v3204
    %v3301 = vpop.f32.mrb[0].mxu0
    %v3302 = vadd.f32 %v1926, %v3301
    %v3303 = vpop.f32.mrb[0].mxu0
    %3304 = vmatprep.mubr.f32.mxu0 0.0
    %3305 = vmatmul.mubr.f32.gmra.mrb[0].mxu0 %v3207
    %v3306 = vpop.f32.mrb[0].mxu0
    %v3307 = vadd.f32 %v1926, %v3306
    %v3308 = vpop.f32.mrb[0].mxu0
    %3309 = vmatprep.mubr.f32.mxu0 0.0
    %3310 = vmatmul.mubr.f32.gmra.mrb[0].mxu0 %v3210
    %v3311 = vpop.f32.mrb[0].mxu0
    %v3312 = vadd.f32 %v1926, %v3311
    %v3313 = vpop.f32.mrb[0].mxu0
    %3314 = vmatprep.mubr.f32.mxu0 0.0
    %3315 = vmatmul.mubr.f32.gmra.mrb[0].mxu0 %v3213
    %v3316 = vpop.f32.mrb[0].mxu0
    %v3317 = vadd.f32 %v1926, %v3316
    %v3318 = vpop.f32.mrb[0].mxu0
    %3319 = vdwg.mxu0
    %v3320 = vtanh.pop %v3282
    %v3321 = vtanh.pop %v3287
    %v3322 = vtanh.pop %v3292
    %v3323 = vtanh.pop %v3297
    %v3324 = vtanh.pop %v3302
    %v3325 = vtanh.pop %v3307
    %v3326 = vtanh.pop %v3312
    %v3327 = vtanh.pop %v3317
    %v3328 = vmul.f32 %v3320, %v2067
    %v3329 = vmul.f32 %v3321, %v2067
    %v3330 = vmul.f32 %v3322, %v2067
    %v3331 = vmul.f32 %v3323, %v2067
    %v3332 = vmul.f32 %v3324, %v2067
    %v3333 = vmul.f32 %v3325, %v2067
    %v3334 = vmul.f32 %v3326, %v2067
    %v3335 = vmul.f32 %v3327, %v2067
    %3336 = vadd.xlane.f32.xlu0 %v3328
    %v3337 = vpop.xlane.xlu0 %3336
    %3338 = vadd.xlane.f32.xlu0 %v3329
    %v3339 = vpop.xlane.xlu0 %3338
    %3340 = vadd.xlane.f32.xlu0 %v3330
    %v3341 = vpop.xlane.xlu0 %3340
    %3342 = vadd.xlane.f32.xlu0 %v3331
    %v3343 = vpop.xlane.xlu0 %3342
    %3344 = vadd.xlane.f32.xlu0 %v3332
    %v3345 = vpop.xlane.xlu0 %3344
    %3346 = vadd.xlane.f32.xlu0 %v3333
    %v3347 = vpop.xlane.xlu0 %3346
    %3348 = vadd.xlane.f32.xlu0 %v3334
    %v3349 = vpop.xlane.xlu0 %3348
    %3350 = vadd.xlane.f32.xlu0 %v3335
    %v3351 = vpop.xlane.xlu0 %3350
    %v3352 = vadd.f32 %v3337, %v3339
    %v3353 = vadd.f32 %v3352, %v3341
    %v3354 = vadd.f32 %v3353, %v3343
    %v3355 = vadd.f32 %v3354, %v3345
    %v3356 = vadd.f32 %v3355, %v3347
    %v3357 = vadd.f32 %v3356, %v3349
    %v3358 = vadd.f32 %v3357, %v3351
    %v3359 = vrot.slane %v3358, 4
    %v3360 = vadd.f32 %v3358, %v3359
    %v3361 = vrot.slane %v3360, 2
    %v3362 = vadd.f32 %v3360, %v3361
    %v3363 = vrot.slane %v3362, 1
    %v3364 = vadd.f32 %v3362, %v3363
    %v3365 = vmul.f32 %v3364, 0.015625
    %v3366 = vmax.f32 %v2105, %v3365
    %v3367 = vsub.f32 %v2105, %v3366
    %v3368 = vmul.f32 %v3367, 1.442695
    %v3369 = vpow.pop %v3368
    %v3370 = vsub.f32 %v3365, %v3366
    %v3371 = vmul.f32 %v3370, 1.442695
    %v3372 = vpow.pop %v3371
    %v3373 = vadd.f32 %v3369, %v3372
    %v3374 = vrcp.pop %v3373
    %v3375 = vmul.f32 %v3369, %v3374
    %v3376 = vmul.f32 %v1915, %v3375
    %v3377 = vmul.f32 %v1916, %v3375
    %v3378 = vmul.f32 %v1917, %v3375
    %v3379 = vmul.f32 %v1918, %v3375
    %v3380 = vmul.f32 %v1919, %v3375
    %v3381 = vmul.f32 %v1920, %v3375
    %v3382 = vmul.f32 %v1921, %v3375
    %v3383 = vmul.f32 %v1922, %v3375
    %v3384 = vmul.f32 %v3372, %v3374
    %v3385 = vmul.f32 %v3183, %v3384
    %v3386 = vmul.f32 %v3184, %v3384
    %v3387 = vmul.f32 %v3185, %v3384
    %v3388 = vmul.f32 %v3186, %v3384
    %v3389 = vmul.f32 %v3187, %v3384
    %v3390 = vmul.f32 %v3188, %v3384
    %v3391 = vmul.f32 %v3189, %v3384
    %v3392 = vmul.f32 %v3190, %v3384
    %v3393 = vadd.f32 %v3376, %v3385
    %v3394 = vadd.f32 %v3377, %v3386
    %v3395 = vadd.f32 %v3378, %v3387
    %v3396 = vadd.f32 %v3379, %v3388
    %v3397 = vadd.f32 %v3380, %v3389
    %v3398 = vadd.f32 %v3381, %v3390
    %v3399 = vadd.f32 %v3382, %v3391
    %v3400 = vadd.f32 %v3383, %v3392
    %v3401 = vld [vmem:[#allocation5] sm:$0xff]
    %v3402 = vld [vmem:[#allocation5 + $0x8] sm:$0xff]
    %v3403 = vld [vmem:[#allocation5 + $0x10] sm:$0xff]
    %v3404 = vld [vmem:[#allocation5 + $0x18] sm:$0xff]
    %v3405 = vld [vmem:[#allocation5 + $0x20] sm:$0xff]
    %v3406 = vld [vmem:[#allocation5 + $0x28] sm:$0xff]
    %v3407 = vld [vmem:[#allocation5 + $0x30] sm:$0xff]
    %v3408 = vld [vmem:[#allocation5 + $0x38] sm:$0xff]
    %v3410 = vsel %vm220, %v3393, 0
    %v3413 = vsel %vm220, %v3394, 0
    %v3416 = vsel %vm220, %v3395, 0
    %v3419 = vsel %vm220, %v3396, 0
    %v3422 = vsel %vm220, %v3397, 0
    %v3425 = vsel %vm220, %v3398, 0
    %v3428 = vsel %vm220, %v3399, 0
    %v3431 = vsel %vm220, %v3400, 0
    %3433 = vmatprep.subr.mxu0 %v3402
    %3434 = vmatpush1.msra.mxu0 %v3401
    %3435 = vmatprep.subr.mxu0 %v3404
    %3436 = vmatpush1.msra.mxu0 %v3403
    %3437 = vmatprep.subr.mxu0 %v3406
    %3438 = vmatpush1.msra.mxu0 %v3405
    %3439 = vmatprep.subr.mxu0 %v3408
    %3440 = vmatpush1.msra.mxu0 %v3407
    %3441 = vmatprep.subr.mxu0 0.0
    %3442 = vmatpush1.msra.mxu0 0.0
    %3443 = vmatprep.subr.mxu0 0.0
    %3444 = vmatpush1.msra.mxu0 0.0
    %3445 = vmatprep.subr.mxu0 0.0
    %3446 = vmatpush1.msra.mxu0 0.0
    %3447 = vmatprep.subr.mxu0 0.0
    %3448 = vmatpush1.msra.mxu0 0.0
    %3449 = vmatprep.subr.mxu0 0.0
    %3450 = vmatpush1.msra.mxu0 0.0
    %3451 = vmatprep.subr.mxu0 0.0
    %3452 = vmatpush1.msra.mxu0 0.0
    %3453 = vmatprep.subr.mxu0 0.0
    %3454 = vmatpush1.msra.mxu0 0.0
    %3455 = vmatprep.subr.mxu0 0.0
    %3456 = vmatpush1.msra.mxu0 0.0
    %3457 = vmatprep.subr.mxu0 0.0
    %3458 = vmatpush1.msra.mxu0 0.0
    %3459 = vmatprep.subr.mxu0 0.0
    %3460 = vmatpush1.msra.mxu0 0.0
    %3461 = vmatprep.subr.mxu0 0.0
    %3462 = vmatpush1.msra.mxu0 0.0
    %3463 = vmatprep.subr.mxu0 0.0
    %3464 = vmatpush1.msra.mxu0 0.0
    %3465 = vmatprep.subr.mxu0 0.0
    %3466 = vmatpush1.msra.mxu0 0.0
    %3467 = vmatprep.subr.mxu0 0.0
    %3468 = vmatpush1.msra.mxu0 0.0
    %3469 = vmatprep.subr.mxu0 0.0
    %3470 = vmatpush1.msra.mxu0 0.0
    %3471 = vmatprep.subr.mxu0 0.0
    %3472 = vmatpush1.msra.mxu0 0.0
    %3473 = vmatprep.subr.mxu0 0.0
    %3474 = vmatpush1.msra.mxu0 0.0
    %3475 = vmatprep.subr.mxu0 0.0
    %3476 = vmatpush1.msra.mxu0 0.0
    %3477 = vmatprep.subr.mxu0 0.0
    %3478 = vmatpush1.msra.mxu0 0.0
    %3479 = vmatprep.subr.mxu0 0.0
    %3480 = vmatpush1.msra.mxu0 0.0
    %3481 = vmatprep.subr.mxu0 0.0
    %3482 = vmatpush1.msra.mxu0 0.0
    %3483 = vmatprep.subr.mxu0 0.0
    %3484 = vmatpush1.msra.mxu0 0.0
    %3485 = vmatprep.subr.mxu0 0.0
    %3486 = vmatpush1.msra.mxu0 0.0
    %3487 = vmatprep.subr.mxu0 0.0
    %3488 = vmatpush1.msra.mxu0 0.0
    %3489 = vmatprep.subr.mxu0 0.0
    %3490 = vmatpush1.msra.mxu0 0.0
    %3491 = vmatprep.subr.mxu0 0.0
    %3492 = vmatpush1.msra.mxu0 0.0
    %3493 = vmatprep.subr.mxu0 0.0
    %3494 = vmatpush1.msra.mxu0 0.0
    %3495 = vmatprep.subr.mxu0 0.0
    %3496 = vmatpush1.msra.mxu0 0.0
    %3497 = vmatprep.mubr.f32.mxu0 0.0
    %3498 = vmatmul.mubr.f32.gmra.mrb[0].mxu0 %v3410
    %v3499 = vpop.f32.mrb[0].mxu0
    %v3500 = vadd.f32 0.0, %v3499
    %v3501 = vpop.f32.mrb[0].mxu0
    %v3502 = vadd.f32 0.0, %v3501
    %3503 = vmatprep.mubr.f32.mxu0 0.0
    %3504 = vmatmul.mubr.f32.gmra.mrb[0].mxu0 %v3413
    %v3505 = vpop.f32.mrb[0].mxu0
    %v3506 = vadd.f32 0.0, %v3505
    %v3507 = vpop.f32.mrb[0].mxu0
    %v3508 = vadd.f32 0.0, %v3507
    %3509 = vmatprep.mubr.f32.mxu0 0.0
    %3510 = vmatmul.mubr.f32.gmra.mrb[0].mxu0 %v3416
    %v3511 = vpop.f32.mrb[0].mxu0
    %v3512 = vadd.f32 0.0, %v3511
    %v3513 = vpop.f32.mrb[0].mxu0
    %v3514 = vadd.f32 0.0, %v3513
    %3515 = vmatprep.mubr.f32.mxu0 0.0
    %3516 = vmatmul.mubr.f32.gmra.mrb[0].mxu0 %v3419
    %v3517 = vpop.f32.mrb[0].mxu0
    %v3518 = vadd.f32 0.0, %v3517
    %v3519 = vpop.f32.mrb[0].mxu0
    %v3520 = vadd.f32 0.0, %v3519
    %3521 = vmatprep.mubr.f32.mxu0 0.0
    %3522 = vmatmul.mubr.f32.gmra.mrb[0].mxu0 %v3422
    %v3523 = vpop.f32.mrb[0].mxu0
    %v3524 = vadd.f32 0.0, %v3523
    %v3525 = vpop.f32.mrb[0].mxu0
    %v3526 = vadd.f32 0.0, %v3525
    %3527 = vmatprep.mubr.f32.mxu0 0.0
    %3528 = vmatmul.mubr.f32.gmra.mrb[0].mxu0 %v3425
    %v3529 = vpop.f32.mrb[0].mxu0
    %v3530 = vadd.f32 0.0, %v3529
    %v3531 = vpop.f32.mrb[0].mxu0
    %v3532 = vadd.f32 0.0, %v3531
    %3533 = vmatprep.mubr.f32.mxu0 0.0
    %3534 = vmatmul.mubr.f32.gmra.mrb[0].mxu0 %v3428
    %v3535 = vpop.f32.mrb[0].mxu0
    %v3536 = vadd.f32 0.0, %v3535
    %v3537 = vpop.f32.mrb[0].mxu0
    %v3538 = vadd.f32 0.0, %v3537
    %3539 = vmatprep.mubr.f32.mxu0 0.0
    %3540 = vmatmul.mubr.f32.gmra.mrb[0].mxu0 %v3431
    %v3541 = vpop.f32.mrb[0].mxu0
    %v3542 = vadd.f32 0.0, %v3541
    %v3543 = vpop.f32.mrb[0].mxu0
    %v3544 = vadd.f32 0.0, %v3543
    %3545 = vdwg.mxu0
    %v3546 = vld [vmem:[%s8] sm:$0xff]
    %v3547 = vld [vmem:[%s8 + $0x8] sm:$0xff]
    %v3548 = vld [vmem:[%s8 + $0x10] sm:$0xff]
    %v3549 = vld [vmem:[%s8 + $0x18] sm:$0xff]
    %v3550 = vld [vmem:[%s8 + $0x20] sm:$0xff]
    %v3551 = vld [vmem:[%s8 + $0x28] sm:$0xff]
    %v3552 = vld [vmem:[%s8 + $0x30] sm:$0xff]
    %v3553 = vld [vmem:[%s8 + $0x38] sm:$0xff]
    %v3554 = vld [vmem:[%s8 + $0x40] sm:$0xff]
    %v3555 = vld [vmem:[%s8 + $0x48] sm:$0xff]
    %v3556 = vld [vmem:[%s8 + $0x50] sm:$0xff]
    %v3557 = vld [vmem:[%s8 + $0x58] sm:$0xff]
    %v3558 = vld [vmem:[%s8 + $0x60] sm:$0xff]
    %v3559 = vld [vmem:[%s8 + $0x68] sm:$0xff]
    %v3560 = vld [vmem:[%s8 + $0x70] sm:$0xff]
    %v3561 = vld [vmem:[%s8 + $0x78] sm:$0xff]
    %v3562 = vld [vmem:[%s8 + $0x80] sm:$0xff]
    %v3563 = vld [vmem:[%s8 + $0x88] sm:$0xff]
    %v3564 = vld [vmem:[%s8 + $0x90] sm:$0xff]
    %v3565 = vld [vmem:[%s8 + $0x98] sm:$0xff]
    %v3566 = vld [vmem:[%s8 + $0xa0] sm:$0xff]
    %v3567 = vld [vmem:[%s8 + $0xa8] sm:$0xff]
    %v3568 = vld [vmem:[%s8 + $0xb0] sm:$0xff]
    %v3569 = vld [vmem:[%s8 + $0xb8] sm:$0xff]
    %v3570 = vld [vmem:[%s8 + $0xc0] sm:$0xff]
    %v3571 = vld [vmem:[%s8 + $0xc8] sm:$0xff]
    %v3572 = vld [vmem:[%s8 + $0xd0] sm:$0xff]
    %v3573 = vld [vmem:[%s8 + $0xd8] sm:$0xff]
    %v3574 = vld [vmem:[%s8 + $0xe0] sm:$0xff]
    %v3575 = vld [vmem:[%s8 + $0xe8] sm:$0xff]
    %v3576 = vld [vmem:[%s8 + $0xf0] sm:$0xff]
    %v3577 = vld [vmem:[%s8 + $0xf8] sm:$0xff]
    %3578 = vmatprep.subr.mxu0 0.0
    %3579 = vmatpush1.msra.mxu0 %v3546
    %3580 = vmatprep.subr.mxu0 0.0
    %3581 = vmatpush1.msra.mxu0 %v3547
    %3582 = vmatprep.subr.mxu0 0.0
    %3583 = vmatpush1.msra.mxu0 %v3548
    %3584 = vmatprep.subr.mxu0 0.0
    %3585 = vmatpush1.msra.mxu0 %v3549
    %3586 = vmatprep.subr.mxu0 0.0
    %3587 = vmatpush1.msra.mxu0 %v3550
    %3588 = vmatprep.subr.mxu0 0.0
    %3589 = vmatpush1.msra.mxu0 %v3551
    %3590 = vmatprep.subr.mxu0 0.0
    %3591 = vmatpush1.msra.mxu0 %v3552
    %3592 = vmatprep.subr.mxu0 0.0
    %3593 = vmatpush1.msra.mxu0 %v3553
    %3594 = vmatprep.subr.mxu0 0.0
    %3595 = vmatpush1.msra.mxu0 %v3554
    %3596 = vmatprep.subr.mxu0 0.0
    %3597 = vmatpush1.msra.mxu0 %v3555
    %3598 = vmatprep.subr.mxu0 0.0
    %3599 = vmatpush1.msra.mxu0 %v3556
    %3600 = vmatprep.subr.mxu0 0.0
    %3601 = vmatpush1.msra.mxu0 %v3557
    %3602 = vmatprep.subr.mxu0 0.0
    %3603 = vmatpush1.msra.mxu0 %v3558
    %3604 = vmatprep.subr.mxu0 0.0
    %3605 = vmatpush1.msra.mxu0 %v3559
    %3606 = vmatprep.subr.mxu0 0.0
    %3607 = vmatpush1.msra.mxu0 %v3560
    %3608 = vmatprep.subr.mxu0 0.0
    %3609 = vmatpush1.msra.mxu0 %v3561
    %3610 = vmatprep.subr.mxu0 0.0
    %3611 = vmatpush1.msra.mxu0 %v3562
    %3612 = vmatprep.subr.mxu0 0.0
    %3613 = vmatpush1.msra.mxu0 %v3563
    %3614 = vmatprep.subr.mxu0 0.0
    %3615 = vmatpush1.msra.mxu0 %v3564
    %3616 = vmatprep.subr.mxu0 0.0
    %3617 = vmatpush1.msra.mxu0 %v3565
    %3618 = vmatprep.subr.mxu0 0.0
    %3619 = vmatpush1.msra.mxu0 %v3566
    %3620 = vmatprep.subr.mxu0 0.0
    %3621 = vmatpush1.msra.mxu0 %v3567
    %3622 = vmatprep.subr.mxu0 0.0
    %3623 = vmatpush1.msra.mxu0 %v3568
    %3624 = vmatprep.subr.mxu0 0.0
    %3625 = vmatpush1.msra.mxu0 %v3569
    %3626 = vmatprep.subr.mxu0 0.0
    %3627 = vmatpush1.msra.mxu0 %v3570
    %3628 = vmatprep.subr.mxu0 0.0
    %3629 = vmatpush1.msra.mxu0 %v3571
    %3630 = vmatprep.subr.mxu0 0.0
    %3631 = vmatpush1.msra.mxu0 %v3572
    %3632 = vmatprep.subr.mxu0 0.0
    %3633 = vmatpush1.msra.mxu0 %v3573
    %3634 = vmatprep.subr.mxu0 0.0
    %3635 = vmatpush1.msra.mxu0 %v3574
    %3636 = vmatprep.subr.mxu0 0.0
    %3637 = vmatpush1.msra.mxu0 %v3575
    %3638 = vmatprep.subr.mxu0 0.0
    %3639 = vmatpush1.msra.mxu0 %v3576
    %3640 = vmatprep.subr.mxu0 0.0
    %3641 = vmatpush1.msra.mxu0 %v3577
    %3642 = vmatprep.mubr.f32.mxu0 %v3502
    %3643 = vmatmul.mubr.f32.gmra.mrb[0].mxu0 %v3500
    %v3644 = vpop.f32.mrb[0].mxu0
    %v3645 = vadd.f32 0.0, %v3644
    %v3646 = vpop.f32.mrb[0].mxu0
    %3647 = vmatprep.mubr.f32.mxu0 %v3508
    %3648 = vmatmul.mubr.f32.gmra.mrb[0].mxu0 %v3506
    %v3649 = vpop.f32.mrb[0].mxu0
    %v3650 = vadd.f32 0.0, %v3649
    %v3651 = vpop.f32.mrb[0].mxu0
    %3652 = vmatprep.mubr.f32.mxu0 %v3514
    %3653 = vmatmul.mubr.f32.gmra.mrb[0].mxu0 %v3512
    %v3654 = vpop.f32.mrb[0].mxu0
    %v3655 = vadd.f32 0.0, %v3654
    %v3656 = vpop.f32.mrb[0].mxu0
    %3657 = vmatprep.mubr.f32.mxu0 %v3520
    %3658 = vmatmul.mubr.f32.gmra.mrb[0].mxu0 %v3518
    %v3659 = vpop.f32.mrb[0].mxu0
    %v3660 = vadd.f32 0.0, %v3659
    %v3661 = vpop.f32.mrb[0].mxu0
    %3662 = vmatprep.mubr.f32.mxu0 %v3526
    %3663 = vmatmul.mubr.f32.gmra.mrb[0].mxu0 %v3524
    %v3664 = vpop.f32.mrb[0].mxu0
    %v3665 = vadd.f32 0.0, %v3664
    %v3666 = vpop.f32.mrb[0].mxu0
    %3667 = vmatprep.mubr.f32.mxu0 %v3532
    %3668 = vmatmul.mubr.f32.gmra.mrb[0].mxu0 %v3530
    %v3669 = vpop.f32.mrb[0].mxu0
    %v3670 = vadd.f32 0.0, %v3669
    %v3671 = vpop.f32.mrb[0].mxu0
    %3672 = vmatprep.mubr.f32.mxu0 %v3538
    %3673 = vmatmul.mubr.f32.gmra.mrb[0].mxu0 %v3536
    %v3674 = vpop.f32.mrb[0].mxu0
    %v3675 = vadd.f32 0.0, %v3674
    %v3676 = vpop.f32.mrb[0].mxu0
    %3677 = vmatprep.mubr.f32.mxu0 %v3544
    %3678 = vmatmul.mubr.f32.gmra.mrb[0].mxu0 %v3542
    %v3679 = vpop.f32.mrb[0].mxu0
    %v3680 = vadd.f32 0.0, %v3679
    %v3681 = vpop.f32.mrb[0].mxu0
    %3682 = vdwg.mxu0
    %3715 = vrot.lane.b32.xlu0 %v3546, 126
    %v3716 = vpop.permute.xlu0 %3715
    %3717 = vrot.lane.b32.xlu0 %v3547, 126
    %v3718 = vpop.permute.xlu0 %3717
    %3719 = vrot.lane.b32.xlu0 %v3548, 126
    %v3720 = vpop.permute.xlu0 %3719
    %3721 = vrot.lane.b32.xlu0 %v3549, 126
    %v3722 = vpop.permute.xlu0 %3721
    %3723 = vrot.lane.b32.xlu0 %v3550, 126
    %v3724 = vpop.permute.xlu0 %3723
    %3725 = vrot.lane.b32.xlu0 %v3551, 126
    %v3726 = vpop.permute.xlu0 %3725
    %3727 = vrot.lane.b32.xlu0 %v3552, 126
    %v3728 = vpop.permute.xlu0 %3727
    %3729 = vrot.lane.b32.xlu0 %v3553, 126
    %v3730 = vpop.permute.xlu0 %3729
    %3731 = vrot.lane.b32.xlu0 %v3554, 126
    %v3732 = vpop.permute.xlu0 %3731
    %3733 = vrot.lane.b32.xlu0 %v3555, 126
    %v3734 = vpop.permute.xlu0 %3733
    %3735 = vrot.lane.b32.xlu0 %v3556, 126
    %v3736 = vpop.permute.xlu0 %3735
    %3737 = vrot.lane.b32.xlu0 %v3557, 126
    %v3738 = vpop.permute.xlu0 %3737
    %3739 = vrot.lane.b32.xlu0 %v3558, 126
    %v3740 = vpop.permute.xlu0 %3739
    %3741 = vrot.lane.b32.xlu0 %v3559, 126
    %v3742 = vpop.permute.xlu0 %3741
    %3743 = vrot.lane.b32.xlu0 %v3560, 126
    %v3744 = vpop.permute.xlu0 %3743
    %3745 = vrot.lane.b32.xlu0 %v3561, 126
    %v3746 = vpop.permute.xlu0 %3745
    %3747 = vrot.lane.b32.xlu0 %v3562, 126
    %v3748 = vpop.permute.xlu0 %3747
    %3749 = vrot.lane.b32.xlu0 %v3563, 126
    %v3750 = vpop.permute.xlu0 %3749
    %3751 = vrot.lane.b32.xlu0 %v3564, 126
    %v3752 = vpop.permute.xlu0 %3751
    %3753 = vrot.lane.b32.xlu0 %v3565, 126
    %v3754 = vpop.permute.xlu0 %3753
    %3755 = vrot.lane.b32.xlu0 %v3566, 126
    %v3756 = vpop.permute.xlu0 %3755
    %3757 = vrot.lane.b32.xlu0 %v3567, 126
    %v3758 = vpop.permute.xlu0 %3757
    %3759 = vrot.lane.b32.xlu0 %v3568, 126
    %v3760 = vpop.permute.xlu0 %3759
    %3761 = vrot.lane.b32.xlu0 %v3569, 126
    %v3762 = vpop.permute.xlu0 %3761
    %3763 = vrot.lane.b32.xlu0 %v3570, 126
    %v3764 = vpop.permute.xlu0 %3763
    %3765 = vrot.lane.b32.xlu0 %v3571, 126
    %v3766 = vpop.permute.xlu0 %3765
    %3767 = vrot.lane.b32.xlu0 %v3572, 126
    %v3768 = vpop.permute.xlu0 %3767
    %3769 = vrot.lane.b32.xlu0 %v3573, 126
    %v3770 = vpop.permute.xlu0 %3769
    %3771 = vrot.lane.b32.xlu0 %v3574, 126
    %v3772 = vpop.permute.xlu0 %3771
    %3773 = vrot.lane.b32.xlu0 %v3575, 126
    %v3774 = vpop.permute.xlu0 %3773
    %3775 = vrot.lane.b32.xlu0 %v3576, 126
    %v3776 = vpop.permute.xlu0 %3775
    %3777 = vrot.lane.b32.xlu0 %v3577, 126
    %v3778 = vpop.permute.xlu0 %3777
    %3811 = vxpose.xlu0.b32.start [1/16] %v3716, 128
    %3812 = vxpose.xlu0.b32.cont [2/16] %v3718, 128
    %3813 = vxpose.xlu0.b32.cont [3/16] %v3720, 128
    %3814 = vxpose.xlu0.b32.cont [4/16] %v3722, 128
    %3815 = vxpose.xlu0.b32.cont [5/16] %v3724, 128
    %3816 = vxpose.xlu0.b32.cont [6/16] %v3726, 128
    %3817 = vxpose.xlu0.b32.cont [7/16] %v3728, 128
    %3818 = vxpose.xlu0.b32.cont [8/16] %v3730, 128
    %3819 = vxpose.xlu0.b32.cont [9/16] %v3732, 128
    %3820 = vxpose.xlu0.b32.cont [10/16] %v3734, 128
    %3821 = vxpose.xlu0.b32.cont [11/16] %v3736, 128
    %3822 = vxpose.xlu0.b32.cont [12/16] %v3738, 128
    %3823 = vxpose.xlu0.b32.cont [13/16] %v3740, 128
    %3824 = vxpose.xlu0.b32.cont [14/16] %v3742, 128
    %3825 = vxpose.xlu0.b32.cont [15/16] %v3744, 128
    %3826 = vxpose.xlu0.b32.end [16/16] %v3746, 128
    %v3827 = vpop.trf.xlu0
    %v3828 = vpop.trf.xlu0
    %v3829 = vpop.trf.xlu0
    %v3830 = vpop.trf.xlu0
    %v3831 = vpop.trf.xlu0
    %v3832 = vpop.trf.xlu0
    %v3833 = vpop.trf.xlu0
    %v3834 = vpop.trf.xlu0
    %v3835 = vpop.trf.xlu0
    %v3836 = vpop.trf.xlu0
    %v3837 = vpop.trf.xlu0
    %v3838 = vpop.trf.xlu0
    %v3839 = vpop.trf.xlu0
    %v3840 = vpop.trf.xlu0
    %v3841 = vpop.trf.xlu0
    %v3842 = vpop.trf.xlu0
    %3843 = vxpose.xlu0.b32.start [1/16] %v3748, 128
    %3844 = vxpose.xlu0.b32.cont [2/16] %v3750, 128
    %3845 = vxpose.xlu0.b32.cont [3/16] %v3752, 128
    %3846 = vxpose.xlu0.b32.cont [4/16] %v3754, 128
    %3847 = vxpose.xlu0.b32.cont [5/16] %v3756, 128
    %3848 = vxpose.xlu0.b32.cont [6/16] %v3758, 128
    %3849 = vxpose.xlu0.b32.cont [7/16] %v3760, 128
    %3850 = vxpose.xlu0.b32.cont [8/16] %v3762, 128
    %3851 = vxpose.xlu0.b32.cont [9/16] %v3764, 128
    %3852 = vxpose.xlu0.b32.cont [10/16] %v3766, 128
    %3853 = vxpose.xlu0.b32.cont [11/16] %v3768, 128
    %3854 = vxpose.xlu0.b32.cont [12/16] %v3770, 128
    %3855 = vxpose.xlu0.b32.cont [13/16] %v3772, 128
    %3856 = vxpose.xlu0.b32.cont [14/16] %v3774, 128
    %3857 = vxpose.xlu0.b32.cont [15/16] %v3776, 128
    %3858 = vxpose.xlu0.b32.end [16/16] %v3778, 128
    %v3859 = vpop.trf.xlu0
    %v3860 = vpop.trf.xlu0
    %v3861 = vpop.trf.xlu0
    %v3862 = vpop.trf.xlu0
    %v3863 = vpop.trf.xlu0
    %v3864 = vpop.trf.xlu0
    %v3865 = vpop.trf.xlu0
    %v3866 = vpop.trf.xlu0
    %v3867 = vpop.trf.xlu0
    %v3868 = vpop.trf.xlu0
    %v3869 = vpop.trf.xlu0
    %v3870 = vpop.trf.xlu0
    %v3871 = vpop.trf.xlu0
    %v3872 = vpop.trf.xlu0
    %v3873 = vpop.trf.xlu0
    %v3874 = vpop.trf.xlu0
    %3875 = vmatprep.subr.mxu0 %v3502
    %3876 = vmatpush1.xpose.msra.mxu0 %v3500
    %3877 = vmatprep.subr.mxu0 %v3508
    %3878 = vmatpush1.xpose.msra.mxu0 %v3506
    %3879 = vmatprep.subr.mxu0 %v3514
    %3880 = vmatpush1.xpose.msra.mxu0 %v3512
    %3881 = vmatprep.subr.mxu0 %v3520
    %3882 = vmatpush1.xpose.msra.mxu0 %v3518
    %3883 = vmatprep.subr.mxu0 %v3526
    %3884 = vmatpush1.xpose.msra.mxu0 %v3524
    %3885 = vmatprep.subr.mxu0 %v3532
    %3886 = vmatpush1.xpose.msra.mxu0 %v3530
    %3887 = vmatprep.subr.mxu0 %v3538
    %3888 = vmatpush1.xpose.msra.mxu0 %v3536
    %3889 = vmatprep.subr.mxu0 %v3544
    %3890 = vmatpush1.xpose.msra.mxu0 %v3542
    %3891 = vmatprep.subr.mxu0 0.0
    %3892 = vmatpush1.xpose.msra.mxu0 0.0
    %3893 = vmatprep.subr.mxu0 0.0
    %3894 = vmatpush1.xpose.msra.mxu0 0.0
    %3895 = vmatprep.subr.mxu0 0.0
    %3896 = vmatpush1.xpose.msra.mxu0 0.0
    %3897 = vmatprep.subr.mxu0 0.0
    %3898 = vmatpush1.xpose.msra.mxu0 0.0
    %3899 = vmatprep.subr.mxu0 0.0
    %3900 = vmatpush1.xpose.msra.mxu0 0.0
    %3901 = vmatprep.subr.mxu0 0.0
    %3902 = vmatpush1.xpose.msra.mxu0 0.0
    %3903 = vmatprep.subr.mxu0 0.0
    %3904 = vmatpush1.xpose.msra.mxu0 0.0
    %3905 = vmatprep.subr.mxu0 0.0
    %3906 = vmatpush1.xpose.msra.mxu0 0.0
    %3907 = vmatprep.subr.mxu0 0.0
    %3908 = vmatpush1.xpose.msra.mxu0 0.0
    %3909 = vmatprep.subr.mxu0 0.0
    %3910 = vmatpush1.xpose.msra.mxu0 0.0
    %3911 = vmatprep.subr.mxu0 0.0
    %3912 = vmatpush1.xpose.msra.mxu0 0.0
    %3913 = vmatprep.subr.mxu0 0.0
    %3914 = vmatpush1.xpose.msra.mxu0 0.0
    %3915 = vmatprep.subr.mxu0 0.0
    %3916 = vmatpush1.xpose.msra.mxu0 0.0
    %3917 = vmatprep.subr.mxu0 0.0
    %3918 = vmatpush1.xpose.msra.mxu0 0.0
    %3919 = vmatprep.subr.mxu0 0.0
    %3920 = vmatpush1.xpose.msra.mxu0 0.0
    %3921 = vmatprep.subr.mxu0 0.0
    %3922 = vmatpush1.xpose.msra.mxu0 0.0
    %3923 = vmatprep.subr.mxu0 0.0
    %3924 = vmatpush1.xpose.msra.mxu0 0.0
    %3925 = vmatprep.subr.mxu0 0.0
    %3926 = vmatpush1.xpose.msra.mxu0 0.0
    %3927 = vmatprep.subr.mxu0 0.0
    %3928 = vmatpush1.xpose.msra.mxu0 0.0
    %3929 = vmatprep.subr.mxu0 0.0
    %3930 = vmatpush1.xpose.msra.mxu0 0.0
    %3931 = vmatprep.subr.mxu0 0.0
    %3932 = vmatpush1.xpose.msra.mxu0 0.0
    %3933 = vmatprep.subr.mxu0 0.0
    %3934 = vmatpush1.xpose.msra.mxu0 0.0
    %3935 = vmatprep.subr.mxu0 0.0
    %3936 = vmatpush1.xpose.msra.mxu0 0.0
    %3937 = vmatprep.subr.mxu0 0.0
    %3938 = vmatpush1.xpose.msra.mxu0 0.0
    %3939 = vmatprep.mubr.f32.mxu0 %v3859
    %3940 = vmatmul.mubr.f32.gmra.mrb[0].mxu0 %v3827
    %v3941 = vpop.f32.mrb[0].mxu0
    %v3942 = vadd.f32 0.0, %v3941
    %v3943 = vpop.f32.mrb[0].mxu0
    %3944 = vdwg.mxu0
    %v3945 = vld [vmem:[%s9] sm:$0x3]
    %v3946 = vld [vmem:[%s11] sm:$0x1]
    %v3947 = vld [vmem:[%s11 + $0x1] sm:$0x1]
    %v3948 = vld [vmem:[%s10] sm:$0xff]
    %v3949 = vld [vmem:[%s10 + $0x8] sm:$0xff]
    %v3950 = vld [vmem:[%s10 + $0x10] sm:$0xff]
    %v3951 = vld [vmem:[%s10 + $0x18] sm:$0xff]
    %v3952 = vld [vmem:[%s10 + $0x20] sm:$0xff]
    %v3953 = vld [vmem:[%s10 + $0x28] sm:$0xff]
    %v3954 = vld [vmem:[%s10 + $0x30] sm:$0xff]
    %v3955 = vld [vmem:[%s10 + $0x38] sm:$0xff]
    %v3956 = vld [vmem:[%s10 + $0x40] sm:$0xff]
    %v3957 = vld [vmem:[%s10 + $0x48] sm:$0xff]
    %v3958 = vld [vmem:[%s10 + $0x50] sm:$0xff]
    %v3959 = vld [vmem:[%s10 + $0x58] sm:$0xff]
    %v3960 = vld [vmem:[%s10 + $0x60] sm:$0xff]
    %v3961 = vld [vmem:[%s10 + $0x68] sm:$0xff]
    %v3962 = vld [vmem:[%s10 + $0x70] sm:$0xff]
    %v3963 = vld [vmem:[%s10 + $0x78] sm:$0xff]
    %v3964 = vld [vmem:[%s10 + $0x80] sm:$0xff]
    %v3965 = vld [vmem:[%s10 + $0x88] sm:$0xff]
    %v3966 = vld [vmem:[%s10 + $0x90] sm:$0xff]
    %v3967 = vld [vmem:[%s10 + $0x98] sm:$0xff]
    %v3968 = vld [vmem:[%s10 + $0xa0] sm:$0xff]
    %v3969 = vld [vmem:[%s10 + $0xa8] sm:$0xff]
    %v3970 = vld [vmem:[%s10 + $0xb0] sm:$0xff]
    %v3971 = vld [vmem:[%s10 + $0xb8] sm:$0xff]
    %v3972 = vld [vmem:[%s10 + $0xc0] sm:$0xff]
    %v3973 = vld [vmem:[%s10 + $0xc8] sm:$0xff]
    %v3974 = vld [vmem:[%s10 + $0xd0] sm:$0xff]
    %v3975 = vld [vmem:[%s10 + $0xd8] sm:$0xff]
    %v3976 = vld [vmem:[%s10 + $0xe0] sm:$0xff]
    %v3977 = vld [vmem:[%s10 + $0xe8] sm:$0xff]
    %v3978 = vld [vmem:[%s10 + $0xf0] sm:$0xff]
    %v3979 = vld [vmem:[%s10 + $0xf8] sm:$0xff]
    %3981 = vset.pattern.permute.xlu0 0
    %3982 = vperm.xlu0 %3981, %v3645
    %v3983 = vpop.permute.xlu0 %3982
    %3986 = vset.pattern.permute.xlu0 0
    %3987 = vperm.xlu0 %3986, %v3650
    %v3988 = vpop.permute.xlu0 %3987
    %3991 = vset.pattern.permute.xlu0 0
    %3992 = vperm.xlu0 %3991, %v3655
    %v3993 = vpop.permute.xlu0 %3992
    %3996 = vset.pattern.permute.xlu0 0
    %3997 = vperm.xlu0 %3996, %v3660
    %v3998 = vpop.permute.xlu0 %3997
    %4001 = vset.pattern.permute.xlu0 0
    %4002 = vperm.xlu0 %4001, %v3665
    %v4003 = vpop.permute.xlu0 %4002
    %4006 = vset.pattern.permute.xlu0 0
    %4007 = vperm.xlu0 %4006, %v3670
    %v4008 = vpop.permute.xlu0 %4007
    %4011 = vset.pattern.permute.xlu0 0
    %4012 = vperm.xlu0 %4011, %v3675
    %v4013 = vpop.permute.xlu0 %4012
    %4016 = vset.pattern.permute.xlu0 0
    %4017 = vperm.xlu0 %4016, %v3680
    %v4018 = vpop.permute.xlu0 %4017
    %v4020 = vlaneseq
    %v4021 = vshrl.u32 %v4020, 7
    %v4022 = vsub.s32 0, %v4021
    %v4023 = vrot.slane %v3942, %v4022
    %v4024 = vadd.f32 %v3983, %v4023
    %v4025 = vadd.f32 %v3988, %v4023
    %v4026 = vadd.f32 %v3993, %v4023
    %v4027 = vadd.f32 %v3998, %v4023
    %v4028 = vadd.f32 %v4003, %v4023
    %v4029 = vadd.f32 %v4008, %v4023
    %v4030 = vadd.f32 %v4013, %v4023
    %v4031 = vadd.f32 %v4018, %v4023
    %vm4032 = vcmp.gt.f32.partialorder %v4024, 0.0
    %vm4033 = vcmp.gt.f32.partialorder %v4025, 0.0
    %vm4034 = vcmp.gt.f32.partialorder %v4026, 0.0
    %vm4035 = vcmp.gt.f32.partialorder %v4027, 0.0
    %vm4036 = vcmp.gt.f32.partialorder %v4028, 0.0
    %vm4037 = vcmp.gt.f32.partialorder %v4029, 0.0
    %vm4038 = vcmp.gt.f32.partialorder %v4030, 0.0
    %vm4039 = vcmp.gt.f32.partialorder %v4031, 0.0
    %v4040 = vmul.f32 %v4024, 0.2
    %v4041 = vmul.f32 %v4025, 0.2
    %v4042 = vmul.f32 %v4026, 0.2
    %v4043 = vmul.f32 %v4027, 0.2
    %v4044 = vmul.f32 %v4028, 0.2
    %v4045 = vmul.f32 %v4029, 0.2
    %v4046 = vmul.f32 %v4030, 0.2
    %v4047 = vmul.f32 %v4031, 0.2
    %v4048 = vsel %vm4032, %v4024, %v4040
    %v4049 = vsel %vm4033, %v4025, %v4041
    %v4050 = vsel %vm4034, %v4026, %v4042
    %v4051 = vsel %vm4035, %v4027, %v4043
    %v4052 = vsel %vm4036, %v4028, %v4044
    %v4053 = vsel %vm4037, %v4029, %v4045
    %v4054 = vsel %vm4038, %v4030, %v4046
    %v4055 = vsel %vm4039, %v4031, %v4047
    %v4056 = vadd.f32 %v4048, %v478
    %v4057 = vadd.f32 %v4049, %v479
    %v4058 = vadd.f32 %v4050, %v480
    %v4059 = vadd.f32 %v4051, %v481
    %v4060 = vadd.f32 %v4052, %v482
    %v4061 = vadd.f32 %v4053, %v483
    %v4062 = vadd.f32 %v4054, %v484
    %v4063 = vadd.f32 %v4055, %v485
    %v4064 = vsel %vm86, %v4056, -inf
    %4065 = vmax.xlane.f32.xlu0 %v4064
    %v4066 = vpop.xlane.xlu0 %4065
    %v4067 = vsel %vm86, %v4057, -inf
    %4068 = vmax.xlane.f32.xlu0 %v4067
    %v4069 = vpop.xlane.xlu0 %4068
    %v4070 = vsel %vm86, %v4058, -inf
    %4071 = vmax.xlane.f32.xlu0 %v4070
    %v4072 = vpop.xlane.xlu0 %4071
    %v4073 = vsel %vm86, %v4059, -inf
    %4074 = vmax.xlane.f32.xlu0 %v4073
    %v4075 = vpop.xlane.xlu0 %4074
    %v4076 = vsel %vm86, %v4060, -inf
    %4077 = vmax.xlane.f32.xlu0 %v4076
    %v4078 = vpop.xlane.xlu0 %4077
    %v4079 = vsel %vm86, %v4061, -inf
    %4080 = vmax.xlane.f32.xlu0 %v4079
    %v4081 = vpop.xlane.xlu0 %4080
    %v4082 = vsel %vm86, %v4062, -inf
    %4083 = vmax.xlane.f32.xlu0 %v4082
    %v4084 = vpop.xlane.xlu0 %4083
    %v4085 = vsel %vm86, %v4063, -inf
    %4086 = vmax.xlane.f32.xlu0 %v4085
    %v4087 = vpop.xlane.xlu0 %4086
    %v4088 = vsub.f32 %v4056, %v4066
    %v4089 = vsub.f32 %v4057, %v4069
    %v4090 = vsub.f32 %v4058, %v4072
    %v4091 = vsub.f32 %v4059, %v4075
    %v4092 = vsub.f32 %v4060, %v4078
    %v4093 = vsub.f32 %v4061, %v4081
    %v4094 = vsub.f32 %v4062, %v4084
    %v4095 = vsub.f32 %v4063, %v4087
    %v4096 = vmul.f32 %v4088, 1.442695
    %v4097 = vpow.pop %v4096
    %v4098 = vmul.f32 %v4089, 1.442695
    %v4099 = vpow.pop %v4098
    %v4100 = vmul.f32 %v4090, 1.442695
    %v4101 = vpow.pop %v4100
    %v4102 = vmul.f32 %v4091, 1.442695
    %v4103 = vpow.pop %v4102
    %v4104 = vmul.f32 %v4092, 1.442695
    %v4105 = vpow.pop %v4104
    %v4106 = vmul.f32 %v4093, 1.442695
    %v4107 = vpow.pop %v4106
    %v4108 = vmul.f32 %v4094, 1.442695
    %v4109 = vpow.pop %v4108
    %v4110 = vmul.f32 %v4095, 1.442695
    %v4111 = vpow.pop %v4110
    %v4112 = vsel %vm86, %v4097, 0.0
    %4113 = vadd.xlane.f32.xlu0 %v4112
    %v4114 = vpop.xlane.xlu0 %4113
    %v4115 = vsel %vm86, %v4099, 0.0
    %4116 = vadd.xlane.f32.xlu0 %v4115
    %v4117 = vpop.xlane.xlu0 %4116
    %v4118 = vsel %vm86, %v4101, 0.0
    %4119 = vadd.xlane.f32.xlu0 %v4118
    %v4120 = vpop.xlane.xlu0 %4119
    %v4121 = vsel %vm86, %v4103, 0.0
    %4122 = vadd.xlane.f32.xlu0 %v4121
    %v4123 = vpop.xlane.xlu0 %4122
    %v4124 = vsel %vm86, %v4105, 0.0
    %4125 = vadd.xlane.f32.xlu0 %v4124
    %v4126 = vpop.xlane.xlu0 %4125
    %v4127 = vsel %vm86, %v4107, 0.0
    %4128 = vadd.xlane.f32.xlu0 %v4127
    %v4129 = vpop.xlane.xlu0 %4128
    %v4130 = vsel %vm86, %v4109, 0.0
    %4131 = vadd.xlane.f32.xlu0 %v4130
    %v4132 = vpop.xlane.xlu0 %4131
    %v4133 = vsel %vm86, %v4111, 0.0
    %4134 = vadd.xlane.f32.xlu0 %v4133
    %v4135 = vpop.xlane.xlu0 %4134
    %v4136 = vrcp.pop %v4114
    %v4137 = vrcp.pop %v4117
    %v4138 = vrcp.pop %v4120
    %v4139 = vrcp.pop %v4123
    %v4140 = vrcp.pop %v4126
    %v4141 = vrcp.pop %v4129
    %v4142 = vrcp.pop %v4132
    %v4143 = vrcp.pop %v4135
    %v4144 = vmul.f32 %v4097, %v4136
    %v4145 = vmul.f32 %v4099, %v4137
    %v4146 = vmul.f32 %v4101, %v4138
    %v4147 = vmul.f32 %v4103, %v4139
    %v4148 = vmul.f32 %v4105, %v4140
    %v4149 = vmul.f32 %v4107, %v4141
    %v4150 = vmul.f32 %v4109, %v4142
    %v4151 = vmul.f32 %v4111, %v4143
    %v4153 = vsel %vm86, %v4144, 0
    %v4156 = vsel %vm86, %v4145, 0
    %v4159 = vsel %vm86, %v4146, 0
    %v4162 = vsel %vm86, %v4147, 0
    %v4165 = vsel %vm86, %v4148, 0
    %v4168 = vsel %vm86, %v4149, 0
    %v4171 = vsel %vm86, %v4150, 0
    %v4174 = vsel %vm86, %v4151, 0
    %4176 = vmatprep.subr.mxu0 0.0
    %4177 = vmatpush1.msra.mxu0 %v3500
    %4178 = vmatprep.subr.mxu0 0.0
    %4179 = vmatpush1.msra.mxu0 %v3506
    %4180 = vmatprep.subr.mxu0 0.0
    %4181 = vmatpush1.msra.mxu0 %v3512
    %4182 = vmatprep.subr.mxu0 0.0
    %4183 = vmatpush1.msra.mxu0 %v3518
    %4184 = vmatprep.subr.mxu0 0.0
    %4185 = vmatpush1.msra.mxu0 %v3524
    %4186 = vmatprep.subr.mxu0 0.0
    %4187 = vmatpush1.msra.mxu0 %v3530
    %4188 = vmatprep.subr.mxu0 0.0
    %4189 = vmatpush1.msra.mxu0 %v3536
    %4190 = vmatprep.subr.mxu0 0.0
    %4191 = vmatpush1.msra.mxu0 %v3542
    %4192 = vmatprep.subr.mxu0 0.0
    %4193 = vmatpush1.msra.mxu0 0.0
    %4194 = vmatprep.subr.mxu0 0.0
    %4195 = vmatpush1.msra.mxu0 0.0
    %4196 = vmatprep.subr.mxu0 0.0
    %4197 = vmatpush1.msra.mxu0 0.0
    %4198 = vmatprep.subr.mxu0 0.0
    %4199 = vmatpush1.msra.mxu0 0.0
    %4200 = vmatprep.subr.mxu0 0.0
    %4201 = vmatpush1.msra.mxu0 0.0
    %4202 = vmatprep.subr.mxu0 0.0
    %4203 = vmatpush1.msra.mxu0 0.0
    %4204 = vmatprep.subr.mxu0 0.0
    %4205 = vmatpush1.msra.mxu0 0.0
    %4206 = vmatprep.subr.mxu0 0.0
    %4207 = vmatpush1.msra.mxu0 0.0
    %4208 = vmatprep.subr.mxu0 0.0
    %4209 = vmatpush1.msra.mxu0 0.0
    %4210 = vmatprep.subr.mxu0 0.0
    %4211 = vmatpush1.msra.mxu0 0.0
    %4212 = vmatprep.subr.mxu0 0.0
    %4213 = vmatpush1.msra.mxu0 0.0
    %4214 = vmatprep.subr.mxu0 0.0
    %4215 = vmatpush1.msra.mxu0 0.0
    %4216 = vmatprep.subr.mxu0 0.0
    %4217 = vmatpush1.msra.mxu0 0.0
    %4218 = vmatprep.subr.mxu0 0.0
    %4219 = vmatpush1.msra.mxu0 0.0
    %4220 = vmatprep.subr.mxu0 0.0
    %4221 = vmatpush1.msra.mxu0 0.0
    %4222 = vmatprep.subr.mxu0 0.0
    %4223 = vmatpush1.msra.mxu0 0.0
    %4224 = vmatprep.subr.mxu0 0.0
    %4225 = vmatpush1.msra.mxu0 0.0
    %4226 = vmatprep.subr.mxu0 0.0
    %4227 = vmatpush1.msra.mxu0 0.0
    %4228 = vmatprep.subr.mxu0 0.0
    %4229 = vmatpush1.msra.mxu0 0.0
    %4230 = vmatprep.subr.mxu0 0.0
    %4231 = vmatpush1.msra.mxu0 0.0
    %4232 = vmatprep.subr.mxu0 0.0
    %4233 = vmatpush1.msra.mxu0 0.0
    %4234 = vmatprep.subr.mxu0 0.0
    %4235 = vmatpush1.msra.mxu0 0.0
    %4236 = vmatprep.subr.mxu0 0.0
    %4237 = vmatpush1.msra.mxu0 0.0
    %4238 = vmatprep.subr.mxu0 0.0
    %4239 = vmatpush1.msra.mxu0 0.0
    %4240 = vmatprep.mubr.f32.mxu0 0.0
    %4241 = vmatmul.mubr.f32.gmra.mrb[0].mxu0 %v4153
    %v4242 = vpop.f32.mrb[0].mxu0
    %v4243 = vadd.f32 0.0, %v4242
    %v4244 = vpop.f32.mrb[0].mxu0
    %4245 = vmatprep.mubr.f32.mxu0 0.0
    %4246 = vmatmul.mubr.f32.gmra.mrb[0].mxu0 %v4156
    %v4247 = vpop.f32.mrb[0].mxu0
    %v4248 = vadd.f32 0.0, %v4247
    %v4249 = vpop.f32.mrb[0].mxu0
    %4250 = vmatprep.mubr.f32.mxu0 0.0
    %4251 = vmatmul.mubr.f32.gmra.mrb[0].mxu0 %v4159
    %v4252 = vpop.f32.mrb[0].mxu0
    %v4253 = vadd.f32 0.0, %v4252
    %v4254 = vpop.f32.mrb[0].mxu0
    %4255 = vmatprep.mubr.f32.mxu0 0.0
    %4256 = vmatmul.mubr.f32.gmra.mrb[0].mxu0 %v4162
    %v4257 = vpop.f32.mrb[0].mxu0
    %v4258 = vadd.f32 0.0, %v4257
    %v4259 = vpop.f32.mrb[0].mxu0
    %4260 = vmatprep.mubr.f32.mxu0 0.0
    %4261 = vmatmul.mubr.f32.gmra.mrb[0].mxu0 %v4165
    %v4262 = vpop.f32.mrb[0].mxu0
    %v4263 = vadd.f32 0.0, %v4262
    %v4264 = vpop.f32.mrb[0].mxu0
    %4265 = vmatprep.mubr.f32.mxu0 0.0
    %4266 = vmatmul.mubr.f32.gmra.mrb[0].mxu0 %v4168
    %v4267 = vpop.f32.mrb[0].mxu0
    %v4268 = vadd.f32 0.0, %v4267
    %v4269 = vpop.f32.mrb[0].mxu0
    %4270 = vmatprep.mubr.f32.mxu0 0.0
    %4271 = vmatmul.mubr.f32.gmra.mrb[0].mxu0 %v4171
    %v4272 = vpop.f32.mrb[0].mxu0
    %v4273 = vadd.f32 0.0, %v4272
    %v4274 = vpop.f32.mrb[0].mxu0
    %4275 = vmatprep.mubr.f32.mxu0 0.0
    %4276 = vmatmul.mubr.f32.gmra.mrb[0].mxu0 %v4174
    %v4277 = vpop.f32.mrb[0].mxu0
    %v4278 = vadd.f32 0.0, %v4277
    %v4279 = vpop.f32.mrb[0].mxu0
    %4280 = vdwg.mxu0
    %4281 = vset.pattern.permute.xlu0 1
    %4282 = vperm.xlu0 %4281, %v3645
    %v4283 = vpop.permute.xlu0 %4282
    %4285 = vset.pattern.permute.xlu0 1
    %4286 = vperm.xlu0 %4285, %v3650
    %v4287 = vpop.permute.xlu0 %4286
    %4289 = vset.pattern.permute.xlu0 1
    %4290 = vperm.xlu0 %4289, %v3655
    %v4291 = vpop.permute.xlu0 %4290
    %4293 = vset.pattern.permute.xlu0 1
    %4294 = vperm.xlu0 %4293, %v3660
    %v4295 = vpop.permute.xlu0 %4294
    %4297 = vset.pattern.permute.xlu0 1
    %4298 = vperm.xlu0 %4297, %v3665
    %v4299 = vpop.permute.xlu0 %4298
    %4301 = vset.pattern.permute.xlu0 1
    %4302 = vperm.xlu0 %4301, %v3670
    %v4303 = vpop.permute.xlu0 %4302
    %4305 = vset.pattern.permute.xlu0 1
    %4306 = vperm.xlu0 %4305, %v3675
    %v4307 = vpop.permute.xlu0 %4306
    %4309 = vset.pattern.permute.xlu0 1
    %4310 = vperm.xlu0 %4309, %v3680
    %v4311 = vpop.permute.xlu0 %4310
    %v4313 = vlaneseq
    %v4314 = vshrl.u32 %v4313, 7
    %v4315 = vsub.s32 1, %v4314
    %v4316 = vrot.slane %v3942, %v4315
    %v4317 = vadd.f32 %v4283, %v4316
    %v4318 = vadd.f32 %v4287, %v4316
    %v4319 = vadd.f32 %v4291, %v4316
    %v4320 = vadd.f32 %v4295, %v4316
    %v4321 = vadd.f32 %v4299, %v4316
    %v4322 = vadd.f32 %v4303, %v4316
    %v4323 = vadd.f32 %v4307, %v4316
    %v4324 = vadd.f32 %v4311, %v4316
    %vm4325 = vcmp.gt.f32.partialorder %v4317, 0.0
    %vm4326 = vcmp.gt.f32.partialorder %v4318, 0.0
    %vm4327 = vcmp.gt.f32.partialorder %v4319, 0.0
    %vm4328 = vcmp.gt.f32.partialorder %v4320, 0.0
    %vm4329 = vcmp.gt.f32.partialorder %v4321, 0.0
    %vm4330 = vcmp.gt.f32.partialorder %v4322, 0.0
    %vm4331 = vcmp.gt.f32.partialorder %v4323, 0.0
    %vm4332 = vcmp.gt.f32.partialorder %v4324, 0.0
    %v4333 = vmul.f32 %v4317, 0.2
    %v4334 = vmul.f32 %v4318, 0.2
    %v4335 = vmul.f32 %v4319, 0.2
    %v4336 = vmul.f32 %v4320, 0.2
    %v4337 = vmul.f32 %v4321, 0.2
    %v4338 = vmul.f32 %v4322, 0.2
    %v4339 = vmul.f32 %v4323, 0.2
    %v4340 = vmul.f32 %v4324, 0.2
    %v4341 = vsel %vm4325, %v4317, %v4333
    %v4342 = vsel %vm4326, %v4318, %v4334
    %v4343 = vsel %vm4327, %v4319, %v4335
    %v4344 = vsel %vm4328, %v4320, %v4336
    %v4345 = vsel %vm4329, %v4321, %v4337
    %v4346 = vsel %vm4330, %v4322, %v4338
    %v4347 = vsel %vm4331, %v4323, %v4339
    %v4348 = vsel %vm4332, %v4324, %v4340
    %v4349 = vadd.f32 %v4341, %v478
    %v4350 = vadd.f32 %v4342, %v479
    %v4351 = vadd.f32 %v4343, %v480
    %v4352 = vadd.f32 %v4344, %v481
    %v4353 = vadd.f32 %v4345, %v482
    %v4354 = vadd.f32 %v4346, %v483
    %v4355 = vadd.f32 %v4347, %v484
    %v4356 = vadd.f32 %v4348, %v485
    %v4357 = vsel %vm86, %v4349, -inf
    %4358 = vmax.xlane.f32.xlu0 %v4357
    %v4359 = vpop.xlane.xlu0 %4358
    %v4360 = vsel %vm86, %v4350, -inf
    %4361 = vmax.xlane.f32.xlu0 %v4360
    %v4362 = vpop.xlane.xlu0 %4361
    %v4363 = vsel %vm86, %v4351, -inf
    %4364 = vmax.xlane.f32.xlu0 %v4363
    %v4365 = vpop.xlane.xlu0 %4364
    %v4366 = vsel %vm86, %v4352, -inf
    %4367 = vmax.xlane.f32.xlu0 %v4366
    %v4368 = vpop.xlane.xlu0 %4367
    %v4369 = vsel %vm86, %v4353, -inf
    %4370 = vmax.xlane.f32.xlu0 %v4369
    %v4371 = vpop.xlane.xlu0 %4370
    %v4372 = vsel %vm86, %v4354, -inf
    %4373 = vmax.xlane.f32.xlu0 %v4372
    %v4374 = vpop.xlane.xlu0 %4373
    %v4375 = vsel %vm86, %v4355, -inf
    %4376 = vmax.xlane.f32.xlu0 %v4375
    %v4377 = vpop.xlane.xlu0 %4376
    %v4378 = vsel %vm86, %v4356, -inf
    %4379 = vmax.xlane.f32.xlu0 %v4378
    %v4380 = vpop.xlane.xlu0 %4379
    %v4381 = vsub.f32 %v4349, %v4359
    %v4382 = vsub.f32 %v4350, %v4362
    %v4383 = vsub.f32 %v4351, %v4365
    %v4384 = vsub.f32 %v4352, %v4368
    %v4385 = vsub.f32 %v4353, %v4371
    %v4386 = vsub.f32 %v4354, %v4374
    %v4387 = vsub.f32 %v4355, %v4377
    %v4388 = vsub.f32 %v4356, %v4380
    %v4389 = vmul.f32 %v4381, 1.442695
    %v4390 = vpow.pop %v4389
    %v4391 = vmul.f32 %v4382, 1.442695
    %v4392 = vpow.pop %v4391
    %v4393 = vmul.f32 %v4383, 1.442695
    %v4394 = vpow.pop %v4393
    %v4395 = vmul.f32 %v4384, 1.442695
    %v4396 = vpow.pop %v4395
    %v4397 = vmul.f32 %v4385, 1.442695
    %v4398 = vpow.pop %v4397
    %v4399 = vmul.f32 %v4386, 1.442695
    %v4400 = vpow.pop %v4399
    %v4401 = vmul.f32 %v4387, 1.442695
    %v4402 = vpow.pop %v4401
    %v4403 = vmul.f32 %v4388, 1.442695
    %v4404 = vpow.pop %v4403
    %v4405 = vsel %vm86, %v4390, 0.0
    %4406 = vadd.xlane.f32.xlu0 %v4405
    %v4407 = vpop.xlane.xlu0 %4406
    %v4408 = vsel %vm86, %v4392, 0.0
    %4409 = vadd.xlane.f32.xlu0 %v4408
    %v4410 = vpop.xlane.xlu0 %4409
    %v4411 = vsel %vm86, %v4394, 0.0
    %4412 = vadd.xlane.f32.xlu0 %v4411
    %v4413 = vpop.xlane.xlu0 %4412
    %v4414 = vsel %vm86, %v4396, 0.0
    %4415 = vadd.xlane.f32.xlu0 %v4414
    %v4416 = vpop.xlane.xlu0 %4415
    %v4417 = vsel %vm86, %v4398, 0.0
    %4418 = vadd.xlane.f32.xlu0 %v4417
    %v4419 = vpop.xlane.xlu0 %4418
    %v4420 = vsel %vm86, %v4400, 0.0
    %4421 = vadd.xlane.f32.xlu0 %v4420
    %v4422 = vpop.xlane.xlu0 %4421
    %v4423 = vsel %vm86, %v4402, 0.0
    %4424 = vadd.xlane.f32.xlu0 %v4423
    %v4425 = vpop.xlane.xlu0 %4424
    %v4426 = vsel %vm86, %v4404, 0.0
    %4427 = vadd.xlane.f32.xlu0 %v4426
    %v4428 = vpop.xlane.xlu0 %4427
    %v4429 = vrcp.pop %v4407
    %v4430 = vrcp.pop %v4410
    %v4431 = vrcp.pop %v4413
    %v4432 = vrcp.pop %v4416
    %v4433 = vrcp.pop %v4419
    %v4434 = vrcp.pop %v4422
    %v4435 = vrcp.pop %v4425
    %v4436 = vrcp.pop %v4428
    %v4437 = vmul.f32 %v4390, %v4429
    %v4438 = vmul.f32 %v4392, %v4430
    %v4439 = vmul.f32 %v4394, %v4431
    %v4440 = vmul.f32 %v4396, %v4432
    %v4441 = vmul.f32 %v4398, %v4433
    %v4442 = vmul.f32 %v4400, %v4434
    %v4443 = vmul.f32 %v4402, %v4435
    %v4444 = vmul.f32 %v4404, %v4436
    %v4446 = vsel %vm86, %v4437, 0
    %v4449 = vsel %vm86, %v4438, 0
    %v4452 = vsel %vm86, %v4439, 0
    %v4455 = vsel %vm86, %v4440, 0
    %v4458 = vsel %vm86, %v4441, 0
    %v4461 = vsel %vm86, %v4442, 0
    %v4464 = vsel %vm86, %v4443, 0
    %v4467 = vsel %vm86, %v4444, 0
    %4469 = vmatprep.subr.mxu0 0.0
    %4470 = vmatpush1.msra.mxu0 %v3502
    %4471 = vmatprep.subr.mxu0 0.0
    %4472 = vmatpush1.msra.mxu0 %v3508
    %4473 = vmatprep.subr.mxu0 0.0
    %4474 = vmatpush1.msra.mxu0 %v3514
    %4475 = vmatprep.subr.mxu0 0.0
    %4476 = vmatpush1.msra.mxu0 %v3520
    %4477 = vmatprep.subr.mxu0 0.0
    %4478 = vmatpush1.msra.mxu0 %v3526
    %4479 = vmatprep.subr.mxu0 0.0
    %4480 = vmatpush1.msra.mxu0 %v3532
    %4481 = vmatprep.subr.mxu0 0.0
    %4482 = vmatpush1.msra.mxu0 %v3538
    %4483 = vmatprep.subr.mxu0 0.0
    %4484 = vmatpush1.msra.mxu0 %v3544
    %4485 = vmatprep.subr.mxu0 0.0
    %4486 = vmatpush1.msra.mxu0 0.0
    %4487 = vmatprep.subr.mxu0 0.0
    %4488 = vmatpush1.msra.mxu0 0.0
    %4489 = vmatprep.subr.mxu0 0.0
    %4490 = vmatpush1.msra.mxu0 0.0
    %4491 = vmatprep.subr.mxu0 0.0
    %4492 = vmatpush1.msra.mxu0 0.0
    %4493 = vmatprep.subr.mxu0 0.0
    %4494 = vmatpush1.msra.mxu0 0.0
    %4495 = vmatprep.subr.mxu0 0.0
    %4496 = vmatpush1.msra.mxu0 0.0
    %4497 = vmatprep.subr.mxu0 0.0
    %4498 = vmatpush1.msra.mxu0 0.0
    %4499 = vmatprep.subr.mxu0 0.0
    %4500 = vmatpush1.msra.mxu0 0.0
    %4501 = vmatprep.subr.mxu0 0.0
    %4502 = vmatpush1.msra.mxu0 0.0
    %4503 = vmatprep.subr.mxu0 0.0
    %4504 = vmatpush1.msra.mxu0 0.0
    %4505 = vmatprep.subr.mxu0 0.0
    %4506 = vmatpush1.msra.mxu0 0.0
    %4507 = vmatprep.subr.mxu0 0.0
    %4508 = vmatpush1.msra.mxu0 0.0
    %4509 = vmatprep.subr.mxu0 0.0
    %4510 = vmatpush1.msra.mxu0 0.0
    %4511 = vmatprep.subr.mxu0 0.0
    %4512 = vmatpush1.msra.mxu0 0.0
    %4513 = vmatprep.subr.mxu0 0.0
    %4514 = vmatpush1.msra.mxu0 0.0
    %4515 = vmatprep.subr.mxu0 0.0
    %4516 = vmatpush1.msra.mxu0 0.0
    %4517 = vmatprep.subr.mxu0 0.0
    %4518 = vmatpush1.msra.mxu0 0.0
    %4519 = vmatprep.subr.mxu0 0.0
    %4520 = vmatpush1.msra.mxu0 0.0
    %4521 = vmatprep.subr.mxu0 0.0
    %4522 = vmatpush1.msra.mxu0 0.0
    %4523 = vmatprep.subr.mxu0 0.0
    %4524 = vmatpush1.msra.mxu0 0.0
    %4525 = vmatprep.subr.mxu0 0.0
    %4526 = vmatpush1.msra.mxu0 0.0
    %4527 = vmatprep.subr.mxu0 0.0
    %4528 = vmatpush1.msra.mxu0 0.0
    %4529 = vmatprep.subr.mxu0 0.0
    %4530 = vmatpush1.msra.mxu0 0.0
    %4531 = vmatprep.subr.mxu0 0.0
    %4532 = vmatpush1.msra.mxu0 0.0
    %4533 = vmatprep.mubr.f32.mxu0 0.0
    %4534 = vmatmul.mubr.f32.gmra.mrb[0].mxu0 %v4446
    %v4535 = vpop.f32.mrb[0].mxu0
    %v4536 = vadd.f32 0.0, %v4535
    %v4537 = vpop.f32.mrb[0].mxu0
    %4538 = vmatprep.mubr.f32.mxu0 0.0
    %4539 = vmatmul.mubr.f32.gmra.mrb[0].mxu0 %v4449
    %v4540 = vpop.f32.mrb[0].mxu0
    %v4541 = vadd.f32 0.0, %v4540
    %v4542 = vpop.f32.mrb[0].mxu0
    %4543 = vmatprep.mubr.f32.mxu0 0.0
    %4544 = vmatmul.mubr.f32.gmra.mrb[0].mxu0 %v4452
    %v4545 = vpop.f32.mrb[0].mxu0
    %v4546 = vadd.f32 0.0, %v4545
    %v4547 = vpop.f32.mrb[0].mxu0
    %4548 = vmatprep.mubr.f32.mxu0 0.0
    %4549 = vmatmul.mubr.f32.gmra.mrb[0].mxu0 %v4455
    %v4550 = vpop.f32.mrb[0].mxu0
    %v4551 = vadd.f32 0.0, %v4550
    %v4552 = vpop.f32.mrb[0].mxu0
    %4553 = vmatprep.mubr.f32.mxu0 0.0
    %4554 = vmatmul.mubr.f32.gmra.mrb[0].mxu0 %v4458
    %v4555 = vpop.f32.mrb[0].mxu0
    %v4556 = vadd.f32 0.0, %v4555
    %v4557 = vpop.f32.mrb[0].mxu0
    %4558 = vmatprep.mubr.f32.mxu0 0.0
    %4559 = vmatmul.mubr.f32.gmra.mrb[0].mxu0 %v4461
    %v4560 = vpop.f32.mrb[0].mxu0
    %v4561 = vadd.f32 0.0, %v4560
    %v4562 = vpop.f32.mrb[0].mxu0
    %4563 = vmatprep.mubr.f32.mxu0 0.0
    %4564 = vmatmul.mubr.f32.gmra.mrb[0].mxu0 %v4464
    %v4565 = vpop.f32.mrb[0].mxu0
    %v4566 = vadd.f32 0.0, %v4565
    %v4567 = vpop.f32.mrb[0].mxu0
    %4568 = vmatprep.mubr.f32.mxu0 0.0
    %4569 = vmatmul.mubr.f32.gmra.mrb[0].mxu0 %v4467
    %v4570 = vpop.f32.mrb[0].mxu0
    %v4571 = vadd.f32 0.0, %v4570
    %v4572 = vpop.f32.mrb[0].mxu0
    %4573 = vdwg.mxu0
    %v4575 = vlaneseq
    %v4576 = vshrl.u32 %v4575, 7
    %v4577 = vsub.s32 0, %v4576
    %v4578 = vrot.slane %v3945, %v4577
    %v4579 = vlaneseq
    %v4580 = vshrl.u32 %v4579, 7
    %v4581 = vsub.s32 1, %v4580
    %v4582 = vrot.slane %v3945, %v4581
    %v4585 = vadd.f32 %v4243, %v4578
    %v4586 = vadd.f32 %v4536, %v4582
    %v4587 = vadd.f32 %v4248, %v4578
    %v4588 = vadd.f32 %v4541, %v4582
    %v4589 = vadd.f32 %v4253, %v4578
    %v4590 = vadd.f32 %v4546, %v4582
    %v4591 = vadd.f32 %v4258, %v4578
    %v4592 = vadd.f32 %v4551, %v4582
    %v4593 = vadd.f32 %v4263, %v4578
    %v4594 = vadd.f32 %v4556, %v4582
    %v4595 = vadd.f32 %v4268, %v4578
    %v4596 = vadd.f32 %v4561, %v4582
    %v4597 = vadd.f32 %v4273, %v4578
    %v4598 = vadd.f32 %v4566, %v4582
    %v4599 = vadd.f32 %v4278, %v4578
    %v4600 = vadd.f32 %v4571, %v4582
    %v4601 = vlaneseq
    %v4602 = vshrl.u32 %v4601, 7
    %v4603 = vsub.s32 0, %v4602
    %v4604 = vrot.slane %v3946, %v4603
    %4605 = vmatprep.subr.mxu0 0.0
    %4606 = vmatpush1.msra.mxu0 %v3948
    %4607 = vmatprep.subr.mxu0 0.0
    %4608 = vmatpush1.msra.mxu0 %v3949
    %4609 = vmatprep.subr.mxu0 0.0
    %4610 = vmatpush1.msra.mxu0 %v3950
    %4611 = vmatprep.subr.mxu0 0.0
    %4612 = vmatpush1.msra.mxu0 %v3951
    %4613 = vmatprep.subr.mxu0 0.0
    %4614 = vmatpush1.msra.mxu0 %v3952
    %4615 = vmatprep.subr.mxu0 0.0
    %4616 = vmatpush1.msra.mxu0 %v3953
    %4617 = vmatprep.subr.mxu0 0.0
    %4618 = vmatpush1.msra.mxu0 %v3954
    %4619 = vmatprep.subr.mxu0 0.0
    %4620 = vmatpush1.msra.mxu0 %v3955
    %4621 = vmatprep.subr.mxu0 0.0
    %4622 = vmatpush1.msra.mxu0 %v3956
    %4623 = vmatprep.subr.mxu0 0.0
    %4624 = vmatpush1.msra.mxu0 %v3957
    %4625 = vmatprep.subr.mxu0 0.0
    %4626 = vmatpush1.msra.mxu0 %v3958
    %4627 = vmatprep.subr.mxu0 0.0
    %4628 = vmatpush1.msra.mxu0 %v3959
    %4629 = vmatprep.subr.mxu0 0.0
    %4630 = vmatpush1.msra.mxu0 %v3960
    %4631 = vmatprep.subr.mxu0 0.0
    %4632 = vmatpush1.msra.mxu0 %v3961
    %4633 = vmatprep.subr.mxu0 0.0
    %4634 = vmatpush1.msra.mxu0 %v3962
    %4635 = vmatprep.subr.mxu0 0.0
    %4636 = vmatpush1.msra.mxu0 %v3963
    %4637 = vmatprep.subr.mxu0 0.0
    %4638 = vmatpush1.msra.mxu0 %v3964
    %4639 = vmatprep.subr.mxu0 0.0
    %4640 = vmatpush1.msra.mxu0 %v3965
    %4641 = vmatprep.subr.mxu0 0.0
    %4642 = vmatpush1.msra.mxu0 %v3966
    %4643 = vmatprep.subr.mxu0 0.0
    %4644 = vmatpush1.msra.mxu0 %v3967
    %4645 = vmatprep.subr.mxu0 0.0
    %4646 = vmatpush1.msra.mxu0 %v3968
    %4647 = vmatprep.subr.mxu0 0.0
    %4648 = vmatpush1.msra.mxu0 %v3969
    %4649 = vmatprep.subr.mxu0 0.0
    %4650 = vmatpush1.msra.mxu0 %v3970
    %4651 = vmatprep.subr.mxu0 0.0
    %4652 = vmatpush1.msra.mxu0 %v3971
    %4653 = vmatprep.subr.mxu0 0.0
    %4654 = vmatpush1.msra.mxu0 %v3972
    %4655 = vmatprep.subr.mxu0 0.0
    %4656 = vmatpush1.msra.mxu0 %v3973
    %4657 = vmatprep.subr.mxu0 0.0
    %4658 = vmatpush1.msra.mxu0 %v3974
    %4659 = vmatprep.subr.mxu0 0.0
    %4660 = vmatpush1.msra.mxu0 %v3975
    %4661 = vmatprep.subr.mxu0 0.0
    %4662 = vmatpush1.msra.mxu0 %v3976
    %4663 = vmatprep.subr.mxu0 0.0
    %4664 = vmatpush1.msra.mxu0 %v3977
    %4665 = vmatprep.subr.mxu0 0.0
    %4666 = vmatpush1.msra.mxu0 %v3978
    %4667 = vmatprep.subr.mxu0 0.0
    %4668 = vmatpush1.msra.mxu0 %v3979
    %4669 = vmatprep.mubr.f32.mxu0 %v4586
    %4670 = vmatmul.mubr.f32.gmra.mrb[0].mxu0 %v4585
    %v4671 = vpop.f32.mrb[0].mxu0
    %v4672 = vadd.f32 %v4604, %v4671
    %v4673 = vpop.f32.mrb[0].mxu0
    %4674 = vmatprep.mubr.f32.mxu0 %v4588
    %4675 = vmatmul.mubr.f32.gmra.mrb[0].mxu0 %v4587
    %v4676 = vpop.f32.mrb[0].mxu0
    %v4677 = vadd.f32 %v4604, %v4676
    %v4678 = vpop.f32.mrb[0].mxu0
    %4679 = vmatprep.mubr.f32.mxu0 %v4590
    %4680 = vmatmul.mubr.f32.gmra.mrb[0].mxu0 %v4589
    %v4681 = vpop.f32.mrb[0].mxu0
    %v4682 = vadd.f32 %v4604, %v4681
    %v4683 = vpop.f32.mrb[0].mxu0
    %4684 = vmatprep.mubr.f32.mxu0 %v4592
    %4685 = vmatmul.mubr.f32.gmra.mrb[0].mxu0 %v4591
    %v4686 = vpop.f32.mrb[0].mxu0
    %v4687 = vadd.f32 %v4604, %v4686
    %v4688 = vpop.f32.mrb[0].mxu0
    %4689 = vmatprep.mubr.f32.mxu0 %v4594
    %4690 = vmatmul.mubr.f32.gmra.mrb[0].mxu0 %v4593
    %v4691 = vpop.f32.mrb[0].mxu0
    %v4692 = vadd.f32 %v4604, %v4691
    %v4693 = vpop.f32.mrb[0].mxu0
    %4694 = vmatprep.mubr.f32.mxu0 %v4596
    %4695 = vmatmul.mubr.f32.gmra.mrb[0].mxu0 %v4595
    %v4696 = vpop.f32.mrb[0].mxu0
    %v4697 = vadd.f32 %v4604, %v4696
    %v4698 = vpop.f32.mrb[0].mxu0
    %4699 = vmatprep.mubr.f32.mxu0 %v4598
    %4700 = vmatmul.mubr.f32.gmra.mrb[0].mxu0 %v4597
    %v4701 = vpop.f32.mrb[0].mxu0
    %v4702 = vadd.f32 %v4604, %v4701
    %v4703 = vpop.f32.mrb[0].mxu0
    %4704 = vmatprep.mubr.f32.mxu0 %v4600
    %4705 = vmatmul.mubr.f32.gmra.mrb[0].mxu0 %v4599
    %v4706 = vpop.f32.mrb[0].mxu0
    %v4707 = vadd.f32 %v4604, %v4706
    %v4708 = vpop.f32.mrb[0].mxu0
    %4709 = vdwg.mxu0
    %v4710 = vtanh.pop %v4672
    %v4711 = vtanh.pop %v4677
    %v4712 = vtanh.pop %v4682
    %v4713 = vtanh.pop %v4687
    %v4714 = vtanh.pop %v4692
    %v4715 = vtanh.pop %v4697
    %v4716 = vtanh.pop %v4702
    %v4717 = vtanh.pop %v4707
    %v4718 = vlaneseq
    %v4719 = vshrl.u32 %v4718, 7
    %v4720 = vsub.s32 0, %v4719
    %v4721 = vrot.slane %v3947, %v4720
    %v4722 = vmul.f32 %v4710, %v4721
    %v4723 = vmul.f32 %v4711, %v4721
    %v4724 = vmul.f32 %v4712, %v4721
    %v4725 = vmul.f32 %v4713, %v4721
    %v4726 = vmul.f32 %v4714, %v4721
    %v4727 = vmul.f32 %v4715, %v4721
    %v4728 = vmul.f32 %v4716, %v4721
    %v4729 = vmul.f32 %v4717, %v4721
    %4730 = vadd.xlane.f32.xlu0 %v4722
    %v4731 = vpop.xlane.xlu0 %4730
    %4732 = vadd.xlane.f32.xlu0 %v4723
    %v4733 = vpop.xlane.xlu0 %4732
    %4734 = vadd.xlane.f32.xlu0 %v4724
    %v4735 = vpop.xlane.xlu0 %4734
    %4736 = vadd.xlane.f32.xlu0 %v4725
    %v4737 = vpop.xlane.xlu0 %4736
    %4738 = vadd.xlane.f32.xlu0 %v4726
    %v4739 = vpop.xlane.xlu0 %4738
    %4740 = vadd.xlane.f32.xlu0 %v4727
    %v4741 = vpop.xlane.xlu0 %4740
    %4742 = vadd.xlane.f32.xlu0 %v4728
    %v4743 = vpop.xlane.xlu0 %4742
    %4744 = vadd.xlane.f32.xlu0 %v4729
    %v4745 = vpop.xlane.xlu0 %4744
    %v4746 = vadd.f32 %v4731, %v4733
    %v4747 = vadd.f32 %v4746, %v4735
    %v4748 = vadd.f32 %v4747, %v4737
    %v4749 = vadd.f32 %v4748, %v4739
    %v4750 = vadd.f32 %v4749, %v4741
    %v4751 = vadd.f32 %v4750, %v4743
    %v4752 = vadd.f32 %v4751, %v4745
    %v4753 = vrot.slane %v4752, 4
    %v4754 = vadd.f32 %v4752, %v4753
    %v4755 = vrot.slane %v4754, 2
    %v4756 = vadd.f32 %v4754, %v4755
    %v4757 = vrot.slane %v4756, 1
    %v4758 = vadd.f32 %v4756, %v4757
    %v4759 = vmul.f32 %v4758, 0.015625
    %v4760 = vadd.f32 %v4048, %v2107
    %v4761 = vadd.f32 %v4049, %v2108
    %v4762 = vadd.f32 %v4050, %v2109
    %v4763 = vadd.f32 %v4051, %v2110
    %v4764 = vadd.f32 %v4052, %v2111
    %v4765 = vadd.f32 %v4053, %v2112
    %v4766 = vadd.f32 %v4054, %v2113
    %v4767 = vadd.f32 %v4055, %v2114
    %v4768 = vsel %vm86, %v4760, -inf
    %4769 = vmax.xlane.f32.xlu0 %v4768
    %v4770 = vpop.xlane.xlu0 %4769
    %v4771 = vsel %vm86, %v4761, -inf
    %4772 = vmax.xlane.f32.xlu0 %v4771
    %v4773 = vpop.xlane.xlu0 %4772
    %v4774 = vsel %vm86, %v4762, -inf
    %4775 = vmax.xlane.f32.xlu0 %v4774
    %v4776 = vpop.xlane.xlu0 %4775
    %v4777 = vsel %vm86, %v4763, -inf
    %4778 = vmax.xlane.f32.xlu0 %v4777
    %v4779 = vpop.xlane.xlu0 %4778
    %v4780 = vsel %vm86, %v4764, -inf
    %4781 = vmax.xlane.f32.xlu0 %v4780
    %v4782 = vpop.xlane.xlu0 %4781
    %v4783 = vsel %vm86, %v4765, -inf
    %4784 = vmax.xlane.f32.xlu0 %v4783
    %v4785 = vpop.xlane.xlu0 %4784
    %v4786 = vsel %vm86, %v4766, -inf
    %4787 = vmax.xlane.f32.xlu0 %v4786
    %v4788 = vpop.xlane.xlu0 %4787
    %v4789 = vsel %vm86, %v4767, -inf
    %4790 = vmax.xlane.f32.xlu0 %v4789
    %v4791 = vpop.xlane.xlu0 %4790
    %v4792 = vsub.f32 %v4760, %v4770
    %v4793 = vsub.f32 %v4761, %v4773
    %v4794 = vsub.f32 %v4762, %v4776
    %v4795 = vsub.f32 %v4763, %v4779
    %v4796 = vsub.f32 %v4764, %v4782
    %v4797 = vsub.f32 %v4765, %v4785
    %v4798 = vsub.f32 %v4766, %v4788
    %v4799 = vsub.f32 %v4767, %v4791
    %v4800 = vmul.f32 %v4792, 1.442695
    %v4801 = vpow.pop %v4800
    %v4802 = vmul.f32 %v4793, 1.442695
    %v4803 = vpow.pop %v4802
    %v4804 = vmul.f32 %v4794, 1.442695
    %v4805 = vpow.pop %v4804
    %v4806 = vmul.f32 %v4795, 1.442695
    %v4807 = vpow.pop %v4806
    %v4808 = vmul.f32 %v4796, 1.442695
    %v4809 = vpow.pop %v4808
    %v4810 = vmul.f32 %v4797, 1.442695
    %v4811 = vpow.pop %v4810
    %v4812 = vmul.f32 %v4798, 1.442695
    %v4813 = vpow.pop %v4812
    %v4814 = vmul.f32 %v4799, 1.442695
    %v4815 = vpow.pop %v4814
    %v4816 = vsel %vm86, %v4801, 0.0
    %4817 = vadd.xlane.f32.xlu0 %v4816
    %v4818 = vpop.xlane.xlu0 %4817
    %v4819 = vsel %vm86, %v4803, 0.0
    %4820 = vadd.xlane.f32.xlu0 %v4819
    %v4821 = vpop.xlane.xlu0 %4820
    %v4822 = vsel %vm86, %v4805, 0.0
    %4823 = vadd.xlane.f32.xlu0 %v4822
    %v4824 = vpop.xlane.xlu0 %4823
    %v4825 = vsel %vm86, %v4807, 0.0
    %4826 = vadd.xlane.f32.xlu0 %v4825
    %v4827 = vpop.xlane.xlu0 %4826
    %v4828 = vsel %vm86, %v4809, 0.0
    %4829 = vadd.xlane.f32.xlu0 %v4828
    %v4830 = vpop.xlane.xlu0 %4829
    %v4831 = vsel %vm86, %v4811, 0.0
    %4832 = vadd.xlane.f32.xlu0 %v4831
    %v4833 = vpop.xlane.xlu0 %4832
    %v4834 = vsel %vm86, %v4813, 0.0
    %4835 = vadd.xlane.f32.xlu0 %v4834
    %v4836 = vpop.xlane.xlu0 %4835
    %v4837 = vsel %vm86, %v4815, 0.0
    %4838 = vadd.xlane.f32.xlu0 %v4837
    %v4839 = vpop.xlane.xlu0 %4838
    %v4840 = vrcp.pop %v4818
    %v4841 = vrcp.pop %v4821
    %v4842 = vrcp.pop %v4824
    %v4843 = vrcp.pop %v4827
    %v4844 = vrcp.pop %v4830
    %v4845 = vrcp.pop %v4833
    %v4846 = vrcp.pop %v4836
    %v4847 = vrcp.pop %v4839
    %v4848 = vmul.f32 %v4801, %v4840
    %v4849 = vmul.f32 %v4803, %v4841
    %v4850 = vmul.f32 %v4805, %v4842
    %v4851 = vmul.f32 %v4807, %v4843
    %v4852 = vmul.f32 %v4809, %v4844
    %v4853 = vmul.f32 %v4811, %v4845
    %v4854 = vmul.f32 %v4813, %v4846
    %v4855 = vmul.f32 %v4815, %v4847
    %v4857 = vsel %vm86, %v4848, 0
    %v4860 = vsel %vm86, %v4849, 0
    %v4863 = vsel %vm86, %v4850, 0
    %v4866 = vsel %vm86, %v4851, 0
    %v4869 = vsel %vm86, %v4852, 0
    %v4872 = vsel %vm86, %v4853, 0
    %v4875 = vsel %vm86, %v4854, 0
    %v4878 = vsel %vm86, %v4855, 0
    %4880 = vmatprep.subr.mxu0 0.0
    %4881 = vmatpush1.msra.mxu0 %v3500
    %4882 = vmatprep.subr.mxu0 0.0
    %4883 = vmatpush1.msra.mxu0 %v3506
    %4884 = vmatprep.subr.mxu0 0.0
    %4885 = vmatpush1.msra.mxu0 %v3512
    %4886 = vmatprep.subr.mxu0 0.0
    %4887 = vmatpush1.msra.mxu0 %v3518
    %4888 = vmatprep.subr.mxu0 0.0
    %4889 = vmatpush1.msra.mxu0 %v3524
    %4890 = vmatprep.subr.mxu0 0.0
    %4891 = vmatpush1.msra.mxu0 %v3530
    %4892 = vmatprep.subr.mxu0 0.0
    %4893 = vmatpush1.msra.mxu0 %v3536
    %4894 = vmatprep.subr.mxu0 0.0
    %4895 = vmatpush1.msra.mxu0 %v3542
    %4896 = vmatprep.subr.mxu0 0.0
    %4897 = vmatpush1.msra.mxu0 0.0
    %4898 = vmatprep.subr.mxu0 0.0
    %4899 = vmatpush1.msra.mxu0 0.0
    %4900 = vmatprep.subr.mxu0 0.0
    %4901 = vmatpush1.msra.mxu0 0.0
    %4902 = vmatprep.subr.mxu0 0.0
    %4903 = vmatpush1.msra.mxu0 0.0
    %4904 = vmatprep.subr.mxu0 0.0
    %4905 = vmatpush1.msra.mxu0 0.0
    %4906 = vmatprep.subr.mxu0 0.0
    %4907 = vmatpush1.msra.mxu0 0.0
    %4908 = vmatprep.subr.mxu0 0.0
    %4909 = vmatpush1.msra.mxu0 0.0
    %4910 = vmatprep.subr.mxu0 0.0
    %4911 = vmatpush1.msra.mxu0 0.0
    %4912 = vmatprep.subr.mxu0 0.0
    %4913 = vmatpush1.msra.mxu0 0.0
    %4914 = vmatprep.subr.mxu0 0.0
    %4915 = vmatpush1.msra.mxu0 0.0
    %4916 = vmatprep.subr.mxu0 0.0
    %4917 = vmatpush1.msra.mxu0 0.0
    %4918 = vmatprep.subr.mxu0 0.0
    %4919 = vmatpush1.msra.mxu0 0.0
    %4920 = vmatprep.subr.mxu0 0.0
    %4921 = vmatpush1.msra.mxu0 0.0
    %4922 = vmatprep.subr.mxu0 0.0
    %4923 = vmatpush1.msra.mxu0 0.0
    %4924 = vmatprep.subr.mxu0 0.0
    %4925 = vmatpush1.msra.mxu0 0.0
    %4926 = vmatprep.subr.mxu0 0.0
    %4927 = vmatpush1.msra.mxu0 0.0
    %4928 = vmatprep.subr.mxu0 0.0
    %4929 = vmatpush1.msra.mxu0 0.0
    %4930 = vmatprep.subr.mxu0 0.0
    %4931 = vmatpush1.msra.mxu0 0.0
    %4932 = vmatprep.subr.mxu0 0.0
    %4933 = vmatpush1.msra.mxu0 0.0
    %4934 = vmatprep.subr.mxu0 0.0
    %4935 = vmatpush1.msra.mxu0 0.0
    %4936 = vmatprep.subr.mxu0 0.0
    %4937 = vmatpush1.msra.mxu0 0.0
    %4938 = vmatprep.subr.mxu0 0.0
    %4939 = vmatpush1.msra.mxu0 0.0
    %4940 = vmatprep.subr.mxu0 0.0
    %4941 = vmatpush1.msra.mxu0 0.0
    %4942 = vmatprep.subr.mxu0 0.0
    %4943 = vmatpush1.msra.mxu0 0.0
    %4944 = vmatprep.mubr.f32.mxu0 0.0
    %4945 = vmatmul.mubr.f32.gmra.mrb[0].mxu0 %v4857
    %v4946 = vpop.f32.mrb[0].mxu0
    %v4947 = vadd.f32 0.0, %v4946
    %v4948 = vpop.f32.mrb[0].mxu0
    %4949 = vmatprep.mubr.f32.mxu0 0.0
    %4950 = vmatmul.mubr.f32.gmra.mrb[0].mxu0 %v4860
    %v4951 = vpop.f32.mrb[0].mxu0
    %v4952 = vadd.f32 0.0, %v4951
    %v4953 = vpop.f32.mrb[0].mxu0
    %4954 = vmatprep.mubr.f32.mxu0 0.0
    %4955 = vmatmul.mubr.f32.gmra.mrb[0].mxu0 %v4863
    %v4956 = vpop.f32.mrb[0].mxu0
    %v4957 = vadd.f32 0.0, %v4956
    %v4958 = vpop.f32.mrb[0].mxu0
    %4959 = vmatprep.mubr.f32.mxu0 0.0
    %4960 = vmatmul.mubr.f32.gmra.mrb[0].mxu0 %v4866
    %v4961 = vpop.f32.mrb[0].mxu0
    %v4962 = vadd.f32 0.0, %v4961
    %v4963 = vpop.f32.mrb[0].mxu0
    %4964 = vmatprep.mubr.f32.mxu0 0.0
    %4965 = vmatmul.mubr.f32.gmra.mrb[0].mxu0 %v4869
    %v4966 = vpop.f32.mrb[0].mxu0
    %v4967 = vadd.f32 0.0, %v4966
    %v4968 = vpop.f32.mrb[0].mxu0
    %4969 = vmatprep.mubr.f32.mxu0 0.0
    %4970 = vmatmul.mubr.f32.gmra.mrb[0].mxu0 %v4872
    %v4971 = vpop.f32.mrb[0].mxu0
    %v4972 = vadd.f32 0.0, %v4971
    %v4973 = vpop.f32.mrb[0].mxu0
    %4974 = vmatprep.mubr.f32.mxu0 0.0
    %4975 = vmatmul.mubr.f32.gmra.mrb[0].mxu0 %v4875
    %v4976 = vpop.f32.mrb[0].mxu0
    %v4977 = vadd.f32 0.0, %v4976
    %v4978 = vpop.f32.mrb[0].mxu0
    %4979 = vmatprep.mubr.f32.mxu0 0.0
    %4980 = vmatmul.mubr.f32.gmra.mrb[0].mxu0 %v4878
    %v4981 = vpop.f32.mrb[0].mxu0
    %v4982 = vadd.f32 0.0, %v4981
    %v4983 = vpop.f32.mrb[0].mxu0
    %4984 = vdwg.mxu0
    %v4985 = vadd.f32 %v4341, %v2107
    %v4986 = vadd.f32 %v4342, %v2108
    %v4987 = vadd.f32 %v4343, %v2109
    %v4988 = vadd.f32 %v4344, %v2110
    %v4989 = vadd.f32 %v4345, %v2111
    %v4990 = vadd.f32 %v4346, %v2112
    %v4991 = vadd.f32 %v4347, %v2113
    %v4992 = vadd.f32 %v4348, %v2114
    %v4993 = vsel %vm86, %v4985, -inf
    %4994 = vmax.xlane.f32.xlu0 %v4993
    %v4995 = vpop.xlane.xlu0 %4994
    %v4996 = vsel %vm86, %v4986, -inf
    %4997 = vmax.xlane.f32.xlu0 %v4996
    %v4998 = vpop.xlane.xlu0 %4997
    %v4999 = vsel %vm86, %v4987, -inf
    %5000 = vmax.xlane.f32.xlu0 %v4999
    %v5001 = vpop.xlane.xlu0 %5000
    %v5002 = vsel %vm86, %v4988, -inf
    %5003 = vmax.xlane.f32.xlu0 %v5002
    %v5004 = vpop.xlane.xlu0 %5003
    %v5005 = vsel %vm86, %v4989, -inf
    %5006 = vmax.xlane.f32.xlu0 %v5005
    %v5007 = vpop.xlane.xlu0 %5006
    %v5008 = vsel %vm86, %v4990, -inf
    %5009 = vmax.xlane.f32.xlu0 %v5008
    %v5010 = vpop.xlane.xlu0 %5009
    %v5011 = vsel %vm86, %v4991, -inf
    %5012 = vmax.xlane.f32.xlu0 %v5011
    %v5013 = vpop.xlane.xlu0 %5012
    %v5014 = vsel %vm86, %v4992, -inf
    %5015 = vmax.xlane.f32.xlu0 %v5014
    %v5016 = vpop.xlane.xlu0 %5015
    %v5017 = vsub.f32 %v4985, %v4995
    %v5018 = vsub.f32 %v4986, %v4998
    %v5019 = vsub.f32 %v4987, %v5001
    %v5020 = vsub.f32 %v4988, %v5004
    %v5021 = vsub.f32 %v4989, %v5007
    %v5022 = vsub.f32 %v4990, %v5010
    %v5023 = vsub.f32 %v4991, %v5013
    %v5024 = vsub.f32 %v4992, %v5016
    %v5025 = vmul.f32 %v5017, 1.442695
    %v5026 = vpow.pop %v5025
    %v5027 = vmul.f32 %v5018, 1.442695
    %v5028 = vpow.pop %v5027
    %v5029 = vmul.f32 %v5019, 1.442695
    %v5030 = vpow.pop %v5029
    %v5031 = vmul.f32 %v5020, 1.442695
    %v5032 = vpow.pop %v5031
    %v5033 = vmul.f32 %v5021, 1.442695
    %v5034 = vpow.pop %v5033
    %v5035 = vmul.f32 %v5022, 1.442695
    %v5036 = vpow.pop %v5035
    %v5037 = vmul.f32 %v5023, 1.442695
    %v5038 = vpow.pop %v5037
    %v5039 = vmul.f32 %v5024, 1.442695
    %v5040 = vpow.pop %v5039
    %v5041 = vsel %vm86, %v5026, 0.0
    %5042 = vadd.xlane.f32.xlu0 %v5041
    %v5043 = vpop.xlane.xlu0 %5042
    %v5044 = vsel %vm86, %v5028, 0.0
    %5045 = vadd.xlane.f32.xlu0 %v5044
    %v5046 = vpop.xlane.xlu0 %5045
    %v5047 = vsel %vm86, %v5030, 0.0
    %5048 = vadd.xlane.f32.xlu0 %v5047
    %v5049 = vpop.xlane.xlu0 %5048
    %v5050 = vsel %vm86, %v5032, 0.0
    %5051 = vadd.xlane.f32.xlu0 %v5050
    %v5052 = vpop.xlane.xlu0 %5051
    %v5053 = vsel %vm86, %v5034, 0.0
    %5054 = vadd.xlane.f32.xlu0 %v5053
    %v5055 = vpop.xlane.xlu0 %5054
    %v5056 = vsel %vm86, %v5036, 0.0
    %5057 = vadd.xlane.f32.xlu0 %v5056
    %v5058 = vpop.xlane.xlu0 %5057
    %v5059 = vsel %vm86, %v5038, 0.0
    %5060 = vadd.xlane.f32.xlu0 %v5059
    %v5061 = vpop.xlane.xlu0 %5060
    %v5062 = vsel %vm86, %v5040, 0.0
    %5063 = vadd.xlane.f32.xlu0 %v5062
    %v5064 = vpop.xlane.xlu0 %5063
    %v5065 = vrcp.pop %v5043
    %v5066 = vrcp.pop %v5046
    %v5067 = vrcp.pop %v5049
    %v5068 = vrcp.pop %v5052
    %v5069 = vrcp.pop %v5055
    %v5070 = vrcp.pop %v5058
    %v5071 = vrcp.pop %v5061
    %v5072 = vrcp.pop %v5064
    %v5073 = vmul.f32 %v5026, %v5065
    %v5074 = vmul.f32 %v5028, %v5066
    %v5075 = vmul.f32 %v5030, %v5067
    %v5076 = vmul.f32 %v5032, %v5068
    %v5077 = vmul.f32 %v5034, %v5069
    %v5078 = vmul.f32 %v5036, %v5070
    %v5079 = vmul.f32 %v5038, %v5071
    %v5080 = vmul.f32 %v5040, %v5072
    %v5082 = vsel %vm86, %v5073, 0
    %v5085 = vsel %vm86, %v5074, 0
    %v5088 = vsel %vm86, %v5075, 0
    %v5091 = vsel %vm86, %v5076, 0
    %v5094 = vsel %vm86, %v5077, 0
    %v5097 = vsel %vm86, %v5078, 0
    %v5100 = vsel %vm86, %v5079, 0
    %v5103 = vsel %vm86, %v5080, 0
    %5105 = vmatprep.subr.mxu0 0.0
    %5106 = vmatpush1.msra.mxu0 %v3502
    %5107 = vmatprep.subr.mxu0 0.0
    %5108 = vmatpush1.msra.mxu0 %v3508
    %5109 = vmatprep.subr.mxu0 0.0
    %5110 = vmatpush1.msra.mxu0 %v3514
    %5111 = vmatprep.subr.mxu0 0.0
    %5112 = vmatpush1.msra.mxu0 %v3520
    %5113 = vmatprep.subr.mxu0 0.0
    %5114 = vmatpush1.msra.mxu0 %v3526
    %5115 = vmatprep.subr.mxu0 0.0
    %5116 = vmatpush1.msra.mxu0 %v3532
    %5117 = vmatprep.subr.mxu0 0.0
    %5118 = vmatpush1.msra.mxu0 %v3538
    %5119 = vmatprep.subr.mxu0 0.0
    %5120 = vmatpush1.msra.mxu0 %v3544
    %5121 = vmatprep.subr.mxu0 0.0
    %5122 = vmatpush1.msra.mxu0 0.0
    %5123 = vmatprep.subr.mxu0 0.0
    %5124 = vmatpush1.msra.mxu0 0.0
    %5125 = vmatprep.subr.mxu0 0.0
    %5126 = vmatpush1.msra.mxu0 0.0
    %5127 = vmatprep.subr.mxu0 0.0
    %5128 = vmatpush1.msra.mxu0 0.0
    %5129 = vmatprep.subr.mxu0 0.0
    %5130 = vmatpush1.msra.mxu0 0.0
    %5131 = vmatprep.subr.mxu0 0.0
    %5132 = vmatpush1.msra.mxu0 0.0
    %5133 = vmatprep.subr.mxu0 0.0
    %5134 = vmatpush1.msra.mxu0 0.0
    %5135 = vmatprep.subr.mxu0 0.0
    %5136 = vmatpush1.msra.mxu0 0.0
    %5137 = vmatprep.subr.mxu0 0.0
    %5138 = vmatpush1.msra.mxu0 0.0
    %5139 = vmatprep.subr.mxu0 0.0
    %5140 = vmatpush1.msra.mxu0 0.0
    %5141 = vmatprep.subr.mxu0 0.0
    %5142 = vmatpush1.msra.mxu0 0.0
    %5143 = vmatprep.subr.mxu0 0.0
    %5144 = vmatpush1.msra.mxu0 0.0
    %5145 = vmatprep.subr.mxu0 0.0
    %5146 = vmatpush1.msra.mxu0 0.0
    %5147 = vmatprep.subr.mxu0 0.0
    %5148 = vmatpush1.msra.mxu0 0.0
    %5149 = vmatprep.subr.mxu0 0.0
    %5150 = vmatpush1.msra.mxu0 0.0
    %5151 = vmatprep.subr.mxu0 0.0
    %5152 = vmatpush1.msra.mxu0 0.0
    %5153 = vmatprep.subr.mxu0 0.0
    %5154 = vmatpush1.msra.mxu0 0.0
    %5155 = vmatprep.subr.mxu0 0.0
    %5156 = vmatpush1.msra.mxu0 0.0
    %5157 = vmatprep.subr.mxu0 0.0
    %5158 = vmatpush1.msra.mxu0 0.0
    %5159 = vmatprep.subr.mxu0 0.0
    %5160 = vmatpush1.msra.mxu0 0.0
    %5161 = vmatprep.subr.mxu0 0.0
    %5162 = vmatpush1.msra.mxu0 0.0
    %5163 = vmatprep.subr.mxu0 0.0
    %5164 = vmatpush1.msra.mxu0 0.0
    %5165 = vmatprep.subr.mxu0 0.0
    %5166 = vmatpush1.msra.mxu0 0.0
    %5167 = vmatprep.subr.mxu0 0.0
    %5168 = vmatpush1.msra.mxu0 0.0
    %5169 = vmatprep.mubr.f32.mxu0 0.0
    %5170 = vmatmul.mubr.f32.gmra.mrb[0].mxu0 %v5082
    %v5171 = vpop.f32.mrb[0].mxu0
    %v5172 = vadd.f32 0.0, %v5171
    %v5173 = vpop.f32.mrb[0].mxu0
    %5174 = vmatprep.mubr.f32.mxu0 0.0
    %5175 = vmatmul.mubr.f32.gmra.mrb[0].mxu0 %v5085
    %v5176 = vpop.f32.mrb[0].mxu0
    %v5177 = vadd.f32 0.0, %v5176
    %v5178 = vpop.f32.mrb[0].mxu0
    %5179 = vmatprep.mubr.f32.mxu0 0.0
    %5180 = vmatmul.mubr.f32.gmra.mrb[0].mxu0 %v5088
    %v5181 = vpop.f32.mrb[0].mxu0
    %v5182 = vadd.f32 0.0, %v5181
    %v5183 = vpop.f32.mrb[0].mxu0
    %5184 = vmatprep.mubr.f32.mxu0 0.0
    %5185 = vmatmul.mubr.f32.gmra.mrb[0].mxu0 %v5091
    %v5186 = vpop.f32.mrb[0].mxu0
    %v5187 = vadd.f32 0.0, %v5186
    %v5188 = vpop.f32.mrb[0].mxu0
    %5189 = vmatprep.mubr.f32.mxu0 0.0
    %5190 = vmatmul.mubr.f32.gmra.mrb[0].mxu0 %v5094
    %v5191 = vpop.f32.mrb[0].mxu0
    %v5192 = vadd.f32 0.0, %v5191
    %v5193 = vpop.f32.mrb[0].mxu0
    %5194 = vmatprep.mubr.f32.mxu0 0.0
    %5195 = vmatmul.mubr.f32.gmra.mrb[0].mxu0 %v5097
    %v5196 = vpop.f32.mrb[0].mxu0
    %v5197 = vadd.f32 0.0, %v5196
    %v5198 = vpop.f32.mrb[0].mxu0
    %5199 = vmatprep.mubr.f32.mxu0 0.0
    %5200 = vmatmul.mubr.f32.gmra.mrb[0].mxu0 %v5100
    %v5201 = vpop.f32.mrb[0].mxu0
    %v5202 = vadd.f32 0.0, %v5201
    %v5203 = vpop.f32.mrb[0].mxu0
    %5204 = vmatprep.mubr.f32.mxu0 0.0
    %5205 = vmatmul.mubr.f32.gmra.mrb[0].mxu0 %v5103
    %v5206 = vpop.f32.mrb[0].mxu0
    %v5207 = vadd.f32 0.0, %v5206
    %v5208 = vpop.f32.mrb[0].mxu0
    %5209 = vdwg.mxu0
    %v5210 = vadd.f32 %v4947, %v4578
    %v5211 = vadd.f32 %v5172, %v4582
    %v5212 = vadd.f32 %v4952, %v4578
    %v5213 = vadd.f32 %v5177, %v4582
    %v5214 = vadd.f32 %v4957, %v4578
    %v5215 = vadd.f32 %v5182, %v4582
    %v5216 = vadd.f32 %v4962, %v4578
    %v5217 = vadd.f32 %v5187, %v4582
    %v5218 = vadd.f32 %v4967, %v4578
    %v5219 = vadd.f32 %v5192, %v4582
    %v5220 = vadd.f32 %v4972, %v4578
    %v5221 = vadd.f32 %v5197, %v4582
    %v5222 = vadd.f32 %v4977, %v4578
    %v5223 = vadd.f32 %v5202, %v4582
    %v5224 = vadd.f32 %v4982, %v4578
    %v5225 = vadd.f32 %v5207, %v4582
    %5226 = vmatprep.subr.mxu0 0.0
    %5227 = vmatpush1.msra.mxu0 %v3948
    %5228 = vmatprep.subr.mxu0 0.0
    %5229 = vmatpush1.msra.mxu0 %v3949
    %5230 = vmatprep.subr.mxu0 0.0
    %5231 = vmatpush1.msra.mxu0 %v3950
    %5232 = vmatprep.subr.mxu0 0.0
    %5233 = vmatpush1.msra.mxu0 %v3951
    %5234 = vmatprep.subr.mxu0 0.0
    %5235 = vmatpush1.msra.mxu0 %v3952
    %5236 = vmatprep.subr.mxu0 0.0
    %5237 = vmatpush1.msra.mxu0 %v3953
    %5238 = vmatprep.subr.mxu0 0.0
    %5239 = vmatpush1.msra.mxu0 %v3954
    %5240 = vmatprep.subr.mxu0 0.0
    %5241 = vmatpush1.msra.mxu0 %v3955
    %5242 = vmatprep.subr.mxu0 0.0
    %5243 = vmatpush1.msra.mxu0 %v3956
    %5244 = vmatprep.subr.mxu0 0.0
    %5245 = vmatpush1.msra.mxu0 %v3957
    %5246 = vmatprep.subr.mxu0 0.0
    %5247 = vmatpush1.msra.mxu0 %v3958
    %5248 = vmatprep.subr.mxu0 0.0
    %5249 = vmatpush1.msra.mxu0 %v3959
    %5250 = vmatprep.subr.mxu0 0.0
    %5251 = vmatpush1.msra.mxu0 %v3960
    %5252 = vmatprep.subr.mxu0 0.0
    %5253 = vmatpush1.msra.mxu0 %v3961
    %5254 = vmatprep.subr.mxu0 0.0
    %5255 = vmatpush1.msra.mxu0 %v3962
    %5256 = vmatprep.subr.mxu0 0.0
    %5257 = vmatpush1.msra.mxu0 %v3963
    %5258 = vmatprep.subr.mxu0 0.0
    %5259 = vmatpush1.msra.mxu0 %v3964
    %5260 = vmatprep.subr.mxu0 0.0
    %5261 = vmatpush1.msra.mxu0 %v3965
    %5262 = vmatprep.subr.mxu0 0.0
    %5263 = vmatpush1.msra.mxu0 %v3966
    %5264 = vmatprep.subr.mxu0 0.0
    %5265 = vmatpush1.msra.mxu0 %v3967
    %5266 = vmatprep.subr.mxu0 0.0
    %5267 = vmatpush1.msra.mxu0 %v3968
    %5268 = vmatprep.subr.mxu0 0.0
    %5269 = vmatpush1.msra.mxu0 %v3969
    %5270 = vmatprep.subr.mxu0 0.0
    %5271 = vmatpush1.msra.mxu0 %v3970
    %5272 = vmatprep.subr.mxu0 0.0
    %5273 = vmatpush1.msra.mxu0 %v3971
    %5274 = vmatprep.subr.mxu0 0.0
    %5275 = vmatpush1.msra.mxu0 %v3972
    %5276 = vmatprep.subr.mxu0 0.0
    %5277 = vmatpush1.msra.mxu0 %v3973
    %5278 = vmatprep.subr.mxu0 0.0
    %5279 = vmatpush1.msra.mxu0 %v3974
    %5280 = vmatprep.subr.mxu0 0.0
    %5281 = vmatpush1.msra.mxu0 %v3975
    %5282 = vmatprep.subr.mxu0 0.0
    %5283 = vmatpush1.msra.mxu0 %v3976
    %5284 = vmatprep.subr.mxu0 0.0
    %5285 = vmatpush1.msra.mxu0 %v3977
    %5286 = vmatprep.subr.mxu0 0.0
    %5287 = vmatpush1.msra.mxu0 %v3978
    %5288 = vmatprep.subr.mxu0 0.0
    %5289 = vmatpush1.msra.mxu0 %v3979
    %5290 = vmatprep.mubr.f32.mxu0 %v5211
    %5291 = vmatmul.mubr.f32.gmra.mrb[0].mxu0 %v5210
    %v5292 = vpop.f32.mrb[0].mxu0
    %v5293 = vadd.f32 %v4604, %v5292
    %v5294 = vpop.f32.mrb[0].mxu0
    %5295 = vmatprep.mubr.f32.mxu0 %v5213
    %5296 = vmatmul.mubr.f32.gmra.mrb[0].mxu0 %v5212
    %v5297 = vpop.f32.mrb[0].mxu0
    %v5298 = vadd.f32 %v4604, %v5297
    %v5299 = vpop.f32.mrb[0].mxu0
    %5300 = vmatprep.mubr.f32.mxu0 %v5215
    %5301 = vmatmul.mubr.f32.gmra.mrb[0].mxu0 %v5214
    %v5302 = vpop.f32.mrb[0].mxu0
    %v5303 = vadd.f32 %v4604, %v5302
    %v5304 = vpop.f32.mrb[0].mxu0
    %5305 = vmatprep.mubr.f32.mxu0 %v5217
    %5306 = vmatmul.mubr.f32.gmra.mrb[0].mxu0 %v5216
    %v5307 = vpop.f32.mrb[0].mxu0
    %v5308 = vadd.f32 %v4604, %v5307
    %v5309 = vpop.f32.mrb[0].mxu0
    %5310 = vmatprep.mubr.f32.mxu0 %v5219
    %5311 = vmatmul.mubr.f32.gmra.mrb[0].mxu0 %v5218
    %v5312 = vpop.f32.mrb[0].mxu0
    %v5313 = vadd.f32 %v4604, %v5312
    %v5314 = vpop.f32.mrb[0].mxu0
    %5315 = vmatprep.mubr.f32.mxu0 %v5221
    %5316 = vmatmul.mubr.f32.gmra.mrb[0].mxu0 %v5220
    %v5317 = vpop.f32.mrb[0].mxu0
    %v5318 = vadd.f32 %v4604, %v5317
    %v5319 = vpop.f32.mrb[0].mxu0
    %5320 = vmatprep.mubr.f32.mxu0 %v5223
    %5321 = vmatmul.mubr.f32.gmra.mrb[0].mxu0 %v5222
    %v5322 = vpop.f32.mrb[0].mxu0
    %v5323 = vadd.f32 %v4604, %v5322
    %v5324 = vpop.f32.mrb[0].mxu0
    %5325 = vmatprep.mubr.f32.mxu0 %v5225
    %5326 = vmatmul.mubr.f32.gmra.mrb[0].mxu0 %v5224
    %v5327 = vpop.f32.mrb[0].mxu0
    %v5328 = vadd.f32 %v4604, %v5327
    %v5329 = vpop.f32.mrb[0].mxu0
    %5330 = vdwg.mxu0
    %v5331 = vtanh.pop %v5293
    %v5332 = vtanh.pop %v5298
    %v5333 = vtanh.pop %v5303
    %v5334 = vtanh.pop %v5308
    %v5335 = vtanh.pop %v5313
    %v5336 = vtanh.pop %v5318
    %v5337 = vtanh.pop %v5323
    %v5338 = vtanh.pop %v5328
    %v5339 = vmul.f32 %v5331, %v4721
    %v5340 = vmul.f32 %v5332, %v4721
    %v5341 = vmul.f32 %v5333, %v4721
    %v5342 = vmul.f32 %v5334, %v4721
    %v5343 = vmul.f32 %v5335, %v4721
    %v5344 = vmul.f32 %v5336, %v4721
    %v5345 = vmul.f32 %v5337, %v4721
    %v5346 = vmul.f32 %v5338, %v4721
    %5347 = vadd.xlane.f32.xlu0 %v5339
    %v5348 = vpop.xlane.xlu0 %5347
    %5349 = vadd.xlane.f32.xlu0 %v5340
    %v5350 = vpop.xlane.xlu0 %5349
    %5351 = vadd.xlane.f32.xlu0 %v5341
    %v5352 = vpop.xlane.xlu0 %5351
    %5353 = vadd.xlane.f32.xlu0 %v5342
    %v5354 = vpop.xlane.xlu0 %5353
    %5355 = vadd.xlane.f32.xlu0 %v5343
    %v5356 = vpop.xlane.xlu0 %5355
    %5357 = vadd.xlane.f32.xlu0 %v5344
    %v5358 = vpop.xlane.xlu0 %5357
    %5359 = vadd.xlane.f32.xlu0 %v5345
    %v5360 = vpop.xlane.xlu0 %5359
    %5361 = vadd.xlane.f32.xlu0 %v5346
    %v5362 = vpop.xlane.xlu0 %5361
    %v5363 = vadd.f32 %v5348, %v5350
    %v5364 = vadd.f32 %v5363, %v5352
    %v5365 = vadd.f32 %v5364, %v5354
    %v5366 = vadd.f32 %v5365, %v5356
    %v5367 = vadd.f32 %v5366, %v5358
    %v5368 = vadd.f32 %v5367, %v5360
    %v5369 = vadd.f32 %v5368, %v5362
    %v5370 = vrot.slane %v5369, 4
    %v5371 = vadd.f32 %v5369, %v5370
    %v5372 = vrot.slane %v5371, 2
    %v5373 = vadd.f32 %v5371, %v5372
    %v5374 = vrot.slane %v5373, 1
    %v5375 = vadd.f32 %v5373, %v5374
    %v5376 = vmul.f32 %v5375, 0.015625
    %v5377 = vmax.f32 %v4759, %v5376
    %v5378 = vsub.f32 %v4759, %v5377
    %v5379 = vmul.f32 %v5378, 1.442695
    %v5380 = vpow.pop %v5379
    %v5381 = vsub.f32 %v5376, %v5377
    %v5382 = vmul.f32 %v5381, 1.442695
    %v5383 = vpow.pop %v5382
    %v5384 = vadd.f32 %v5380, %v5383
    %v5385 = vrcp.pop %v5384
    %v5386 = vmul.f32 %v5380, %v5385
    %v5387 = vmul.f32 %v4585, %v5386
    %v5388 = vmul.f32 %v4586, %v5386
    %v5389 = vmul.f32 %v4587, %v5386
    %v5390 = vmul.f32 %v4588, %v5386
    %v5391 = vmul.f32 %v4589, %v5386
    %v5392 = vmul.f32 %v4590, %v5386
    %v5393 = vmul.f32 %v4591, %v5386
    %v5394 = vmul.f32 %v4592, %v5386
    %v5395 = vmul.f32 %v4593, %v5386
    %v5396 = vmul.f32 %v4594, %v5386
    %v5397 = vmul.f32 %v4595, %v5386
    %v5398 = vmul.f32 %v4596, %v5386
    %v5399 = vmul.f32 %v4597, %v5386
    %v5400 = vmul.f32 %v4598, %v5386
    %v5401 = vmul.f32 %v4599, %v5386
    %v5402 = vmul.f32 %v4600, %v5386
    %v5403 = vmul.f32 %v5383, %v5385
    %v5404 = vmul.f32 %v5210, %v5403
    %v5405 = vmul.f32 %v5211, %v5403
    %v5406 = vmul.f32 %v5212, %v5403
    %v5407 = vmul.f32 %v5213, %v5403
    %v5408 = vmul.f32 %v5214, %v5403
    %v5409 = vmul.f32 %v5215, %v5403
    %v5410 = vmul.f32 %v5216, %v5403
    %v5411 = vmul.f32 %v5217, %v5403
    %v5412 = vmul.f32 %v5218, %v5403
    %v5413 = vmul.f32 %v5219, %v5403
    %v5414 = vmul.f32 %v5220, %v5403
    %v5415 = vmul.f32 %v5221, %v5403
    %v5416 = vmul.f32 %v5222, %v5403
    %v5417 = vmul.f32 %v5223, %v5403
    %v5418 = vmul.f32 %v5224, %v5403
    %v5419 = vmul.f32 %v5225, %v5403
    %v5420 = vadd.f32 %v5387, %v5404
    %v5421 = vadd.f32 %v5388, %v5405
    %v5422 = vadd.f32 %v5389, %v5406
    %v5423 = vadd.f32 %v5390, %v5407
    %v5424 = vadd.f32 %v5391, %v5408
    %v5425 = vadd.f32 %v5392, %v5409
    %v5426 = vadd.f32 %v5393, %v5410
    %v5427 = vadd.f32 %v5394, %v5411
    %v5428 = vadd.f32 %v5395, %v5412
    %v5429 = vadd.f32 %v5396, %v5413
    %v5430 = vadd.f32 %v5397, %v5414
    %v5431 = vadd.f32 %v5398, %v5415
    %v5432 = vadd.f32 %v5399, %v5416
    %v5433 = vadd.f32 %v5400, %v5417
    %v5434 = vadd.f32 %v5401, %v5418
    %v5435 = vadd.f32 %v5402, %v5419
    %5436 = vst [vmem:[#allocation7] sm:$0xff] %v5420
    %5437 = vst [vmem:[#allocation7 + $0x8] sm:$0xff] %v5421
    %5438 = vst [vmem:[#allocation7 + $0x10] sm:$0xff] %v5422
    %5439 = vst [vmem:[#allocation7 + $0x18] sm:$0xff] %v5423
    %5440 = vst [vmem:[#allocation7 + $0x20] sm:$0xff] %v5424
    %5441 = vst [vmem:[#allocation7 + $0x28] sm:$0xff] %v5425
    %5442 = vst [vmem:[#allocation7 + $0x30] sm:$0xff] %v5426
    %5443 = vst [vmem:[#allocation7 + $0x38] sm:$0xff] %v5427
    %5444 = vst [vmem:[#allocation7 + $0x40] sm:$0xff] %v5428
    %5445 = vst [vmem:[#allocation7 + $0x48] sm:$0xff] %v5429
    %5446 = vst [vmem:[#allocation7 + $0x50] sm:$0xff] %v5430
    %5447 = vst [vmem:[#allocation7 + $0x58] sm:$0xff] %v5431
    %5448 = vst [vmem:[#allocation7 + $0x60] sm:$0xff] %v5432
    %5449 = vst [vmem:[#allocation7 + $0x68] sm:$0xff] %v5433
    %5450 = vst [vmem:[#allocation7 + $0x70] sm:$0xff] %v5434
    %5451 = vst [vmem:[#allocation7 + $0x78] sm:$0xff] %v5435
    // Predicated region
    $region58: #{tpu_custom_call.1} parent=1 // pred_check
      _
    $region59: #{tpu_custom_call.1} parent=1 // pred_check_branch
      %5453 = sbr.rel (0) target = $region61
    $region60: #{tpu_custom_call.1} parent=1 // pred_region
      %s5455 = ssub.s32 2048, 2048
      %5456 = vsyncadd [#allocation4], %s5455
      %s5457 = sshll.u32 [#allocation7], 4
      %s5458 = int_to_ptr.vmem [resolvable:$true] %s5457
      %5463 = dma.vmem_to_hbm [thread:$0]  %s5458, 2048, %s12, [#allocation4], 256, 256, 16
    $region61: #{tpu_custom_call.1} parent=1 // pred_fallthru
      _
    // Predicated region
    $region62: #{tpu_custom_call.1} parent=1 // pred_check
      _
    $region63: #{tpu_custom_call.1} parent=1 // pred_check_branch
      %5465 = sbr.rel (0) target = $region65
    $region64: #{tpu_custom_call.1} parent=1 // pred_region
      %5466 = dma.done [#allocation4], 2048
    $region65: #{tpu_custom_call.1} parent=1 // pred_fallthru
      _
    %5467 = vsyncpa [#allocation3], 1
    %5468 = vsyncpa [#allocation6], 1
    %5469 = vsyncpa [#allocation4], 1

</llo_original>
